<compile_context>
chip_gen: v7x
topology: tpu7x:2x2x1
jax: 0.10.0
libtpu: 0.0.40
codegen_flags: <defaults>
</compile_context>

<pallas_src>
import functools

import jax
import jax.numpy as jnp
from jax.experimental import pallas as pl
from jax.experimental.pallas import tpu as pltpu


# ---------------------------------------------------------------------------
# Fused kernel: all GAT layers + node_proj + fc_out
# ---------------------------------------------------------------------------
def _fused_model_kernel(x_ref, adj_ref, eb_ref, w0_ref, wrest_ref, asrc_ref,
                        adst_ref, gbias_ref, hmask_ref, pw_ref, pb_ref,
                        wfc_ref, fcb_ref, seg_ref, o_ref, *,
                        gat_layers, heads, proj_nodes):
    f32 = jnp.float32
    bf16 = jnp.bfloat16
    neg = f32(-1e30)

    # Hoisted once, reused by every head / layer.
    edge_mask = adj_ref[...] > 0.0                     # [N, N]; adj[i, j] = edge j->i

    h = x_ref[...]                                     # [N, Fin] f32
    for l in range(gat_layers):
        w = w0_ref[...] if l == 0 else wrest_ref[l - 1]            # bf16
        hlin = jnp.dot(h.astype(bf16), w, preferred_element_type=f32)  # [N, H*D]
        hlb = hlin.astype(bf16)

        # Per-node attention terms for ALL heads via two block-structured matmuls
        # (replaces 2*H skinny M=1 MXU pushes per layer).
        a_dst = jnp.dot(hlb, adst_ref[l], preferred_element_type=f32)  # [N, H]
        a_src = jax.lax.dot_general(asrc_ref[l], hlb,
                                    (((1,), (1,)), ((), ())),
                                    preferred_element_type=f32)        # [H, N]

        acc = jnp.zeros_like(hlin)                     # lane-dense [N, H*D] f32
        for hd in range(heads):
            e = a_dst[:, hd:hd + 1] + a_src[hd:hd + 1, :] + eb_ref[l * heads + hd]
            # mask folded into the leaky-relu select
            e = jnp.where(edge_mask, jnp.where(e > 0, e, 0.2 * e), neg)
            m = jnp.max(e, axis=-1, keepdims=True)
            p = jnp.exp(e - m)                         # masked entries -> exactly 0
            denom = jnp.sum(p, axis=-1, keepdims=True)
            # Full lane-width aggregation + deferred normalization; head columns
            # selected with a precomputed lane mask (no concat / 16-lane stores).
            agg = jnp.dot(p.astype(bf16), hlb, preferred_element_type=f32)  # [N,H*D]
            scale = pl.reciprocal(denom, approx=True) * hmask_ref[hd:hd + 1, :]
            acc = acc + agg * scale
        h = jnp.maximum(acc + gbias_ref[l], 0.0)       # + bias, ReLU

    # node_proj + ReLU.
    xp = jnp.dot(h.astype(bf16), pw_ref[...], preferred_element_type=f32)
    xp = jnp.maximum(xp + pb_ref[...], 0.0)            # [N, proj]

    # fc_out fused in-kernel (replaces batch reshape + a second pallas_call):
    #   Z[i, o] = sum_p xp[i, p] * Wfc[p, i, o];   out = Seg @ Z + b_fc
    z = xp[:, 0:1] * wfc_ref[0]
    for pidx in range(1, proj_nodes):
        z = z + xp[:, pidx:pidx + 1] * wfc_ref[pidx]
    o_ref[...] = jnp.dot(seg_ref[...], z, preferred_element_type=f32) + fcb_ref[...]


_VMEM = pl.BlockSpec(memory_space=pltpu.MemorySpace.VMEM)


def fused_forward_call(x, adj, eb_all, w0, wrest, asrc_mat, adst_mat, gbias,
                       hmask, pw, pb, wfc, fcb, seg, *, gat_layers, heads,
                       proj_nodes, output_dim):
    batch = seg.shape[0]
    kernel = functools.partial(_fused_model_kernel, gat_layers=gat_layers,
                               heads=heads, proj_nodes=proj_nodes)
    return pl.pallas_call(
        kernel,
        out_shape=jax.ShapeDtypeStruct((batch, output_dim), jnp.float32),
        in_specs=[_VMEM] * 14,
        out_specs=_VMEM,
        # Toy sizes: everything VMEM-resident, no grid.  See scaling notes at top.
        compiler_params=pltpu.CompilerParams(vmem_limit_bytes=32 * 1024 * 1024),
    )(x, adj, eb_all, w0, wrest, asrc_mat, adst_mat, gbias, hmask, pw, pb,
      wfc, fcb, seg)


# ---------------------------------------------------------------------------
# Model: parameters + forward
# ---------------------------------------------------------------------------
def init_params(key, *, num_nodes, proj_nodes, num_features, output_dim,
                edge_attr_dim, GAT_dim, gat_layers, heads):
    def glorot(k, shape):
        fan_in, fan_out = shape[0], shape[-1]
        scale = jnp.sqrt(6.0 / (fan_in + fan_out))
        return jax.random.uniform(k, shape, jnp.float32, -scale, scale)

    params = {}
    ks = iter(jax.random.split(key, 8 * gat_layers + 8))

    def gat_params(fin):
        return {
            "w": glorot(next(ks), (fin, heads * GAT_dim)),
            "att_src": glorot(next(ks), (heads, GAT_dim)),
            "att_dst": glorot(next(ks), (heads, GAT_dim)),
            "w_edge": glorot(next(ks), (edge_attr_dim, heads * GAT_dim)),
            "att_edge": glorot(next(ks), (heads, GAT_dim)),
            "bias": jnp.zeros((1, heads * GAT_dim), jnp.float32),
        }

    params["gat"] = [gat_params(num_features)]
    for _ in range(gat_layers - 1):
        params["gat"].append(gat_params(heads * GAT_dim))

    params["node_proj_w"] = glorot(next(ks), (heads * GAT_dim, proj_nodes))
    params["node_proj_b"] = jax.random.uniform(
        next(ks), (1, proj_nodes), jnp.float32, -0.1, 0.1)
    params["fc_out_w"] = glorot(next(ks), (num_nodes * proj_nodes, output_dim))
    params["fc_out_b"] = jax.random.uniform(
        next(ks), (1, output_dim), jnp.float32, -0.1, 0.1)
    return params


def forward(params, x, adj, ea_dense, batch_size, *, heads, gat_dim):
    L = len(params["gat"])
    hidden = heads * gat_dim
    n_total = x.shape[0]
    num_nodes = n_total // batch_size
    edge_dim = params["gat"][0]["w_edge"].shape[0]
    proj = params["node_proj_w"].shape[1]
    output_dim = params["fc_out_w"].shape[1]

    # ---- parameter-only folding / re-layout (done once, outside the kernel) ----
    w0 = params["gat"][0]["w"].astype(jnp.bfloat16)
    if L > 1:
        wrest = jnp.stack([params["gat"][l]["w"] for l in range(1, L)]
                          ).astype(jnp.bfloat16)
    else:
        wrest = jnp.zeros((1, 1, 1), jnp.bfloat16)     # never read when L == 1

    eye_h = jnp.eye(heads, dtype=jnp.float32)
    # Block-diagonal attention matrices:
    #   Asrc[l][h, h*D+d] = att_src[h, d];  Adst[l][h*D+d, h] = att_dst[h, d].
    asrc_mat = jnp.stack([
        (eye_h[:, :, None] * p["att_src"][None, :, :]).reshape(heads, hidden)
        for p in params["gat"]]).astype(jnp.bfloat16)            # [L, H, H*D]
    adst_mat = jnp.stack([
        (p["att_dst"][:, :, None] * eye_h[:, None, :]).reshape(hidden, heads)
        for p in params["gat"]]).astype(jnp.bfloat16)            # [L, H*D, H]

    gbias = jnp.stack([p["bias"] for p in params["gat"]])        # [L, 1, H*D]
    hmask = jnp.repeat(eye_h, gat_dim, axis=1)                   # [H, H*D]

    # Fold lin_edge + att_edge and pre-contract with the dense edge attrs:
    #   vedge[l,d,h] = sum_k W_e[d, h*D+k] * att_edge[h,k]
    #   eb_all[l*H+h] = sum_d vedge[l,d,h] * ea_dense[:,:,d]
    # TODO(synk): for large N keep ea as [E,N,N] and do the E-contraction
    # in-kernel (one [H,E]x[E,N*Nblk] dot per layer) to avoid streaming L*H
    # bias planes instead of E.
    vedge = jnp.stack([
        jnp.einsum("ehd,hd->eh",
                   p["w_edge"].reshape(edge_dim, heads, gat_dim), p["att_edge"])
        for p in params["gat"]])                                 # [L, E, H]
    eb_all = jnp.einsum("ijd,ldh->lhij", ea_dense, vedge
                        ).reshape(L * heads, n_total, n_total)   # [L*H, N, N]

    pw = params["node_proj_w"].astype(jnp.bfloat16)
    pb = params["node_proj_b"]

    # fc_out weight re-indexed so the batch reshape disappears:
    #   Wfc[p, b*nn + n, o] = W[n*proj + p, o]
    wfc = jnp.transpose(params["fc_out_w"].reshape(num_nodes, proj, output_dim),
                        (1, 0, 2))
    wfc = jnp.tile(wfc, (1, batch_size, 1))                      # [proj, N, out]
    fcb = params["fc_out_b"]
    seg = jnp.repeat(jnp.eye(batch_size, dtype=jnp.float32), num_nodes, axis=1)

    return fused_forward_call(
        x, adj, eb_all, w0, wrest, asrc_mat, adst_mat, gbias, hmask, pw, pb,
        wfc, fcb, seg, gat_layers=L, heads=heads, proj_nodes=proj,
        output_dim=output_dim)


# ---------------------------------------------------------------------------
# Pure-JAX f32 reference (dense formulation) for a correctness check
# ---------------------------------------------------------------------------
def forward_ref(params, x, adj, ea_dense, batch_size, *, heads, gat_dim):
    edge_dim = params["gat"][0]["w_edge"].shape[0]

    def gat_ref(x, layer):
        n = x.shape[0]
        h = x @ layer["w"]
        h3 = h.reshape(n, heads, gat_dim)
        a_s = jnp.einsum("nhd,hd->nh", h3, layer["att_src"])
        a_d = jnp.einsum("nhd,hd->nh", h3, layer["att_dst"])
        ew = layer["w_edge"].reshape(edge_dim, heads, gat_dim)
        eb = jnp.einsum("ijf,fhd,hd->ijh", ea_dense, ew, layer["att_edge"])
        e = a_d[:, None, :] + a_s[None, :, :] + eb       # [i, j, h]
        e = jnp.where(e > 0, e, 0.2 * e)
        e = jnp.where(adj[:, :, None] > 0, e, -1e30)
        e = e - jnp.max(e, axis=1, keepdims=True)
        p = jnp.exp(e)
        p = jnp.where(adj[:, :, None] > 0, p, 0.0)
        alpha = p / jnp.sum(p, axis=1, keepdims=True)
        out = jnp.einsum("ijh,jhd->ihd", alpha, h3).reshape(n, heads * gat_dim)
        return jnp.maximum(out + layer["bias"], 0.0)

    for layer in params["gat"]:
        x = gat_ref(x, layer)
    x = jnp.maximum(x @ params["node_proj_w"] + params["node_proj_b"], 0.0)
    x = x.reshape(batch_size, -1)
    return x @ params["fc_out_w"] + params["fc_out_b"]


# ---------------------------------------------------------------------------
if __name__ == "__main__":
    num_nodes, proj_nodes = 8, 4
    num_features, output_dim = 8, 8
    edge_attr_dim = 4
    GAT_dim, gat_layers, heads = 16, 3, 4
    batch_size = 2
    n_total = batch_size * num_nodes

    key = jax.random.PRNGKey(0)
    k_x, k_e, k_p = jax.random.split(key, 3)

    # Node features for the disjoint union of `batch_size` graphs.
    x = jax.random.normal(k_x, (n_total, num_features), jnp.float32)

    # Deterministic ring graph per sub-graph (bidirectional edges).
    srcs, dsts = [], []
    for g in range(batch_size):
        off = g * num_nodes
        for i in range(num_nodes):
            j = (i + 1) % num_nodes
            srcs += [off + i, off + j]
            dsts += [off + j, off + i]
    edge_index = jnp.array([srcs, dsts], dtype=jnp.int32)
    num_edges = edge_index.shape[1]
    edge_attr = jax.random.normal(k_e, (num_edges, edge_attr_dim), jnp.float32)

    # Dense adjacency mask: adj[dst, src] = 1, plus self loops (GATConv default).
    adj = jnp.zeros((n_total, n_total), jnp.float32)
    adj = adj.at[edge_index[1], edge_index[0]].set(1.0)
    adj = adj.at[jnp.arange(n_total), jnp.arange(n_total)].set(1.0)

    # Dense edge attributes; self-loop attrs = mean of incoming edge attrs
    # (matches PyG GATConv fill_value="mean").
    ea_dense = jnp.zeros((n_total, n_total, edge_attr_dim), jnp.float32)
    ea_dense = ea_dense.at[edge_index[1], edge_index[0], :].set(edge_attr)
    deg = jnp.zeros((n_total,), jnp.float32).at[edge_index[1]].add(1.0)
    sl_attr = (jnp.zeros((n_total, edge_attr_dim), jnp.float32)
               .at[edge_index[1]].add(edge_attr)) / jnp.maximum(deg, 1.0)[:, None]
    ea_dense = ea_dense.at[jnp.arange(n_total), jnp.arange(n_total), :].set(sl_attr)

    params = init_params(k_p, num_nodes=num_nodes, proj_nodes=proj_nodes,
                         num_features=num_features, output_dim=output_dim,
                         edge_attr_dim=edge_attr_dim, GAT_dim=GAT_dim,
                         gat_layers=gat_layers, heads=heads)

    out = forward(params, x, adj, ea_dense, batch_size,
                  heads=heads, gat_dim=GAT_dim)
    out = jax.block_until_ready(out)

    ref = forward_ref(params, x, adj, ea_dense, batch_size,
                      heads=heads, gat_dim=GAT_dim)
    assert out.shape == (batch_size, output_dim)
    # Tolerance loosened for bf16 MXU operands + approx reciprocal (expected
    # quantization, not a bug).
    assert jnp.allclose(out, ref, rtol=5e-2, atol=5e-2)

    print("KERNEL_OK")
</pallas_src>

<mosaic_0001>
module attributes {stable_mosaic.version = 11 : i64} {
  func.func @_fused_model_kernel(%arg0: memref<16x8xf32, #tpu.memory_space<vmem>>, %arg1: memref<16x16xf32, #tpu.memory_space<vmem>>, %arg2: memref<12x16x16xf32, #tpu.memory_space<vmem>>, %arg3: memref<8x64xbf16, #tpu.memory_space<vmem>>, %arg4: memref<2x64x64xbf16, #tpu.memory_space<vmem>>, %arg5: memref<3x4x64xbf16, #tpu.memory_space<vmem>>, %arg6: memref<3x64x4xbf16, #tpu.memory_space<vmem>>, %arg7: memref<3x1x64xf32, #tpu.memory_space<vmem>>, %arg8: memref<4x64xf32, #tpu.memory_space<vmem>>, %arg9: memref<64x4xbf16, #tpu.memory_space<vmem>>, %arg10: memref<1x4xf32, #tpu.memory_space<vmem>>, %arg11: memref<4x16x8xf32, #tpu.memory_space<vmem>>, %arg12: memref<1x8xf32, #tpu.memory_space<vmem>>, %arg13: memref<2x16xf32, #tpu.memory_space<vmem>>, %arg14: memref<2x8xf32, #tpu.memory_space<vmem>>) attributes {dimension_semantics = [], scalar_prefetch = 0 : i64, scratch_operands = 0 : i64, tpu.core_type = #tpu.core_type<tc>} {
    %c0 = arith.constant 0 : index
    %c0_0 = arith.constant 0 : index
    %0 = vector.load %arg1[%c0, %c0_0] : memref<16x16xf32, #tpu.memory_space<vmem>>, vector<16x16xf32>
    %cst = arith.constant 0.000000e+00 : f32
    %1 = vector.broadcast %cst : f32 to vector<16x16xf32>
    %2 = arith.cmpf ogt, %0, %1 : vector<16x16xf32>
    %c0_1 = arith.constant 0 : index
    %c0_2 = arith.constant 0 : index
    %3 = vector.load %arg0[%c0_1, %c0_2] : memref<16x8xf32, #tpu.memory_space<vmem>>, vector<16x8xf32>
    %c0_3 = arith.constant 0 : index
    %c0_4 = arith.constant 0 : index
    %4 = vector.load %arg3[%c0_3, %c0_4] : memref<8x64xbf16, #tpu.memory_space<vmem>>, vector<8x64xbf16>
    %5 = arith.truncf %3 : vector<16x8xf32> to vector<16x8xbf16>
    %cst_5 = arith.constant dense<0.000000e+00> : vector<16x64xf32>
    %6 = tpu.matmul %5, %4, %cst_5 {dimension_numbers = #tpu.dot_dimension_numbers<[1], [0], [0], [1], [0, 0, 1, 1], [], []>} : vector<16x8xbf16>, vector<8x64xbf16>, vector<16x64xf32> -> vector<16x64xf32>
    %7 = arith.truncf %6 : vector<16x64xf32> to vector<16x64xbf16>
    %c0_6 = arith.constant 0 : index
    %c0_7 = arith.constant 0 : index
    %c0_8 = arith.constant 0 : index
    %8 = vector.load %arg6[%c0_6, %c0_7, %c0_8] : memref<3x64x4xbf16, #tpu.memory_space<vmem>>, vector<1x64x4xbf16>
    %9 = vector.shape_cast %8 : vector<1x64x4xbf16> to vector<64x4xbf16>
    %cst_9 = arith.constant dense<0.000000e+00> : vector<16x4xf32>
    %10 = tpu.matmul %7, %9, %cst_9 {dimension_numbers = #tpu.dot_dimension_numbers<[1], [0], [0], [1], [0, 0, 1, 1], [], []>} : vector<16x64xbf16>, vector<64x4xbf16>, vector<16x4xf32> -> vector<16x4xf32>
    %c0_10 = arith.constant 0 : index
    %c0_11 = arith.constant 0 : index
    %c0_12 = arith.constant 0 : index
    %11 = vector.load %arg5[%c0_10, %c0_11, %c0_12] : memref<3x4x64xbf16, #tpu.memory_space<vmem>>, vector<1x4x64xbf16>
    %12 = vector.shape_cast %11 : vector<1x4x64xbf16> to vector<4x64xbf16>
    %cst_13 = arith.constant dense<0.000000e+00> : vector<4x16xf32>
    %13 = tpu.matmul %12, %7, %cst_13 {dimension_numbers = #tpu.dot_dimension_numbers<[1], [1], [0], [0], [0, 0, 1, 0], [], []>} : vector<4x64xbf16>, vector<16x64xbf16>, vector<4x16xf32> -> vector<4x16xf32>
    %cst_14 = arith.constant 0.000000e+00 : f32
    %14 = vector.broadcast %cst_14 : f32 to vector<16x64xf32>
    %15 = vector.extract_strided_slice %10 {offsets = [0, 0], sizes = [16, 1], strides = [1, 1]} : vector<16x4xf32> to vector<16x1xf32>
    %16 = vector.extract_strided_slice %13 {offsets = [0, 0], sizes = [1, 16], strides = [1, 1]} : vector<4x16xf32> to vector<1x16xf32>
    %17 = vector.broadcast %15 : vector<16x1xf32> to vector<16x16xf32>
    %18 = vector.broadcast %16 : vector<1x16xf32> to vector<16x16xf32>
    %19 = arith.addf %17, %18 : vector<16x16xf32>
    %c0_15 = arith.constant 0 : index
    %c0_16 = arith.constant 0 : index
    %c0_17 = arith.constant 0 : index
    %20 = vector.load %arg2[%c0_15, %c0_16, %c0_17] : memref<12x16x16xf32, #tpu.memory_space<vmem>>, vector<1x16x16xf32>
    %21 = vector.shape_cast %20 : vector<1x16x16xf32> to vector<16x16xf32>
    %22 = arith.addf %19, %21 : vector<16x16xf32>
    %cst_18 = arith.constant 0.000000e+00 : f32
    %23 = vector.broadcast %cst_18 : f32 to vector<16x16xf32>
    %24 = arith.cmpf ogt, %22, %23 : vector<16x16xf32>
    %cst_19 = arith.constant 2.000000e-01 : f32
    %25 = vector.broadcast %cst_19 : f32 to vector<16x16xf32>
    %26 = arith.mulf %25, %22 : vector<16x16xf32>
    %27 = arith.select %24, %22, %26 : vector<16x16xi1>, vector<16x16xf32>
    %cst_20 = arith.constant -1.000000e+30 : f32
    %28 = vector.broadcast %cst_20 : f32 to vector<16x16xf32>
    %29 = arith.select %2, %27, %28 : vector<16x16xi1>, vector<16x16xf32>
    %cst_21 = arith.constant dense<0xFF800000> : vector<16xf32>
    %30 = vector.multi_reduction <maximumf>, %29, %cst_21 [1] : vector<16x16xf32> to vector<16xf32>
    %31 = vector.shape_cast %30 : vector<16xf32> to vector<16x1xf32>
    %32 = vector.broadcast %31 : vector<16x1xf32> to vector<16x16xf32>
    %33 = arith.subf %29, %32 : vector<16x16xf32>
    %34 = math.exp %33 : vector<16x16xf32>
    %cst_22 = arith.constant dense<0.000000e+00> : vector<16xf32>
    %35 = vector.multi_reduction <add>, %34, %cst_22 [1] : vector<16x16xf32> to vector<16xf32>
    %36 = vector.shape_cast %35 : vector<16xf32> to vector<16x1xf32>
    %37 = arith.truncf %34 : vector<16x16xf32> to vector<16x16xbf16>
    %cst_23 = arith.constant dense<0.000000e+00> : vector<16x64xf32>
    %38 = tpu.matmul %37, %7, %cst_23 {dimension_numbers = #tpu.dot_dimension_numbers<[1], [0], [0], [1], [0, 0, 1, 1], [], []>} : vector<16x16xbf16>, vector<16x64xbf16>, vector<16x64xf32> -> vector<16x64xf32>
    %39 = tpu.reciprocal %36 {approx = true} : vector<16x1xf32> -> vector<16x1xf32>
    %c0_24 = arith.constant 0 : index
    %c0_25 = arith.constant 0 : index
    %40 = vector.load %arg8[%c0_24, %c0_25] : memref<4x64xf32, #tpu.memory_space<vmem>>, vector<1x64xf32>
    %41 = vector.broadcast %39 : vector<16x1xf32> to vector<16x64xf32>
    %42 = vector.broadcast %40 : vector<1x64xf32> to vector<16x64xf32>
    %43 = arith.mulf %41, %42 : vector<16x64xf32>
    %44 = arith.mulf %38, %43 : vector<16x64xf32>
    %45 = arith.addf %14, %44 : vector<16x64xf32>
    %46 = vector.extract_strided_slice %10 {offsets = [0, 1], sizes = [16, 1], strides = [1, 1]} : vector<16x4xf32> to vector<16x1xf32>
    %47 = vector.extract_strided_slice %13 {offsets = [1, 0], sizes = [1, 16], strides = [1, 1]} : vector<4x16xf32> to vector<1x16xf32>
    %48 = vector.broadcast %46 : vector<16x1xf32> to vector<16x16xf32>
    %49 = vector.broadcast %47 : vector<1x16xf32> to vector<16x16xf32>
    %50 = arith.addf %48, %49 : vector<16x16xf32>
    %c1 = arith.constant 1 : index
    %c0_26 = arith.constant 0 : index
    %c0_27 = arith.constant 0 : index
    %51 = vector.load %arg2[%c1, %c0_26, %c0_27] : memref<12x16x16xf32, #tpu.memory_space<vmem>>, vector<1x16x16xf32>
    %52 = vector.shape_cast %51 : vector<1x16x16xf32> to vector<16x16xf32>
    %53 = arith.addf %50, %52 : vector<16x16xf32>
    %cst_28 = arith.constant 0.000000e+00 : f32
    %54 = vector.broadcast %cst_28 : f32 to vector<16x16xf32>
    %55 = arith.cmpf ogt, %53, %54 : vector<16x16xf32>
    %cst_29 = arith.constant 2.000000e-01 : f32
    %56 = vector.broadcast %cst_29 : f32 to vector<16x16xf32>
    %57 = arith.mulf %56, %53 : vector<16x16xf32>
    %58 = arith.select %55, %53, %57 : vector<16x16xi1>, vector<16x16xf32>
    %cst_30 = arith.constant -1.000000e+30 : f32
    %59 = vector.broadcast %cst_30 : f32 to vector<16x16xf32>
    %60 = arith.select %2, %58, %59 : vector<16x16xi1>, vector<16x16xf32>
    %cst_31 = arith.constant dense<0xFF800000> : vector<16xf32>
    %61 = vector.multi_reduction <maximumf>, %60, %cst_31 [1] : vector<16x16xf32> to vector<16xf32>
    %62 = vector.shape_cast %61 : vector<16xf32> to vector<16x1xf32>
    %63 = vector.broadcast %62 : vector<16x1xf32> to vector<16x16xf32>
    %64 = arith.subf %60, %63 : vector<16x16xf32>
    %65 = math.exp %64 : vector<16x16xf32>
    %cst_32 = arith.constant dense<0.000000e+00> : vector<16xf32>
    %66 = vector.multi_reduction <add>, %65, %cst_32 [1] : vector<16x16xf32> to vector<16xf32>
    %67 = vector.shape_cast %66 : vector<16xf32> to vector<16x1xf32>
    %68 = arith.truncf %65 : vector<16x16xf32> to vector<16x16xbf16>
    %cst_33 = arith.constant dense<0.000000e+00> : vector<16x64xf32>
    %69 = tpu.matmul %68, %7, %cst_33 {dimension_numbers = #tpu.dot_dimension_numbers<[1], [0], [0], [1], [0, 0, 1, 1], [], []>} : vector<16x16xbf16>, vector<16x64xbf16>, vector<16x64xf32> -> vector<16x64xf32>
    %70 = tpu.reciprocal %67 {approx = true} : vector<16x1xf32> -> vector<16x1xf32>
    %c1_34 = arith.constant 1 : index
    %c0_35 = arith.constant 0 : index
    %71 = vector.load %arg8[%c1_34, %c0_35] : memref<4x64xf32, #tpu.memory_space<vmem>>, vector<1x64xf32>
    %72 = vector.broadcast %70 : vector<16x1xf32> to vector<16x64xf32>
    %73 = vector.broadcast %71 : vector<1x64xf32> to vector<16x64xf32>
    %74 = arith.mulf %72, %73 : vector<16x64xf32>
    %75 = arith.mulf %69, %74 : vector<16x64xf32>
    %76 = arith.addf %45, %75 : vector<16x64xf32>
    %77 = vector.extract_strided_slice %10 {offsets = [0, 2], sizes = [16, 1], strides = [1, 1]} : vector<16x4xf32> to vector<16x1xf32>
    %78 = vector.extract_strided_slice %13 {offsets = [2, 0], sizes = [1, 16], strides = [1, 1]} : vector<4x16xf32> to vector<1x16xf32>
    %79 = vector.broadcast %77 : vector<16x1xf32> to vector<16x16xf32>
    %80 = vector.broadcast %78 : vector<1x16xf32> to vector<16x16xf32>
    %81 = arith.addf %79, %80 : vector<16x16xf32>
    %c2 = arith.constant 2 : index
    %c0_36 = arith.constant 0 : index
    %c0_37 = arith.constant 0 : index
    %82 = vector.load %arg2[%c2, %c0_36, %c0_37] : memref<12x16x16xf32, #tpu.memory_space<vmem>>, vector<1x16x16xf32>
    %83 = vector.shape_cast %82 : vector<1x16x16xf32> to vector<16x16xf32>
    %84 = arith.addf %81, %83 : vector<16x16xf32>
    %cst_38 = arith.constant 0.000000e+00 : f32
    %85 = vector.broadcast %cst_38 : f32 to vector<16x16xf32>
    %86 = arith.cmpf ogt, %84, %85 : vector<16x16xf32>
    %cst_39 = arith.constant 2.000000e-01 : f32
    %87 = vector.broadcast %cst_39 : f32 to vector<16x16xf32>
    %88 = arith.mulf %87, %84 : vector<16x16xf32>
    %89 = arith.select %86, %84, %88 : vector<16x16xi1>, vector<16x16xf32>
    %cst_40 = arith.constant -1.000000e+30 : f32
    %90 = vector.broadcast %cst_40 : f32 to vector<16x16xf32>
    %91 = arith.select %2, %89, %90 : vector<16x16xi1>, vector<16x16xf32>
    %cst_41 = arith.constant dense<0xFF800000> : vector<16xf32>
    %92 = vector.multi_reduction <maximumf>, %91, %cst_41 [1] : vector<16x16xf32> to vector<16xf32>
    %93 = vector.shape_cast %92 : vector<16xf32> to vector<16x1xf32>
    %94 = vector.broadcast %93 : vector<16x1xf32> to vector<16x16xf32>
    %95 = arith.subf %91, %94 : vector<16x16xf32>
    %96 = math.exp %95 : vector<16x16xf32>
    %cst_42 = arith.constant dense<0.000000e+00> : vector<16xf32>
    %97 = vector.multi_reduction <add>, %96, %cst_42 [1] : vector<16x16xf32> to vector<16xf32>
    %98 = vector.shape_cast %97 : vector<16xf32> to vector<16x1xf32>
    %99 = arith.truncf %96 : vector<16x16xf32> to vector<16x16xbf16>
    %cst_43 = arith.constant dense<0.000000e+00> : vector<16x64xf32>
    %100 = tpu.matmul %99, %7, %cst_43 {dimension_numbers = #tpu.dot_dimension_numbers<[1], [0], [0], [1], [0, 0, 1, 1], [], []>} : vector<16x16xbf16>, vector<16x64xbf16>, vector<16x64xf32> -> vector<16x64xf32>
    %101 = tpu.reciprocal %98 {approx = true} : vector<16x1xf32> -> vector<16x1xf32>
    %c2_44 = arith.constant 2 : index
    %c0_45 = arith.constant 0 : index
    %102 = vector.load %arg8[%c2_44, %c0_45] : memref<4x64xf32, #tpu.memory_space<vmem>>, vector<1x64xf32>
    %103 = vector.broadcast %101 : vector<16x1xf32> to vector<16x64xf32>
    %104 = vector.broadcast %102 : vector<1x64xf32> to vector<16x64xf32>
    %105 = arith.mulf %103, %104 : vector<16x64xf32>
    %106 = arith.mulf %100, %105 : vector<16x64xf32>
    %107 = arith.addf %76, %106 : vector<16x64xf32>
    %108 = vector.extract_strided_slice %10 {offsets = [0, 3], sizes = [16, 1], strides = [1, 1]} : vector<16x4xf32> to vector<16x1xf32>
    %109 = vector.extract_strided_slice %13 {offsets = [3, 0], sizes = [1, 16], strides = [1, 1]} : vector<4x16xf32> to vector<1x16xf32>
    %110 = vector.broadcast %108 : vector<16x1xf32> to vector<16x16xf32>
    %111 = vector.broadcast %109 : vector<1x16xf32> to vector<16x16xf32>
    %112 = arith.addf %110, %111 : vector<16x16xf32>
    %c3 = arith.constant 3 : index
    %c0_46 = arith.constant 0 : index
    %c0_47 = arith.constant 0 : index
    %113 = vector.load %arg2[%c3, %c0_46, %c0_47] : memref<12x16x16xf32, #tpu.memory_space<vmem>>, vector<1x16x16xf32>
    %114 = vector.shape_cast %113 : vector<1x16x16xf32> to vector<16x16xf32>
    %115 = arith.addf %112, %114 : vector<16x16xf32>
    %cst_48 = arith.constant 0.000000e+00 : f32
    %116 = vector.broadcast %cst_48 : f32 to vector<16x16xf32>
    %117 = arith.cmpf ogt, %115, %116 : vector<16x16xf32>
    %cst_49 = arith.constant 2.000000e-01 : f32
    %118 = vector.broadcast %cst_49 : f32 to vector<16x16xf32>
    %119 = arith.mulf %118, %115 : vector<16x16xf32>
    %120 = arith.select %117, %115, %119 : vector<16x16xi1>, vector<16x16xf32>
    %cst_50 = arith.constant -1.000000e+30 : f32
    %121 = vector.broadcast %cst_50 : f32 to vector<16x16xf32>
    %122 = arith.select %2, %120, %121 : vector<16x16xi1>, vector<16x16xf32>
    %cst_51 = arith.constant dense<0xFF800000> : vector<16xf32>
    %123 = vector.multi_reduction <maximumf>, %122, %cst_51 [1] : vector<16x16xf32> to vector<16xf32>
    %124 = vector.shape_cast %123 : vector<16xf32> to vector<16x1xf32>
    %125 = vector.broadcast %124 : vector<16x1xf32> to vector<16x16xf32>
    %126 = arith.subf %122, %125 : vector<16x16xf32>
    %127 = math.exp %126 : vector<16x16xf32>
    %cst_52 = arith.constant dense<0.000000e+00> : vector<16xf32>
    %128 = vector.multi_reduction <add>, %127, %cst_52 [1] : vector<16x16xf32> to vector<16xf32>
    %129 = vector.shape_cast %128 : vector<16xf32> to vector<16x1xf32>
    %130 = arith.truncf %127 : vector<16x16xf32> to vector<16x16xbf16>
    %cst_53 = arith.constant dense<0.000000e+00> : vector<16x64xf32>
    %131 = tpu.matmul %130, %7, %cst_53 {dimension_numbers = #tpu.dot_dimension_numbers<[1], [0], [0], [1], [0, 0, 1, 1], [], []>} : vector<16x16xbf16>, vector<16x64xbf16>, vector<16x64xf32> -> vector<16x64xf32>
    %132 = tpu.reciprocal %129 {approx = true} : vector<16x1xf32> -> vector<16x1xf32>
    %c3_54 = arith.constant 3 : index
    %c0_55 = arith.constant 0 : index
    %133 = vector.load %arg8[%c3_54, %c0_55] : memref<4x64xf32, #tpu.memory_space<vmem>>, vector<1x64xf32>
    %134 = vector.broadcast %132 : vector<16x1xf32> to vector<16x64xf32>
    %135 = vector.broadcast %133 : vector<1x64xf32> to vector<16x64xf32>
    %136 = arith.mulf %134, %135 : vector<16x64xf32>
    %137 = arith.mulf %131, %136 : vector<16x64xf32>
    %138 = arith.addf %107, %137 : vector<16x64xf32>
    %c0_56 = arith.constant 0 : index
    %c0_57 = arith.constant 0 : index
    %c0_58 = arith.constant 0 : index
    %139 = vector.load %arg7[%c0_56, %c0_57, %c0_58] : memref<3x1x64xf32, #tpu.memory_space<vmem>>, vector<1x1x64xf32>
    %140 = vector.shape_cast %139 : vector<1x1x64xf32> to vector<1x64xf32>
    %141 = vector.broadcast %140 : vector<1x64xf32> to vector<16x64xf32>
    %142 = arith.addf %138, %141 : vector<16x64xf32>
    %cst_59 = arith.constant 0.000000e+00 : f32
    %143 = vector.broadcast %cst_59 : f32 to vector<16x64xf32>
    %144 = arith.maximumf %142, %143 : vector<16x64xf32>
    %c0_60 = arith.constant 0 : index
    %c0_61 = arith.constant 0 : index
    %c0_62 = arith.constant 0 : index
    %145 = vector.load %arg4[%c0_60, %c0_61, %c0_62] : memref<2x64x64xbf16, #tpu.memory_space<vmem>>, vector<1x64x64xbf16>
    %146 = vector.shape_cast %145 : vector<1x64x64xbf16> to vector<64x64xbf16>
    %147 = arith.truncf %144 : vector<16x64xf32> to vector<16x64xbf16>
    %cst_63 = arith.constant dense<0.000000e+00> : vector<16x64xf32>
    %148 = tpu.matmul %147, %146, %cst_63 {dimension_numbers = #tpu.dot_dimension_numbers<[1], [0], [0], [1], [0, 0, 1, 1], [], []>} : vector<16x64xbf16>, vector<64x64xbf16>, vector<16x64xf32> -> vector<16x64xf32>
    %149 = arith.truncf %148 : vector<16x64xf32> to vector<16x64xbf16>
    %c1_64 = arith.constant 1 : index
    %c0_65 = arith.constant 0 : index
    %c0_66 = arith.constant 0 : index
    %150 = vector.load %arg6[%c1_64, %c0_65, %c0_66] : memref<3x64x4xbf16, #tpu.memory_space<vmem>>, vector<1x64x4xbf16>
    %151 = vector.shape_cast %150 : vector<1x64x4xbf16> to vector<64x4xbf16>
    %cst_67 = arith.constant dense<0.000000e+00> : vector<16x4xf32>
    %152 = tpu.matmul %149, %151, %cst_67 {dimension_numbers = #tpu.dot_dimension_numbers<[1], [0], [0], [1], [0, 0, 1, 1], [], []>} : vector<16x64xbf16>, vector<64x4xbf16>, vector<16x4xf32> -> vector<16x4xf32>
    %c1_68 = arith.constant 1 : index
    %c0_69 = arith.constant 0 : index
    %c0_70 = arith.constant 0 : index
    %153 = vector.load %arg5[%c1_68, %c0_69, %c0_70] : memref<3x4x64xbf16, #tpu.memory_space<vmem>>, vector<1x4x64xbf16>
    %154 = vector.shape_cast %153 : vector<1x4x64xbf16> to vector<4x64xbf16>
    %cst_71 = arith.constant dense<0.000000e+00> : vector<4x16xf32>
    %155 = tpu.matmul %154, %149, %cst_71 {dimension_numbers = #tpu.dot_dimension_numbers<[1], [1], [0], [0], [0, 0, 1, 0], [], []>} : vector<4x64xbf16>, vector<16x64xbf16>, vector<4x16xf32> -> vector<4x16xf32>
    %cst_72 = arith.constant 0.000000e+00 : f32
    %156 = vector.broadcast %cst_72 : f32 to vector<16x64xf32>
    %157 = vector.extract_strided_slice %152 {offsets = [0, 0], sizes = [16, 1], strides = [1, 1]} : vector<16x4xf32> to vector<16x1xf32>
    %158 = vector.extract_strided_slice %155 {offsets = [0, 0], sizes = [1, 16], strides = [1, 1]} : vector<4x16xf32> to vector<1x16xf32>
    %159 = vector.broadcast %157 : vector<16x1xf32> to vector<16x16xf32>
    %160 = vector.broadcast %158 : vector<1x16xf32> to vector<16x16xf32>
    %161 = arith.addf %159, %160 : vector<16x16xf32>
    %c4 = arith.constant 4 : index
    %c0_73 = arith.constant 0 : index
    %c0_74 = arith.constant 0 : index
    %162 = vector.load %arg2[%c4, %c0_73, %c0_74] : memref<12x16x16xf32, #tpu.memory_space<vmem>>, vector<1x16x16xf32>
    %163 = vector.shape_cast %162 : vector<1x16x16xf32> to vector<16x16xf32>
    %164 = arith.addf %161, %163 : vector<16x16xf32>
    %cst_75 = arith.constant 0.000000e+00 : f32
    %165 = vector.broadcast %cst_75 : f32 to vector<16x16xf32>
    %166 = arith.cmpf ogt, %164, %165 : vector<16x16xf32>
    %cst_76 = arith.constant 2.000000e-01 : f32
    %167 = vector.broadcast %cst_76 : f32 to vector<16x16xf32>
    %168 = arith.mulf %167, %164 : vector<16x16xf32>
    %169 = arith.select %166, %164, %168 : vector<16x16xi1>, vector<16x16xf32>
    %cst_77 = arith.constant -1.000000e+30 : f32
    %170 = vector.broadcast %cst_77 : f32 to vector<16x16xf32>
    %171 = arith.select %2, %169, %170 : vector<16x16xi1>, vector<16x16xf32>
    %cst_78 = arith.constant dense<0xFF800000> : vector<16xf32>
    %172 = vector.multi_reduction <maximumf>, %171, %cst_78 [1] : vector<16x16xf32> to vector<16xf32>
    %173 = vector.shape_cast %172 : vector<16xf32> to vector<16x1xf32>
    %174 = vector.broadcast %173 : vector<16x1xf32> to vector<16x16xf32>
    %175 = arith.subf %171, %174 : vector<16x16xf32>
    %176 = math.exp %175 : vector<16x16xf32>
    %cst_79 = arith.constant dense<0.000000e+00> : vector<16xf32>
    %177 = vector.multi_reduction <add>, %176, %cst_79 [1] : vector<16x16xf32> to vector<16xf32>
    %178 = vector.shape_cast %177 : vector<16xf32> to vector<16x1xf32>
    %179 = arith.truncf %176 : vector<16x16xf32> to vector<16x16xbf16>
    %cst_80 = arith.constant dense<0.000000e+00> : vector<16x64xf32>
    %180 = tpu.matmul %179, %149, %cst_80 {dimension_numbers = #tpu.dot_dimension_numbers<[1], [0], [0], [1], [0, 0, 1, 1], [], []>} : vector<16x16xbf16>, vector<16x64xbf16>, vector<16x64xf32> -> vector<16x64xf32>
    %181 = tpu.reciprocal %178 {approx = true} : vector<16x1xf32> -> vector<16x1xf32>
    %c0_81 = arith.constant 0 : index
    %c0_82 = arith.constant 0 : index
    %182 = vector.load %arg8[%c0_81, %c0_82] : memref<4x64xf32, #tpu.memory_space<vmem>>, vector<1x64xf32>
    %183 = vector.broadcast %181 : vector<16x1xf32> to vector<16x64xf32>
    %184 = vector.broadcast %182 : vector<1x64xf32> to vector<16x64xf32>
    %185 = arith.mulf %183, %184 : vector<16x64xf32>
    %186 = arith.mulf %180, %185 : vector<16x64xf32>
    %187 = arith.addf %156, %186 : vector<16x64xf32>
    %188 = vector.extract_strided_slice %152 {offsets = [0, 1], sizes = [16, 1], strides = [1, 1]} : vector<16x4xf32> to vector<16x1xf32>
    %189 = vector.extract_strided_slice %155 {offsets = [1, 0], sizes = [1, 16], strides = [1, 1]} : vector<4x16xf32> to vector<1x16xf32>
    %190 = vector.broadcast %188 : vector<16x1xf32> to vector<16x16xf32>
    %191 = vector.broadcast %189 : vector<1x16xf32> to vector<16x16xf32>
    %192 = arith.addf %190, %191 : vector<16x16xf32>
    %c5 = arith.constant 5 : index
    %c0_83 = arith.constant 0 : index
    %c0_84 = arith.constant 0 : index
    %193 = vector.load %arg2[%c5, %c0_83, %c0_84] : memref<12x16x16xf32, #tpu.memory_space<vmem>>, vector<1x16x16xf32>
    %194 = vector.shape_cast %193 : vector<1x16x16xf32> to vector<16x16xf32>
    %195 = arith.addf %192, %194 : vector<16x16xf32>
    %cst_85 = arith.constant 0.000000e+00 : f32
    %196 = vector.broadcast %cst_85 : f32 to vector<16x16xf32>
    %197 = arith.cmpf ogt, %195, %196 : vector<16x16xf32>
    %cst_86 = arith.constant 2.000000e-01 : f32
    %198 = vector.broadcast %cst_86 : f32 to vector<16x16xf32>
    %199 = arith.mulf %198, %195 : vector<16x16xf32>
    %200 = arith.select %197, %195, %199 : vector<16x16xi1>, vector<16x16xf32>
    %cst_87 = arith.constant -1.000000e+30 : f32
    %201 = vector.broadcast %cst_87 : f32 to vector<16x16xf32>
    %202 = arith.select %2, %200, %201 : vector<16x16xi1>, vector<16x16xf32>
    %cst_88 = arith.constant dense<0xFF800000> : vector<16xf32>
    %203 = vector.multi_reduction <maximumf>, %202, %cst_88 [1] : vector<16x16xf32> to vector<16xf32>
    %204 = vector.shape_cast %203 : vector<16xf32> to vector<16x1xf32>
    %205 = vector.broadcast %204 : vector<16x1xf32> to vector<16x16xf32>
    %206 = arith.subf %202, %205 : vector<16x16xf32>
    %207 = math.exp %206 : vector<16x16xf32>
    %cst_89 = arith.constant dense<0.000000e+00> : vector<16xf32>
    %208 = vector.multi_reduction <add>, %207, %cst_89 [1] : vector<16x16xf32> to vector<16xf32>
    %209 = vector.shape_cast %208 : vector<16xf32> to vector<16x1xf32>
    %210 = arith.truncf %207 : vector<16x16xf32> to vector<16x16xbf16>
    %cst_90 = arith.constant dense<0.000000e+00> : vector<16x64xf32>
    %211 = tpu.matmul %210, %149, %cst_90 {dimension_numbers = #tpu.dot_dimension_numbers<[1], [0], [0], [1], [0, 0, 1, 1], [], []>} : vector<16x16xbf16>, vector<16x64xbf16>, vector<16x64xf32> -> vector<16x64xf32>
    %212 = tpu.reciprocal %209 {approx = true} : vector<16x1xf32> -> vector<16x1xf32>
    %c1_91 = arith.constant 1 : index
    %c0_92 = arith.constant 0 : index
    %213 = vector.load %arg8[%c1_91, %c0_92] : memref<4x64xf32, #tpu.memory_space<vmem>>, vector<1x64xf32>
    %214 = vector.broadcast %212 : vector<16x1xf32> to vector<16x64xf32>
    %215 = vector.broadcast %213 : vector<1x64xf32> to vector<16x64xf32>
    %216 = arith.mulf %214, %215 : vector<16x64xf32>
    %217 = arith.mulf %211, %216 : vector<16x64xf32>
    %218 = arith.addf %187, %217 : vector<16x64xf32>
    %219 = vector.extract_strided_slice %152 {offsets = [0, 2], sizes = [16, 1], strides = [1, 1]} : vector<16x4xf32> to vector<16x1xf32>
    %220 = vector.extract_strided_slice %155 {offsets = [2, 0], sizes = [1, 16], strides = [1, 1]} : vector<4x16xf32> to vector<1x16xf32>
    %221 = vector.broadcast %219 : vector<16x1xf32> to vector<16x16xf32>
    %222 = vector.broadcast %220 : vector<1x16xf32> to vector<16x16xf32>
    %223 = arith.addf %221, %222 : vector<16x16xf32>
    %c6 = arith.constant 6 : index
    %c0_93 = arith.constant 0 : index
    %c0_94 = arith.constant 0 : index
    %224 = vector.load %arg2[%c6, %c0_93, %c0_94] : memref<12x16x16xf32, #tpu.memory_space<vmem>>, vector<1x16x16xf32>
    %225 = vector.shape_cast %224 : vector<1x16x16xf32> to vector<16x16xf32>
    %226 = arith.addf %223, %225 : vector<16x16xf32>
    %cst_95 = arith.constant 0.000000e+00 : f32
    %227 = vector.broadcast %cst_95 : f32 to vector<16x16xf32>
    %228 = arith.cmpf ogt, %226, %227 : vector<16x16xf32>
    %cst_96 = arith.constant 2.000000e-01 : f32
    %229 = vector.broadcast %cst_96 : f32 to vector<16x16xf32>
    %230 = arith.mulf %229, %226 : vector<16x16xf32>
    %231 = arith.select %228, %226, %230 : vector<16x16xi1>, vector<16x16xf32>
    %cst_97 = arith.constant -1.000000e+30 : f32
    %232 = vector.broadcast %cst_97 : f32 to vector<16x16xf32>
    %233 = arith.select %2, %231, %232 : vector<16x16xi1>, vector<16x16xf32>
    %cst_98 = arith.constant dense<0xFF800000> : vector<16xf32>
    %234 = vector.multi_reduction <maximumf>, %233, %cst_98 [1] : vector<16x16xf32> to vector<16xf32>
    %235 = vector.shape_cast %234 : vector<16xf32> to vector<16x1xf32>
    %236 = vector.broadcast %235 : vector<16x1xf32> to vector<16x16xf32>
    %237 = arith.subf %233, %236 : vector<16x16xf32>
    %238 = math.exp %237 : vector<16x16xf32>
    %cst_99 = arith.constant dense<0.000000e+00> : vector<16xf32>
    %239 = vector.multi_reduction <add>, %238, %cst_99 [1] : vector<16x16xf32> to vector<16xf32>
    %240 = vector.shape_cast %239 : vector<16xf32> to vector<16x1xf32>
    %241 = arith.truncf %238 : vector<16x16xf32> to vector<16x16xbf16>
    %cst_100 = arith.constant dense<0.000000e+00> : vector<16x64xf32>
    %242 = tpu.matmul %241, %149, %cst_100 {dimension_numbers = #tpu.dot_dimension_numbers<[1], [0], [0], [1], [0, 0, 1, 1], [], []>} : vector<16x16xbf16>, vector<16x64xbf16>, vector<16x64xf32> -> vector<16x64xf32>
    %243 = tpu.reciprocal %240 {approx = true} : vector<16x1xf32> -> vector<16x1xf32>
    %c2_101 = arith.constant 2 : index
    %c0_102 = arith.constant 0 : index
    %244 = vector.load %arg8[%c2_101, %c0_102] : memref<4x64xf32, #tpu.memory_space<vmem>>, vector<1x64xf32>
    %245 = vector.broadcast %243 : vector<16x1xf32> to vector<16x64xf32>
    %246 = vector.broadcast %244 : vector<1x64xf32> to vector<16x64xf32>
    %247 = arith.mulf %245, %246 : vector<16x64xf32>
    %248 = arith.mulf %242, %247 : vector<16x64xf32>
    %249 = arith.addf %218, %248 : vector<16x64xf32>
    %250 = vector.extract_strided_slice %152 {offsets = [0, 3], sizes = [16, 1], strides = [1, 1]} : vector<16x4xf32> to vector<16x1xf32>
    %251 = vector.extract_strided_slice %155 {offsets = [3, 0], sizes = [1, 16], strides = [1, 1]} : vector<4x16xf32> to vector<1x16xf32>
    %252 = vector.broadcast %250 : vector<16x1xf32> to vector<16x16xf32>
    %253 = vector.broadcast %251 : vector<1x16xf32> to vector<16x16xf32>
    %254 = arith.addf %252, %253 : vector<16x16xf32>
    %c7 = arith.constant 7 : index
    %c0_103 = arith.constant 0 : index
    %c0_104 = arith.constant 0 : index
    %255 = vector.load %arg2[%c7, %c0_103, %c0_104] : memref<12x16x16xf32, #tpu.memory_space<vmem>>, vector<1x16x16xf32>
    %256 = vector.shape_cast %255 : vector<1x16x16xf32> to vector<16x16xf32>
    %257 = arith.addf %254, %256 : vector<16x16xf32>
    %cst_105 = arith.constant 0.000000e+00 : f32
    %258 = vector.broadcast %cst_105 : f32 to vector<16x16xf32>
    %259 = arith.cmpf ogt, %257, %258 : vector<16x16xf32>
    %cst_106 = arith.constant 2.000000e-01 : f32
    %260 = vector.broadcast %cst_106 : f32 to vector<16x16xf32>
    %261 = arith.mulf %260, %257 : vector<16x16xf32>
    %262 = arith.select %259, %257, %261 : vector<16x16xi1>, vector<16x16xf32>
    %cst_107 = arith.constant -1.000000e+30 : f32
    %263 = vector.broadcast %cst_107 : f32 to vector<16x16xf32>
    %264 = arith.select %2, %262, %263 : vector<16x16xi1>, vector<16x16xf32>
    %cst_108 = arith.constant dense<0xFF800000> : vector<16xf32>
    %265 = vector.multi_reduction <maximumf>, %264, %cst_108 [1] : vector<16x16xf32> to vector<16xf32>
    %266 = vector.shape_cast %265 : vector<16xf32> to vector<16x1xf32>
    %267 = vector.broadcast %266 : vector<16x1xf32> to vector<16x16xf32>
    %268 = arith.subf %264, %267 : vector<16x16xf32>
    %269 = math.exp %268 : vector<16x16xf32>
    %cst_109 = arith.constant dense<0.000000e+00> : vector<16xf32>
    %270 = vector.multi_reduction <add>, %269, %cst_109 [1] : vector<16x16xf32> to vector<16xf32>
    %271 = vector.shape_cast %270 : vector<16xf32> to vector<16x1xf32>
    %272 = arith.truncf %269 : vector<16x16xf32> to vector<16x16xbf16>
    %cst_110 = arith.constant dense<0.000000e+00> : vector<16x64xf32>
    %273 = tpu.matmul %272, %149, %cst_110 {dimension_numbers = #tpu.dot_dimension_numbers<[1], [0], [0], [1], [0, 0, 1, 1], [], []>} : vector<16x16xbf16>, vector<16x64xbf16>, vector<16x64xf32> -> vector<16x64xf32>
    %274 = tpu.reciprocal %271 {approx = true} : vector<16x1xf32> -> vector<16x1xf32>
    %c3_111 = arith.constant 3 : index
    %c0_112 = arith.constant 0 : index
    %275 = vector.load %arg8[%c3_111, %c0_112] : memref<4x64xf32, #tpu.memory_space<vmem>>, vector<1x64xf32>
    %276 = vector.broadcast %274 : vector<16x1xf32> to vector<16x64xf32>
    %277 = vector.broadcast %275 : vector<1x64xf32> to vector<16x64xf32>
    %278 = arith.mulf %276, %277 : vector<16x64xf32>
    %279 = arith.mulf %273, %278 : vector<16x64xf32>
    %280 = arith.addf %249, %279 : vector<16x64xf32>
    %c1_113 = arith.constant 1 : index
    %c0_114 = arith.constant 0 : index
    %c0_115 = arith.constant 0 : index
    %281 = vector.load %arg7[%c1_113, %c0_114, %c0_115] : memref<3x1x64xf32, #tpu.memory_space<vmem>>, vector<1x1x64xf32>
    %282 = vector.shape_cast %281 : vector<1x1x64xf32> to vector<1x64xf32>
    %283 = vector.broadcast %282 : vector<1x64xf32> to vector<16x64xf32>
    %284 = arith.addf %280, %283 : vector<16x64xf32>
    %cst_116 = arith.constant 0.000000e+00 : f32
    %285 = vector.broadcast %cst_116 : f32 to vector<16x64xf32>
    %286 = arith.maximumf %284, %285 : vector<16x64xf32>
    %c1_117 = arith.constant 1 : index
    %c0_118 = arith.constant 0 : index
    %c0_119 = arith.constant 0 : index
    %287 = vector.load %arg4[%c1_117, %c0_118, %c0_119] : memref<2x64x64xbf16, #tpu.memory_space<vmem>>, vector<1x64x64xbf16>
    %288 = vector.shape_cast %287 : vector<1x64x64xbf16> to vector<64x64xbf16>
    %289 = arith.truncf %286 : vector<16x64xf32> to vector<16x64xbf16>
    %cst_120 = arith.constant dense<0.000000e+00> : vector<16x64xf32>
    %290 = tpu.matmul %289, %288, %cst_120 {dimension_numbers = #tpu.dot_dimension_numbers<[1], [0], [0], [1], [0, 0, 1, 1], [], []>} : vector<16x64xbf16>, vector<64x64xbf16>, vector<16x64xf32> -> vector<16x64xf32>
    %291 = arith.truncf %290 : vector<16x64xf32> to vector<16x64xbf16>
    %c2_121 = arith.constant 2 : index
    %c0_122 = arith.constant 0 : index
    %c0_123 = arith.constant 0 : index
    %292 = vector.load %arg6[%c2_121, %c0_122, %c0_123] : memref<3x64x4xbf16, #tpu.memory_space<vmem>>, vector<1x64x4xbf16>
    %293 = vector.shape_cast %292 : vector<1x64x4xbf16> to vector<64x4xbf16>
    %cst_124 = arith.constant dense<0.000000e+00> : vector<16x4xf32>
    %294 = tpu.matmul %291, %293, %cst_124 {dimension_numbers = #tpu.dot_dimension_numbers<[1], [0], [0], [1], [0, 0, 1, 1], [], []>} : vector<16x64xbf16>, vector<64x4xbf16>, vector<16x4xf32> -> vector<16x4xf32>
    %c2_125 = arith.constant 2 : index
    %c0_126 = arith.constant 0 : index
    %c0_127 = arith.constant 0 : index
    %295 = vector.load %arg5[%c2_125, %c0_126, %c0_127] : memref<3x4x64xbf16, #tpu.memory_space<vmem>>, vector<1x4x64xbf16>
    %296 = vector.shape_cast %295 : vector<1x4x64xbf16> to vector<4x64xbf16>
    %cst_128 = arith.constant dense<0.000000e+00> : vector<4x16xf32>
    %297 = tpu.matmul %296, %291, %cst_128 {dimension_numbers = #tpu.dot_dimension_numbers<[1], [1], [0], [0], [0, 0, 1, 0], [], []>} : vector<4x64xbf16>, vector<16x64xbf16>, vector<4x16xf32> -> vector<4x16xf32>
    %cst_129 = arith.constant 0.000000e+00 : f32
    %298 = vector.broadcast %cst_129 : f32 to vector<16x64xf32>
    %299 = vector.extract_strided_slice %294 {offsets = [0, 0], sizes = [16, 1], strides = [1, 1]} : vector<16x4xf32> to vector<16x1xf32>
    %300 = vector.extract_strided_slice %297 {offsets = [0, 0], sizes = [1, 16], strides = [1, 1]} : vector<4x16xf32> to vector<1x16xf32>
    %301 = vector.broadcast %299 : vector<16x1xf32> to vector<16x16xf32>
    %302 = vector.broadcast %300 : vector<1x16xf32> to vector<16x16xf32>
    %303 = arith.addf %301, %302 : vector<16x16xf32>
    %c8 = arith.constant 8 : index
    %c0_130 = arith.constant 0 : index
    %c0_131 = arith.constant 0 : index
    %304 = vector.load %arg2[%c8, %c0_130, %c0_131] : memref<12x16x16xf32, #tpu.memory_space<vmem>>, vector<1x16x16xf32>
    %305 = vector.shape_cast %304 : vector<1x16x16xf32> to vector<16x16xf32>
    %306 = arith.addf %303, %305 : vector<16x16xf32>
    %cst_132 = arith.constant 0.000000e+00 : f32
    %307 = vector.broadcast %cst_132 : f32 to vector<16x16xf32>
    %308 = arith.cmpf ogt, %306, %307 : vector<16x16xf32>
    %cst_133 = arith.constant 2.000000e-01 : f32
    %309 = vector.broadcast %cst_133 : f32 to vector<16x16xf32>
    %310 = arith.mulf %309, %306 : vector<16x16xf32>
    %311 = arith.select %308, %306, %310 : vector<16x16xi1>, vector<16x16xf32>
    %cst_134 = arith.constant -1.000000e+30 : f32
    %312 = vector.broadcast %cst_134 : f32 to vector<16x16xf32>
    %313 = arith.select %2, %311, %312 : vector<16x16xi1>, vector<16x16xf32>
    %cst_135 = arith.constant dense<0xFF800000> : vector<16xf32>
    %314 = vector.multi_reduction <maximumf>, %313, %cst_135 [1] : vector<16x16xf32> to vector<16xf32>
    %315 = vector.shape_cast %314 : vector<16xf32> to vector<16x1xf32>
    %316 = vector.broadcast %315 : vector<16x1xf32> to vector<16x16xf32>
    %317 = arith.subf %313, %316 : vector<16x16xf32>
    %318 = math.exp %317 : vector<16x16xf32>
    %cst_136 = arith.constant dense<0.000000e+00> : vector<16xf32>
    %319 = vector.multi_reduction <add>, %318, %cst_136 [1] : vector<16x16xf32> to vector<16xf32>
    %320 = vector.shape_cast %319 : vector<16xf32> to vector<16x1xf32>
    %321 = arith.truncf %318 : vector<16x16xf32> to vector<16x16xbf16>
    %cst_137 = arith.constant dense<0.000000e+00> : vector<16x64xf32>
    %322 = tpu.matmul %321, %291, %cst_137 {dimension_numbers = #tpu.dot_dimension_numbers<[1], [0], [0], [1], [0, 0, 1, 1], [], []>} : vector<16x16xbf16>, vector<16x64xbf16>, vector<16x64xf32> -> vector<16x64xf32>
    %323 = tpu.reciprocal %320 {approx = true} : vector<16x1xf32> -> vector<16x1xf32>
    %c0_138 = arith.constant 0 : index
    %c0_139 = arith.constant 0 : index
    %324 = vector.load %arg8[%c0_138, %c0_139] : memref<4x64xf32, #tpu.memory_space<vmem>>, vector<1x64xf32>
    %325 = vector.broadcast %323 : vector<16x1xf32> to vector<16x64xf32>
    %326 = vector.broadcast %324 : vector<1x64xf32> to vector<16x64xf32>
    %327 = arith.mulf %325, %326 : vector<16x64xf32>
    %328 = arith.mulf %322, %327 : vector<16x64xf32>
    %329 = arith.addf %298, %328 : vector<16x64xf32>
    %330 = vector.extract_strided_slice %294 {offsets = [0, 1], sizes = [16, 1], strides = [1, 1]} : vector<16x4xf32> to vector<16x1xf32>
    %331 = vector.extract_strided_slice %297 {offsets = [1, 0], sizes = [1, 16], strides = [1, 1]} : vector<4x16xf32> to vector<1x16xf32>
    %332 = vector.broadcast %330 : vector<16x1xf32> to vector<16x16xf32>
    %333 = vector.broadcast %331 : vector<1x16xf32> to vector<16x16xf32>
    %334 = arith.addf %332, %333 : vector<16x16xf32>
    %c9 = arith.constant 9 : index
    %c0_140 = arith.constant 0 : index
    %c0_141 = arith.constant 0 : index
    %335 = vector.load %arg2[%c9, %c0_140, %c0_141] : memref<12x16x16xf32, #tpu.memory_space<vmem>>, vector<1x16x16xf32>
    %336 = vector.shape_cast %335 : vector<1x16x16xf32> to vector<16x16xf32>
    %337 = arith.addf %334, %336 : vector<16x16xf32>
    %cst_142 = arith.constant 0.000000e+00 : f32
    %338 = vector.broadcast %cst_142 : f32 to vector<16x16xf32>
    %339 = arith.cmpf ogt, %337, %338 : vector<16x16xf32>
    %cst_143 = arith.constant 2.000000e-01 : f32
    %340 = vector.broadcast %cst_143 : f32 to vector<16x16xf32>
    %341 = arith.mulf %340, %337 : vector<16x16xf32>
    %342 = arith.select %339, %337, %341 : vector<16x16xi1>, vector<16x16xf32>
    %cst_144 = arith.constant -1.000000e+30 : f32
    %343 = vector.broadcast %cst_144 : f32 to vector<16x16xf32>
    %344 = arith.select %2, %342, %343 : vector<16x16xi1>, vector<16x16xf32>
    %cst_145 = arith.constant dense<0xFF800000> : vector<16xf32>
    %345 = vector.multi_reduction <maximumf>, %344, %cst_145 [1] : vector<16x16xf32> to vector<16xf32>
    %346 = vector.shape_cast %345 : vector<16xf32> to vector<16x1xf32>
    %347 = vector.broadcast %346 : vector<16x1xf32> to vector<16x16xf32>
    %348 = arith.subf %344, %347 : vector<16x16xf32>
    %349 = math.exp %348 : vector<16x16xf32>
    %cst_146 = arith.constant dense<0.000000e+00> : vector<16xf32>
    %350 = vector.multi_reduction <add>, %349, %cst_146 [1] : vector<16x16xf32> to vector<16xf32>
    %351 = vector.shape_cast %350 : vector<16xf32> to vector<16x1xf32>
    %352 = arith.truncf %349 : vector<16x16xf32> to vector<16x16xbf16>
    %cst_147 = arith.constant dense<0.000000e+00> : vector<16x64xf32>
    %353 = tpu.matmul %352, %291, %cst_147 {dimension_numbers = #tpu.dot_dimension_numbers<[1], [0], [0], [1], [0, 0, 1, 1], [], []>} : vector<16x16xbf16>, vector<16x64xbf16>, vector<16x64xf32> -> vector<16x64xf32>
    %354 = tpu.reciprocal %351 {approx = true} : vector<16x1xf32> -> vector<16x1xf32>
    %c1_148 = arith.constant 1 : index
    %c0_149 = arith.constant 0 : index
    %355 = vector.load %arg8[%c1_148, %c0_149] : memref<4x64xf32, #tpu.memory_space<vmem>>, vector<1x64xf32>
    %356 = vector.broadcast %354 : vector<16x1xf32> to vector<16x64xf32>
    %357 = vector.broadcast %355 : vector<1x64xf32> to vector<16x64xf32>
    %358 = arith.mulf %356, %357 : vector<16x64xf32>
    %359 = arith.mulf %353, %358 : vector<16x64xf32>
    %360 = arith.addf %329, %359 : vector<16x64xf32>
    %361 = vector.extract_strided_slice %294 {offsets = [0, 2], sizes = [16, 1], strides = [1, 1]} : vector<16x4xf32> to vector<16x1xf32>
    %362 = vector.extract_strided_slice %297 {offsets = [2, 0], sizes = [1, 16], strides = [1, 1]} : vector<4x16xf32> to vector<1x16xf32>
    %363 = vector.broadcast %361 : vector<16x1xf32> to vector<16x16xf32>
    %364 = vector.broadcast %362 : vector<1x16xf32> to vector<16x16xf32>
    %365 = arith.addf %363, %364 : vector<16x16xf32>
    %c10 = arith.constant 10 : index
    %c0_150 = arith.constant 0 : index
    %c0_151 = arith.constant 0 : index
    %366 = vector.load %arg2[%c10, %c0_150, %c0_151] : memref<12x16x16xf32, #tpu.memory_space<vmem>>, vector<1x16x16xf32>
    %367 = vector.shape_cast %366 : vector<1x16x16xf32> to vector<16x16xf32>
    %368 = arith.addf %365, %367 : vector<16x16xf32>
    %cst_152 = arith.constant 0.000000e+00 : f32
    %369 = vector.broadcast %cst_152 : f32 to vector<16x16xf32>
    %370 = arith.cmpf ogt, %368, %369 : vector<16x16xf32>
    %cst_153 = arith.constant 2.000000e-01 : f32
    %371 = vector.broadcast %cst_153 : f32 to vector<16x16xf32>
    %372 = arith.mulf %371, %368 : vector<16x16xf32>
    %373 = arith.select %370, %368, %372 : vector<16x16xi1>, vector<16x16xf32>
    %cst_154 = arith.constant -1.000000e+30 : f32
    %374 = vector.broadcast %cst_154 : f32 to vector<16x16xf32>
    %375 = arith.select %2, %373, %374 : vector<16x16xi1>, vector<16x16xf32>
    %cst_155 = arith.constant dense<0xFF800000> : vector<16xf32>
    %376 = vector.multi_reduction <maximumf>, %375, %cst_155 [1] : vector<16x16xf32> to vector<16xf32>
    %377 = vector.shape_cast %376 : vector<16xf32> to vector<16x1xf32>
    %378 = vector.broadcast %377 : vector<16x1xf32> to vector<16x16xf32>
    %379 = arith.subf %375, %378 : vector<16x16xf32>
    %380 = math.exp %379 : vector<16x16xf32>
    %cst_156 = arith.constant dense<0.000000e+00> : vector<16xf32>
    %381 = vector.multi_reduction <add>, %380, %cst_156 [1] : vector<16x16xf32> to vector<16xf32>
    %382 = vector.shape_cast %381 : vector<16xf32> to vector<16x1xf32>
    %383 = arith.truncf %380 : vector<16x16xf32> to vector<16x16xbf16>
    %cst_157 = arith.constant dense<0.000000e+00> : vector<16x64xf32>
    %384 = tpu.matmul %383, %291, %cst_157 {dimension_numbers = #tpu.dot_dimension_numbers<[1], [0], [0], [1], [0, 0, 1, 1], [], []>} : vector<16x16xbf16>, vector<16x64xbf16>, vector<16x64xf32> -> vector<16x64xf32>
    %385 = tpu.reciprocal %382 {approx = true} : vector<16x1xf32> -> vector<16x1xf32>
    %c2_158 = arith.constant 2 : index
    %c0_159 = arith.constant 0 : index
    %386 = vector.load %arg8[%c2_158, %c0_159] : memref<4x64xf32, #tpu.memory_space<vmem>>, vector<1x64xf32>
    %387 = vector.broadcast %385 : vector<16x1xf32> to vector<16x64xf32>
    %388 = vector.broadcast %386 : vector<1x64xf32> to vector<16x64xf32>
    %389 = arith.mulf %387, %388 : vector<16x64xf32>
    %390 = arith.mulf %384, %389 : vector<16x64xf32>
    %391 = arith.addf %360, %390 : vector<16x64xf32>
    %392 = vector.extract_strided_slice %294 {offsets = [0, 3], sizes = [16, 1], strides = [1, 1]} : vector<16x4xf32> to vector<16x1xf32>
    %393 = vector.extract_strided_slice %297 {offsets = [3, 0], sizes = [1, 16], strides = [1, 1]} : vector<4x16xf32> to vector<1x16xf32>
    %394 = vector.broadcast %392 : vector<16x1xf32> to vector<16x16xf32>
    %395 = vector.broadcast %393 : vector<1x16xf32> to vector<16x16xf32>
    %396 = arith.addf %394, %395 : vector<16x16xf32>
    %c11 = arith.constant 11 : index
    %c0_160 = arith.constant 0 : index
    %c0_161 = arith.constant 0 : index
    %397 = vector.load %arg2[%c11, %c0_160, %c0_161] : memref<12x16x16xf32, #tpu.memory_space<vmem>>, vector<1x16x16xf32>
    %398 = vector.shape_cast %397 : vector<1x16x16xf32> to vector<16x16xf32>
    %399 = arith.addf %396, %398 : vector<16x16xf32>
    %cst_162 = arith.constant 0.000000e+00 : f32
    %400 = vector.broadcast %cst_162 : f32 to vector<16x16xf32>
    %401 = arith.cmpf ogt, %399, %400 : vector<16x16xf32>
    %cst_163 = arith.constant 2.000000e-01 : f32
    %402 = vector.broadcast %cst_163 : f32 to vector<16x16xf32>
    %403 = arith.mulf %402, %399 : vector<16x16xf32>
    %404 = arith.select %401, %399, %403 : vector<16x16xi1>, vector<16x16xf32>
    %cst_164 = arith.constant -1.000000e+30 : f32
    %405 = vector.broadcast %cst_164 : f32 to vector<16x16xf32>
    %406 = arith.select %2, %404, %405 : vector<16x16xi1>, vector<16x16xf32>
    %cst_165 = arith.constant dense<0xFF800000> : vector<16xf32>
    %407 = vector.multi_reduction <maximumf>, %406, %cst_165 [1] : vector<16x16xf32> to vector<16xf32>
    %408 = vector.shape_cast %407 : vector<16xf32> to vector<16x1xf32>
    %409 = vector.broadcast %408 : vector<16x1xf32> to vector<16x16xf32>
    %410 = arith.subf %406, %409 : vector<16x16xf32>
    %411 = math.exp %410 : vector<16x16xf32>
    %cst_166 = arith.constant dense<0.000000e+00> : vector<16xf32>
    %412 = vector.multi_reduction <add>, %411, %cst_166 [1] : vector<16x16xf32> to vector<16xf32>
    %413 = vector.shape_cast %412 : vector<16xf32> to vector<16x1xf32>
    %414 = arith.truncf %411 : vector<16x16xf32> to vector<16x16xbf16>
    %cst_167 = arith.constant dense<0.000000e+00> : vector<16x64xf32>
    %415 = tpu.matmul %414, %291, %cst_167 {dimension_numbers = #tpu.dot_dimension_numbers<[1], [0], [0], [1], [0, 0, 1, 1], [], []>} : vector<16x16xbf16>, vector<16x64xbf16>, vector<16x64xf32> -> vector<16x64xf32>
    %416 = tpu.reciprocal %413 {approx = true} : vector<16x1xf32> -> vector<16x1xf32>
    %c3_168 = arith.constant 3 : index
    %c0_169 = arith.constant 0 : index
    %417 = vector.load %arg8[%c3_168, %c0_169] : memref<4x64xf32, #tpu.memory_space<vmem>>, vector<1x64xf32>
    %418 = vector.broadcast %416 : vector<16x1xf32> to vector<16x64xf32>
    %419 = vector.broadcast %417 : vector<1x64xf32> to vector<16x64xf32>
    %420 = arith.mulf %418, %419 : vector<16x64xf32>
    %421 = arith.mulf %415, %420 : vector<16x64xf32>
    %422 = arith.addf %391, %421 : vector<16x64xf32>
    %c2_170 = arith.constant 2 : index
    %c0_171 = arith.constant 0 : index
    %c0_172 = arith.constant 0 : index
    %423 = vector.load %arg7[%c2_170, %c0_171, %c0_172] : memref<3x1x64xf32, #tpu.memory_space<vmem>>, vector<1x1x64xf32>
    %424 = vector.shape_cast %423 : vector<1x1x64xf32> to vector<1x64xf32>
    %425 = vector.broadcast %424 : vector<1x64xf32> to vector<16x64xf32>
    %426 = arith.addf %422, %425 : vector<16x64xf32>
    %cst_173 = arith.constant 0.000000e+00 : f32
    %427 = vector.broadcast %cst_173 : f32 to vector<16x64xf32>
    %428 = arith.maximumf %426, %427 : vector<16x64xf32>
    %429 = arith.truncf %428 : vector<16x64xf32> to vector<16x64xbf16>
    %c0_174 = arith.constant 0 : index
    %c0_175 = arith.constant 0 : index
    %430 = vector.load %arg9[%c0_174, %c0_175] : memref<64x4xbf16, #tpu.memory_space<vmem>>, vector<64x4xbf16>
    %cst_176 = arith.constant dense<0.000000e+00> : vector<16x4xf32>
    %431 = tpu.matmul %429, %430, %cst_176 {dimension_numbers = #tpu.dot_dimension_numbers<[1], [0], [0], [1], [0, 0, 1, 1], [], []>} : vector<16x64xbf16>, vector<64x4xbf16>, vector<16x4xf32> -> vector<16x4xf32>
    %c0_177 = arith.constant 0 : index
    %c0_178 = arith.constant 0 : index
    %432 = vector.load %arg10[%c0_177, %c0_178] : memref<1x4xf32, #tpu.memory_space<vmem>>, vector<1x4xf32>
    %433 = vector.broadcast %432 : vector<1x4xf32> to vector<16x4xf32>
    %434 = arith.addf %431, %433 : vector<16x4xf32>
    %cst_179 = arith.constant 0.000000e+00 : f32
    %435 = vector.broadcast %cst_179 : f32 to vector<16x4xf32>
    %436 = arith.maximumf %434, %435 : vector<16x4xf32>
    %437 = vector.extract_strided_slice %436 {offsets = [0, 0], sizes = [16, 1], strides = [1, 1]} : vector<16x4xf32> to vector<16x1xf32>
    %c0_180 = arith.constant 0 : index
    %c0_181 = arith.constant 0 : index
    %c0_182 = arith.constant 0 : index
    %438 = vector.load %arg11[%c0_180, %c0_181, %c0_182] : memref<4x16x8xf32, #tpu.memory_space<vmem>>, vector<1x16x8xf32>
    %439 = vector.shape_cast %438 : vector<1x16x8xf32> to vector<16x8xf32>
    %440 = vector.broadcast %437 : vector<16x1xf32> to vector<16x8xf32>
    %441 = arith.mulf %440, %439 : vector<16x8xf32>
    %442 = vector.extract_strided_slice %436 {offsets = [0, 1], sizes = [16, 1], strides = [1, 1]} : vector<16x4xf32> to vector<16x1xf32>
    %c1_183 = arith.constant 1 : index
    %c0_184 = arith.constant 0 : index
    %c0_185 = arith.constant 0 : index
    %443 = vector.load %arg11[%c1_183, %c0_184, %c0_185] : memref<4x16x8xf32, #tpu.memory_space<vmem>>, vector<1x16x8xf32>
    %444 = vector.shape_cast %443 : vector<1x16x8xf32> to vector<16x8xf32>
    %445 = vector.broadcast %442 : vector<16x1xf32> to vector<16x8xf32>
    %446 = arith.mulf %445, %444 : vector<16x8xf32>
    %447 = arith.addf %441, %446 : vector<16x8xf32>
    %448 = vector.extract_strided_slice %436 {offsets = [0, 2], sizes = [16, 1], strides = [1, 1]} : vector<16x4xf32> to vector<16x1xf32>
    %c2_186 = arith.constant 2 : index
    %c0_187 = arith.constant 0 : index
    %c0_188 = arith.constant 0 : index
    %449 = vector.load %arg11[%c2_186, %c0_187, %c0_188] : memref<4x16x8xf32, #tpu.memory_space<vmem>>, vector<1x16x8xf32>
    %450 = vector.shape_cast %449 : vector<1x16x8xf32> to vector<16x8xf32>
    %451 = vector.broadcast %448 : vector<16x1xf32> to vector<16x8xf32>
    %452 = arith.mulf %451, %450 : vector<16x8xf32>
    %453 = arith.addf %447, %452 : vector<16x8xf32>
    %454 = vector.extract_strided_slice %436 {offsets = [0, 3], sizes = [16, 1], strides = [1, 1]} : vector<16x4xf32> to vector<16x1xf32>
    %c3_189 = arith.constant 3 : index
    %c0_190 = arith.constant 0 : index
    %c0_191 = arith.constant 0 : index
    %455 = vector.load %arg11[%c3_189, %c0_190, %c0_191] : memref<4x16x8xf32, #tpu.memory_space<vmem>>, vector<1x16x8xf32>
    %456 = vector.shape_cast %455 : vector<1x16x8xf32> to vector<16x8xf32>
    %457 = vector.broadcast %454 : vector<16x1xf32> to vector<16x8xf32>
    %458 = arith.mulf %457, %456 : vector<16x8xf32>
    %459 = arith.addf %453, %458 : vector<16x8xf32>
    %c0_192 = arith.constant 0 : index
    %c0_193 = arith.constant 0 : index
    %460 = vector.load %arg13[%c0_192, %c0_193] : memref<2x16xf32, #tpu.memory_space<vmem>>, vector<2x16xf32>
    %cst_194 = arith.constant dense<0.000000e+00> : vector<2x8xf32>
    %461 = tpu.matmul %460, %459, %cst_194 {dimension_numbers = #tpu.dot_dimension_numbers<[1], [0], [0], [1], [0, 0, 1, 1], [], []>} : vector<2x16xf32>, vector<16x8xf32>, vector<2x8xf32> -> vector<2x8xf32>
    %c0_195 = arith.constant 0 : index
    %c0_196 = arith.constant 0 : index
    %462 = vector.load %arg12[%c0_195, %c0_196] : memref<1x8xf32, #tpu.memory_space<vmem>>, vector<1x8xf32>
    %463 = vector.broadcast %462 : vector<1x8xf32> to vector<2x8xf32>
    %464 = arith.addf %461, %463 : vector<2x8xf32>
    %c0_197 = arith.constant 0 : index
    %c0_198 = arith.constant 0 : index
    %465 = vector.load %arg14[%c0_197, %c0_198] : memref<2x8xf32, #tpu.memory_space<vmem>>, vector<2x8xf32>
    tpu.vector_store %arg14[%c0_197, %c0_198], %464 {strides = array<i32>} : memref<2x8xf32, #tpu.memory_space<vmem>>, vector<2x8xf32>,
    return
  }
}

</mosaic_0001>

<llo_original>
// kernel: tpu_custom_call.1
$region0: #{tpu_custom_call.1}
  #allocation0 [shape = 'u32[]', space=smem, size = 0x4, offset = 0x4, fixed_abs, tag = 'smem constant byte address 0x4 - core index']
  #allocation1 [shape = 'u32[144,128]{1,0:T(1,128)}', space=vmem, size = 0x12000, scoped, tag = 'internal scratch']
  %s0 = inlined_call_operand.vmem [shape: f32[16,8], index: 0, kind: input, shape index: {}]
  %s1 = inlined_call_operand.hbm [shape: f32[16,16], index: 1, kind: input, shape index: {}]
  %s2 = inlined_call_operand.vmem [shape: f32[12,16,16], index: 2, kind: input, shape index: {}]
  %s3 = inlined_call_operand.hbm [shape: bf16[8,64], index: 3, kind: input, shape index: {}]
  %s4 = inlined_call_operand.vmem [shape: bf16[2,64,64], index: 4, kind: input, shape index: {}]
  %s5 = inlined_call_operand.hbm [shape: bf16[3,4,64], index: 5, kind: input, shape index: {}]
  %s6 = inlined_call_operand.vmem [shape: bf16[3,64,4], index: 6, kind: input, shape index: {}]
  %s7 = inlined_call_operand.hbm [shape: f32[3,1,64], index: 7, kind: input, shape index: {}]
  %s8 = inlined_call_operand.hbm [shape: f32[4,64], index: 8, kind: input, shape index: {}]
  %s9 = inlined_call_operand.vmem [shape: bf16[64,4], index: 9, kind: input, shape index: {}]
  %s10 = inlined_call_operand.vmem [shape: f32[1,4], index: 10, kind: input, shape index: {}]
  %s11 = inlined_call_operand.vmem [shape: f32[4,16,8], index: 11, kind: input, shape index: {}]
  %s12 = inlined_call_operand.vmem [shape: f32[1,8], index: 12, kind: input, shape index: {}]
  %s13 = inlined_call_operand.vmem [shape: f32[2,16], index: 13, kind: input, shape index: {}]
  %s14 = inlined_call_operand.hbm [shape: f32[2,8], index: 14, kind: output, shape index: {}]
  %s15 = sld [smem:[#allocation0]]
  $region86: #{tpu_custom_call.1} parent=0
    _
  %s17 = ssub.s32 1, %s15
  %s18 = scalar_select 0, %s17, %s15
  $region1: #{tpu_custom_call.1} parent=0
    #allocation2 [shape = 'u8[8192]{0}', space=vmem, size = 0x2000, scoped, tag = 'input window, operand 1, single buffered']
    #allocation3 [shape = 's32[1]{0}', space=sflag, size = 0x4, scoped, tag = 'scoped memory for tpu_custom_call.1']
    #allocation4 [shape = 's32[1]{0}', space=sflag, size = 0x4, scoped, tag = 'scoped memory for tpu_custom_call.1']
    #allocation5 [shape = 'u8[2048]{0}', space=vmem, size = 0x800, scoped, tag = 'input window, operand 3, single buffered']
    #allocation6 [shape = 's32[1]{0}', space=sflag, size = 0x4, scoped, tag = 'scoped memory for tpu_custom_call.1']
    #allocation7 [shape = 'u8[3072]{0}', space=vmem, size = 0xc00, scoped, tag = 'input window, operand 5, single buffered']
    #allocation8 [shape = 'u8[1536]{0}', space=vmem, size = 0x800, scoped, tag = 'input window, operand 7, single buffered']
    #allocation9 [shape = 's32[1]{0}', space=sflag, size = 0x4, scoped, tag = 'scoped memory for tpu_custom_call.1']
    #allocation10 [shape = 'u8[2048]{0}', space=vmem, size = 0x800, scoped, tag = 'input window, operand 8, single buffered']
    #allocation11 [shape = 'u8[1024]{0}', space=vmem, size = 0x400, scoped, tag = 'output window, operand 0, single buffered']
    %19 = vsyncpa [#allocation3], 0
    %20 = vsyncpa [#allocation6], 0
    %21 = vsyncpa [#allocation9], 0
    %22 = vsyncpa [#allocation4], 0
    // Predicated region
    $region2: #{tpu_custom_call.1} parent=1 // pred_check
      _
    $region3: #{tpu_custom_call.1} parent=1 // pred_check_branch
      %24 = sbr.rel (0) target = $region5
    $region4: #{tpu_custom_call.1} parent=1 // pred_region
      _
    $region5: #{tpu_custom_call.1} parent=1 // pred_fallthru
      _
    // Predicated region
    $region6: #{tpu_custom_call.1} parent=1 // pred_check
      _
    $region7: #{tpu_custom_call.1} parent=1 // pred_check_branch
      %26 = sbr.rel (0) target = $region9
    $region8: #{tpu_custom_call.1} parent=1 // pred_region
      %s28 = ssub.s32 256, 256
      %29 = vsyncadd [#allocation3], %s28
      %s30 = sshll.u32 [#allocation2], 4
      %s31 = int_to_ptr.vmem [resolvable:$true] %s30
      %36 = dma.hbm_to_vmem [thread:$0]  %s1, 256, %s31, [#allocation3], 128, 128, 8
    $region9: #{tpu_custom_call.1} parent=1 // pred_fallthru
      _
    // Predicated region
    $region10: #{tpu_custom_call.1} parent=1 // pred_check
      _
    $region11: #{tpu_custom_call.1} parent=1 // pred_check_branch
      %38 = sbr.rel (0) target = $region13
    $region12: #{tpu_custom_call.1} parent=1 // pred_region
      _
    $region13: #{tpu_custom_call.1} parent=1 // pred_fallthru
      _
    // Predicated region
    $region14: #{tpu_custom_call.1} parent=1 // pred_check
      _
    $region15: #{tpu_custom_call.1} parent=1 // pred_check_branch
      %40 = sbr.rel (0) target = $region17
    $region16: #{tpu_custom_call.1} parent=1 // pred_region
      %s42 = ssub.s32 64, 64
      %43 = vsyncadd [#allocation6], %s42
      %s45 = sshll.u32 [#allocation5], 4
      %s46 = int_to_ptr.vmem [resolvable:$true] %s45
      %48 = dma.hbm_to_vmem [thread:$0]  %s3, 64, %s46, [#allocation6]
    $region17: #{tpu_custom_call.1} parent=1 // pred_fallthru
      _
    // Predicated region
    $region18: #{tpu_custom_call.1} parent=1 // pred_check
      _
    $region19: #{tpu_custom_call.1} parent=1 // pred_check_branch
      %50 = sbr.rel (0) target = $region21
    $region20: #{tpu_custom_call.1} parent=1 // pred_region
      _
    $region21: #{tpu_custom_call.1} parent=1 // pred_fallthru
      _
    // Predicated region
    $region22: #{tpu_custom_call.1} parent=1 // pred_check
      _
    $region23: #{tpu_custom_call.1} parent=1 // pred_check_branch
      %52 = sbr.rel (0) target = $region25
    $region24: #{tpu_custom_call.1} parent=1 // pred_region
      %s54 = ssub.s32 96, 96
      %55 = vsyncadd [#allocation6], %s54
      %s56 = sshll.u32 [#allocation7], 4
      %s57 = int_to_ptr.vmem [resolvable:$true] %s56
      %62 = dma.hbm_to_vmem [thread:$0]  %s5, 96, %s57, [#allocation6], 32, 32, 2
    $region25: #{tpu_custom_call.1} parent=1 // pred_fallthru
      _
    // Predicated region
    $region26: #{tpu_custom_call.1} parent=1 // pred_check
      _
    $region27: #{tpu_custom_call.1} parent=1 // pred_check_branch
      %64 = sbr.rel (0) target = $region29
    $region28: #{tpu_custom_call.1} parent=1 // pred_region
      _
    $region29: #{tpu_custom_call.1} parent=1 // pred_fallthru
      _
    // Predicated region
    $region30: #{tpu_custom_call.1} parent=1 // pred_check
      _
    $region31: #{tpu_custom_call.1} parent=1 // pred_check_branch
      %66 = sbr.rel (0) target = $region33
    $region32: #{tpu_custom_call.1} parent=1 // pred_region
      %s68 = ssub.s32 48, 48
      %69 = vsyncadd [#allocation9], %s68
      %s70 = sshll.u32 [#allocation8], 4
      %s71 = int_to_ptr.vmem [resolvable:$true] %s70
      %76 = dma.hbm_to_vmem [thread:$0]  %s7, 48, %s71, [#allocation9], 16, 16, 1
    $region33: #{tpu_custom_call.1} parent=1 // pred_fallthru
      _
    // Predicated region
    $region34: #{tpu_custom_call.1} parent=1 // pred_check
      _
    $region35: #{tpu_custom_call.1} parent=1 // pred_check_branch
      %78 = sbr.rel (0) target = $region37
    $region36: #{tpu_custom_call.1} parent=1 // pred_region
      %s80 = ssub.s32 64, 64
      %81 = vsyncadd [#allocation9], %s80
      %s83 = sshll.u32 [#allocation10], 4
      %s84 = int_to_ptr.vmem [resolvable:$true] %s83
      %86 = dma.hbm_to_vmem [thread:$0]  %s8, 64, %s84, [#allocation9]
    $region37: #{tpu_custom_call.1} parent=1 // pred_fallthru
      _
    // Predicated region
    $region38: #{tpu_custom_call.1} parent=1 // pred_check
      _
    $region39: #{tpu_custom_call.1} parent=1 // pred_check_branch
      %88 = sbr.rel (0) target = $region41
    $region40: #{tpu_custom_call.1} parent=1 // pred_region
      _
    $region41: #{tpu_custom_call.1} parent=1 // pred_fallthru
      _
    // Predicated region
    $region42: #{tpu_custom_call.1} parent=1 // pred_check
      _
    $region43: #{tpu_custom_call.1} parent=1 // pred_check_branch
      %90 = sbr.rel (0) target = $region45
    $region44: #{tpu_custom_call.1} parent=1 // pred_region
      _
    $region45: #{tpu_custom_call.1} parent=1 // pred_fallthru
      _
    // Predicated region
    $region46: #{tpu_custom_call.1} parent=1 // pred_check
      _
    $region47: #{tpu_custom_call.1} parent=1 // pred_check_branch
      %92 = sbr.rel (0) target = $region49
    $region48: #{tpu_custom_call.1} parent=1 // pred_region
      _
    $region49: #{tpu_custom_call.1} parent=1 // pred_fallthru
      _
    // Predicated region
    $region50: #{tpu_custom_call.1} parent=1 // pred_check
      _
    $region51: #{tpu_custom_call.1} parent=1 // pred_check_branch
      %94 = sbr.rel (0) target = $region53
    $region52: #{tpu_custom_call.1} parent=1 // pred_region
      _
    $region53: #{tpu_custom_call.1} parent=1 // pred_fallthru
      _
    // Predicated region
    $region54: #{tpu_custom_call.1} parent=1 // pred_check
      _
    $region55: #{tpu_custom_call.1} parent=1 // pred_check_branch
      %96 = sbr.rel (0) target = $region57
    $region56: #{tpu_custom_call.1} parent=1 // pred_region
      _
    $region57: #{tpu_custom_call.1} parent=1 // pred_fallthru
      _
    // Predicated region
    $region58: #{tpu_custom_call.1} parent=1 // pred_check
      _
    $region59: #{tpu_custom_call.1} parent=1 // pred_check_branch
      %98 = sbr.rel (0) target = $region61
    $region60: #{tpu_custom_call.1} parent=1 // pred_region
      %99 = dma.done [#allocation3], 256
    $region61: #{tpu_custom_call.1} parent=1 // pred_fallthru
      _
    // Predicated region
    $region62: #{tpu_custom_call.1} parent=1 // pred_check
      _
    $region63: #{tpu_custom_call.1} parent=1 // pred_check_branch
      %101 = sbr.rel (0) target = $region65
    $region64: #{tpu_custom_call.1} parent=1 // pred_region
      %102 = dma.done [#allocation6], 64
    $region65: #{tpu_custom_call.1} parent=1 // pred_fallthru
      _
    // Predicated region
    $region66: #{tpu_custom_call.1} parent=1 // pred_check
      _
    $region67: #{tpu_custom_call.1} parent=1 // pred_check_branch
      %104 = sbr.rel (0) target = $region69
    $region68: #{tpu_custom_call.1} parent=1 // pred_region
      %105 = dma.done [#allocation6], 96
    $region69: #{tpu_custom_call.1} parent=1 // pred_fallthru
      _
    // Predicated region
    $region70: #{tpu_custom_call.1} parent=1 // pred_check
      _
    $region71: #{tpu_custom_call.1} parent=1 // pred_check_branch
      %107 = sbr.rel (0) target = $region73
    $region72: #{tpu_custom_call.1} parent=1 // pred_region
      %108 = dma.done [#allocation9], 48
    $region73: #{tpu_custom_call.1} parent=1 // pred_fallthru
      _
    // Predicated region
    $region74: #{tpu_custom_call.1} parent=1 // pred_check
      _
    $region75: #{tpu_custom_call.1} parent=1 // pred_check_branch
      %110 = sbr.rel (0) target = $region77
    $region76: #{tpu_custom_call.1} parent=1 // pred_region
      %111 = dma.done [#allocation9], 64
    $region77: #{tpu_custom_call.1} parent=1 // pred_fallthru
      _
    %v113 = vld [vmem:[#allocation2] sm:$0xff]
    %v114 = vld [vmem:[#allocation2 + $0x8] sm:$0xff]
    %vm115 = vcmp.gt.f32.partialorder %v113, 0.0
    %vm116 = vcmp.gt.f32.partialorder %v114, 0.0
    %v117 = vld [vmem:[%s0] sm:$0xff]
    %v118 = vld [vmem:[%s0 + $0x8] sm:$0xff]
    %v119 = vld [vmem:[#allocation5] sm:$0xf]
    %v120 = vpack.c.bf16 %v118, %v117
    %vm121 = vcmask 64512
    %v123 = vsel %vm121, %v120, 0
    %vm125 = vcmask 1043456
    %v127 = vsel %vm125, %v119, 0
    %129 = vmatprep.subr.bf16.mxu0 0
    %130 = vmatpush1.bf16.msra.mxu0 %v127
    %131 = vmatprep.subr.bf16.mxu0 0
    %132 = vmatpush1.bf16.msra.mxu0 0
    %133 = vmatprep.subr.bf16.mxu0 0
    %134 = vmatpush1.bf16.msra.mxu0 0
    %135 = vmatprep.subr.bf16.mxu0 0
    %136 = vmatpush1.bf16.msra.mxu0 0
    %137 = vmatprep.subr.bf16.mxu0 0
    %138 = vmatpush1.bf16.msra.mxu0 0
    %139 = vmatprep.subr.bf16.mxu0 0
    %140 = vmatpush1.bf16.msra.mxu0 0
    %141 = vmatprep.subr.bf16.mxu0 0
    %142 = vmatpush1.bf16.msra.mxu0 0
    %143 = vmatprep.subr.bf16.mxu0 0
    %144 = vmatpush1.bf16.msra.mxu0 0
    %145 = vmatprep.subr.bf16.mxu0 0
    %146 = vmatpush1.bf16.msra.mxu0 0
    %147 = vmatprep.subr.bf16.mxu0 0
    %148 = vmatpush1.bf16.msra.mxu0 0
    %149 = vmatprep.subr.bf16.mxu0 0
    %150 = vmatpush1.bf16.msra.mxu0 0
    %151 = vmatprep.subr.bf16.mxu0 0
    %152 = vmatpush1.bf16.msra.mxu0 0
    %153 = vmatprep.subr.bf16.mxu0 0
    %154 = vmatpush1.bf16.msra.mxu0 0
    %155 = vmatprep.subr.bf16.mxu0 0
    %156 = vmatpush1.bf16.msra.mxu0 0
    %157 = vmatprep.subr.bf16.mxu0 0
    %158 = vmatpush1.bf16.msra.mxu0 0
    %159 = vmatprep.subr.bf16.mxu0 0
    %160 = vmatpush1.bf16.msra.mxu0 0
    %161 = vmatprep.mubr.bf16.mxu0 0
    %162 = vmatmul.mubr.bf16.gmra.mrb[0].mxu0 %v123
    %v163 = vpop.f32.mrb[0].mxu0
    %v164 = vadd.f32 0.0, %v163
    %v165 = vpop.f32.mrb[0].mxu0
    %v166 = vpop.f32.mrb[0].mxu0
    %v167 = vadd.f32 0.0, %v166
    %v168 = vpop.f32.mrb[0].mxu0
    %169 = vdwg.mxu0
    %v170 = vpack.c.bf16 %v167, %v164
    %v171 = vld [vmem:[%s6] sm:$0xf]
    %v172 = vld [vmem:[%s6 + $0x4] sm:$0xf]
    %v173 = vld [vmem:[%s6 + $0x8] sm:$0xf]
    %v174 = vld [vmem:[%s6 + $0xc] sm:$0xf]
    %v175 = vld [vmem:[%s6 + $0x10] sm:$0xf]
    %v176 = vld [vmem:[%s6 + $0x14] sm:$0xf]
    %v177 = vld [vmem:[%s6 + $0x18] sm:$0xf]
    %v178 = vld [vmem:[%s6 + $0x1c] sm:$0xf]
    %v187 = vunpack.c.l.b16 %v171
    %v188 = vunpack.c.l.b16 %v172
    %v189 = vunpack.c.l.b16 %v173
    %v190 = vunpack.c.l.b16 %v174
    %v191 = vunpack.c.l.b16 %v175
    %v192 = vunpack.c.l.b16 %v176
    %v193 = vunpack.c.l.b16 %v177
    %v194 = vunpack.c.l.b16 %v178
    %v195 = vpack.c.b16 %v188, %v187
    %v196 = vpack.c.b16 %v190, %v189
    %v197 = vpack.c.b16 %v192, %v191
    %v198 = vpack.c.b16 %v194, %v193
    %vm203 = vcmask 523264
    %v205 = vsel %vm203, %v170, 0
    %207 = vmatprep.subr.bf16.mxu0 0
    %208 = vmatpush1.bf16.msra.mxu0 %v195
    %209 = vmatprep.subr.bf16.mxu0 0
    %210 = vmatpush1.bf16.msra.mxu0 %v196
    %211 = vmatprep.subr.bf16.mxu0 0
    %212 = vmatpush1.bf16.msra.mxu0 %v197
    %213 = vmatprep.subr.bf16.mxu0 0
    %214 = vmatpush1.bf16.msra.mxu0 %v198
    %215 = vmatprep.subr.bf16.mxu0 0
    %216 = vmatpush1.bf16.msra.mxu0 0
    %217 = vmatprep.subr.bf16.mxu0 0
    %218 = vmatpush1.bf16.msra.mxu0 0
    %219 = vmatprep.subr.bf16.mxu0 0
    %220 = vmatpush1.bf16.msra.mxu0 0
    %221 = vmatprep.subr.bf16.mxu0 0
    %222 = vmatpush1.bf16.msra.mxu0 0
    %223 = vmatprep.subr.bf16.mxu0 0
    %224 = vmatpush1.bf16.msra.mxu0 0
    %225 = vmatprep.subr.bf16.mxu0 0
    %226 = vmatpush1.bf16.msra.mxu0 0
    %227 = vmatprep.subr.bf16.mxu0 0
    %228 = vmatpush1.bf16.msra.mxu0 0
    %229 = vmatprep.subr.bf16.mxu0 0
    %230 = vmatpush1.bf16.msra.mxu0 0
    %231 = vmatprep.subr.bf16.mxu0 0
    %232 = vmatpush1.bf16.msra.mxu0 0
    %233 = vmatprep.subr.bf16.mxu0 0
    %234 = vmatpush1.bf16.msra.mxu0 0
    %235 = vmatprep.subr.bf16.mxu0 0
    %236 = vmatpush1.bf16.msra.mxu0 0
    %237 = vmatprep.subr.bf16.mxu0 0
    %238 = vmatpush1.bf16.msra.mxu0 0
    %239 = vmatprep.mubr.bf16.mxu0 0
    %240 = vmatmul.mubr.bf16.gmra.mrb[0].mxu0 %v205
    %v241 = vpop.f32.mrb[0].mxu0
    %v242 = vadd.f32 0.0, %v241
    %v243 = vpop.f32.mrb[0].mxu0
    %v244 = vpop.f32.mrb[0].mxu0
    %v245 = vadd.f32 0.0, %v244
    %v246 = vpop.f32.mrb[0].mxu0
    %247 = vdwg.mxu0
    %v248 = vld [vmem:[#allocation7] sm:$0x3]
    %v250 = vsel %vm203, %v248, 0
    %252 = vmatprep.subr.bf16.mxu0 0
    %253 = vmatpush1.bf16.xpose.msra.mxu0 %v205
    %254 = vmatprep.subr.bf16.mxu0 0
    %255 = vmatpush1.bf16.xpose.msra.mxu0 0
    %256 = vmatprep.subr.bf16.mxu0 0
    %257 = vmatpush1.bf16.xpose.msra.mxu0 0
    %258 = vmatprep.subr.bf16.mxu0 0
    %259 = vmatpush1.bf16.xpose.msra.mxu0 0
    %260 = vmatprep.subr.bf16.mxu0 0
    %261 = vmatpush1.bf16.xpose.msra.mxu0 0
    %262 = vmatprep.subr.bf16.mxu0 0
    %263 = vmatpush1.bf16.xpose.msra.mxu0 0
    %264 = vmatprep.subr.bf16.mxu0 0
    %265 = vmatpush1.bf16.xpose.msra.mxu0 0
    %266 = vmatprep.subr.bf16.mxu0 0
    %267 = vmatpush1.bf16.xpose.msra.mxu0 0
    %268 = vmatprep.subr.bf16.mxu0 0
    %269 = vmatpush1.bf16.xpose.msra.mxu0 0
    %270 = vmatprep.subr.bf16.mxu0 0
    %271 = vmatpush1.bf16.xpose.msra.mxu0 0
    %272 = vmatprep.subr.bf16.mxu0 0
    %273 = vmatpush1.bf16.xpose.msra.mxu0 0
    %274 = vmatprep.subr.bf16.mxu0 0
    %275 = vmatpush1.bf16.xpose.msra.mxu0 0
    %276 = vmatprep.subr.bf16.mxu0 0
    %277 = vmatpush1.bf16.xpose.msra.mxu0 0
    %278 = vmatprep.subr.bf16.mxu0 0
    %279 = vmatpush1.bf16.xpose.msra.mxu0 0
    %280 = vmatprep.subr.bf16.mxu0 0
    %281 = vmatpush1.bf16.xpose.msra.mxu0 0
    %282 = vmatprep.subr.bf16.mxu0 0
    %283 = vmatpush1.bf16.xpose.msra.mxu0 0
    %284 = vmatprep.mubr.bf16.mxu0 0
    %285 = vmatmul.mubr.bf16.gmra.mrb[0].mxu0 %v250
    %v286 = vpop.f32.mrb[0].mxu0
    %v287 = vadd.f32 0.0, %v286
    %v288 = vpop.f32.mrb[0].mxu0
    %v289 = vpop.f32.mrb[0].mxu0
    %v290 = vpop.f32.mrb[0].mxu0
    %291 = vdwg.mxu0
    %293 = vset.pattern.permute.xlu0 0
    %294 = vperm.xlu0 %293, %v242
    %v295 = vpop.permute.xlu0 %294
    %298 = vset.pattern.permute.xlu0 0
    %299 = vperm.xlu0 %298, %v245
    %v300 = vpop.permute.xlu0 %299
    %v302 = vlaneseq
    %v303 = vshrl.u32 %v302, 7
    %v304 = vsub.s32 0, %v303
    %v305 = vrot.slane %v287, %v304
    %v306 = vadd.f32 %v295, %v305
    %v307 = vadd.f32 %v300, %v305
    %v308 = vld [vmem:[%s2] sm:$0xff]
    %v309 = vld [vmem:[%s2 + $0x8] sm:$0xff]
    %v310 = vadd.f32 %v306, %v308
    %v311 = vadd.f32 %v307, %v309
    %vm312 = vcmp.gt.f32.partialorder %v310, 0.0
    %vm313 = vcmp.gt.f32.partialorder %v311, 0.0
    %v314 = vmul.f32 %v310, 0.2
    %v315 = vmul.f32 %v311, 0.2
    %v316 = vsel %vm312, %v310, %v314
    %v317 = vsel %vm313, %v311, %v315
    %v318 = vsel %vm115, %v316, -1e+30
    %v319 = vsel %vm116, %v317, -1e+30
    %vm320 = vcmask 130048
    %v321 = vsel %vm320, %v318, -inf
    %322 = vmax.xlane.f32.xlu0 %v321
    %v323 = vpop.xlane.xlu0 %322
    %v324 = vsel %vm320, %v319, -inf
    %325 = vmax.xlane.f32.xlu0 %v324
    %v326 = vpop.xlane.xlu0 %325
    %v327 = vsub.f32 %v318, %v323
    %v328 = vsub.f32 %v319, %v326
    %v329 = vmul.f32 %v327, 1.442695
    %v330 = vpow.pop %v329
    %v331 = vmul.f32 %v328, 1.442695
    %v332 = vpow.pop %v331
    %v333 = vsel %vm320, %v330, 0.0
    %334 = vadd.xlane.f32.xlu0 %v333
    %v335 = vpop.xlane.xlu0 %334
    %v336 = vsel %vm320, %v332, 0.0
    %337 = vadd.xlane.f32.xlu0 %v336
    %v338 = vpop.xlane.xlu0 %337
    %v339 = vpack.c.bf16 %v332, %v330
    %v341 = vsel %vm320, %v339, 0
    %343 = vmatprep.subr.bf16.mxu0 0
    %344 = vmatpush1.bf16.msra.mxu0 %v170
    %345 = vmatprep.subr.bf16.mxu0 0
    %346 = vmatpush1.bf16.msra.mxu0 0
    %347 = vmatprep.subr.bf16.mxu0 0
    %348 = vmatpush1.bf16.msra.mxu0 0
    %349 = vmatprep.subr.bf16.mxu0 0
    %350 = vmatpush1.bf16.msra.mxu0 0
    %351 = vmatprep.subr.bf16.mxu0 0
    %352 = vmatpush1.bf16.msra.mxu0 0
    %353 = vmatprep.subr.bf16.mxu0 0
    %354 = vmatpush1.bf16.msra.mxu0 0
    %355 = vmatprep.subr.bf16.mxu0 0
    %356 = vmatpush1.bf16.msra.mxu0 0
    %357 = vmatprep.subr.bf16.mxu0 0
    %358 = vmatpush1.bf16.msra.mxu0 0
    %359 = vmatprep.subr.bf16.mxu0 0
    %360 = vmatpush1.bf16.msra.mxu0 0
    %361 = vmatprep.subr.bf16.mxu0 0
    %362 = vmatpush1.bf16.msra.mxu0 0
    %363 = vmatprep.subr.bf16.mxu0 0
    %364 = vmatpush1.bf16.msra.mxu0 0
    %365 = vmatprep.subr.bf16.mxu0 0
    %366 = vmatpush1.bf16.msra.mxu0 0
    %367 = vmatprep.subr.bf16.mxu0 0
    %368 = vmatpush1.bf16.msra.mxu0 0
    %369 = vmatprep.subr.bf16.mxu0 0
    %370 = vmatpush1.bf16.msra.mxu0 0
    %371 = vmatprep.subr.bf16.mxu0 0
    %372 = vmatpush1.bf16.msra.mxu0 0
    %373 = vmatprep.subr.bf16.mxu0 0
    %374 = vmatpush1.bf16.msra.mxu0 0
    %375 = vmatprep.mubr.bf16.mxu0 0
    %376 = vmatmul.mubr.bf16.gmra.mrb[0].mxu0 %v341
    %v377 = vpop.f32.mrb[0].mxu0
    %v378 = vadd.f32 0.0, %v377
    %v379 = vpop.f32.mrb[0].mxu0
    %v380 = vpop.f32.mrb[0].mxu0
    %v381 = vadd.f32 0.0, %v380
    %v382 = vpop.f32.mrb[0].mxu0
    %383 = vdwg.mxu0
    %v384 = vrcp.pop %v335
    %v385 = vrcp.pop %v338
    %v386 = vld [vmem:[#allocation10] sm:$0x1]
    %v387 = vlaneseq
    %v388 = vshrl.u32 %v387, 7
    %v389 = vsub.s32 0, %v388
    %v390 = vrot.slane %v386, %v389
    %v391 = vmul.f32 %v384, %v390
    %v392 = vmul.f32 %v385, %v390
    %v393 = vmul.f32 %v378, %v391
    %v394 = vmul.f32 %v381, %v392
    %v395 = vadd.f32 %v393, 0.0
    %v396 = vadd.f32 %v394, 0.0
    %397 = vset.pattern.permute.xlu0 1
    %398 = vperm.xlu0 %397, %v242
    %v399 = vpop.permute.xlu0 %398
    %401 = vset.pattern.permute.xlu0 1
    %402 = vperm.xlu0 %401, %v245
    %v403 = vpop.permute.xlu0 %402
    %v405 = vlaneseq
    %v406 = vshrl.u32 %v405, 7
    %v407 = vsub.s32 1, %v406
    %v408 = vrot.slane %v287, %v407
    %v409 = vadd.f32 %v399, %v408
    %v410 = vadd.f32 %v403, %v408
    %s411 = scalar_lea.vmem %s2, 16
    %v412 = vld [vmem:[%s411] sm:$0xff]
    %v413 = vld [vmem:[%s411 + $0x8] sm:$0xff]
    %v414 = vadd.f32 %v409, %v412
    %v415 = vadd.f32 %v410, %v413
    %vm416 = vcmp.gt.f32.partialorder %v414, 0.0
    %vm417 = vcmp.gt.f32.partialorder %v415, 0.0
    %v418 = vmul.f32 %v414, 0.2
    %v419 = vmul.f32 %v415, 0.2
    %v420 = vsel %vm416, %v414, %v418
    %v421 = vsel %vm417, %v415, %v419
    %v422 = vsel %vm115, %v420, -1e+30
    %v423 = vsel %vm116, %v421, -1e+30
    %v424 = vsel %vm320, %v422, -inf
    %425 = vmax.xlane.f32.xlu0 %v424
    %v426 = vpop.xlane.xlu0 %425
    %v427 = vsel %vm320, %v423, -inf
    %428 = vmax.xlane.f32.xlu0 %v427
    %v429 = vpop.xlane.xlu0 %428
    %v430 = vsub.f32 %v422, %v426
    %v431 = vsub.f32 %v423, %v429
    %v432 = vmul.f32 %v430, 1.442695
    %v433 = vpow.pop %v432
    %v434 = vmul.f32 %v431, 1.442695
    %v435 = vpow.pop %v434
    %v436 = vsel %vm320, %v433, 0.0
    %437 = vadd.xlane.f32.xlu0 %v436
    %v438 = vpop.xlane.xlu0 %437
    %v439 = vsel %vm320, %v435, 0.0
    %440 = vadd.xlane.f32.xlu0 %v439
    %v441 = vpop.xlane.xlu0 %440
    %v442 = vpack.c.bf16 %v435, %v433
    %v444 = vsel %vm320, %v442, 0
    %446 = vmatprep.subr.bf16.mxu0 0
    %447 = vmatpush1.bf16.msra.mxu0 %v170
    %448 = vmatprep.subr.bf16.mxu0 0
    %449 = vmatpush1.bf16.msra.mxu0 0
    %450 = vmatprep.subr.bf16.mxu0 0
    %451 = vmatpush1.bf16.msra.mxu0 0
    %452 = vmatprep.subr.bf16.mxu0 0
    %453 = vmatpush1.bf16.msra.mxu0 0
    %454 = vmatprep.subr.bf16.mxu0 0
    %455 = vmatpush1.bf16.msra.mxu0 0
    %456 = vmatprep.subr.bf16.mxu0 0
    %457 = vmatpush1.bf16.msra.mxu0 0
    %458 = vmatprep.subr.bf16.mxu0 0
    %459 = vmatpush1.bf16.msra.mxu0 0
    %460 = vmatprep.subr.bf16.mxu0 0
    %461 = vmatpush1.bf16.msra.mxu0 0
    %462 = vmatprep.subr.bf16.mxu0 0
    %463 = vmatpush1.bf16.msra.mxu0 0
    %464 = vmatprep.subr.bf16.mxu0 0
    %465 = vmatpush1.bf16.msra.mxu0 0
    %466 = vmatprep.subr.bf16.mxu0 0
    %467 = vmatpush1.bf16.msra.mxu0 0
    %468 = vmatprep.subr.bf16.mxu0 0
    %469 = vmatpush1.bf16.msra.mxu0 0
    %470 = vmatprep.subr.bf16.mxu0 0
    %471 = vmatpush1.bf16.msra.mxu0 0
    %472 = vmatprep.subr.bf16.mxu0 0
    %473 = vmatpush1.bf16.msra.mxu0 0
    %474 = vmatprep.subr.bf16.mxu0 0
    %475 = vmatpush1.bf16.msra.mxu0 0
    %476 = vmatprep.subr.bf16.mxu0 0
    %477 = vmatpush1.bf16.msra.mxu0 0
    %478 = vmatprep.mubr.bf16.mxu0 0
    %479 = vmatmul.mubr.bf16.gmra.mrb[0].mxu0 %v444
    %v480 = vpop.f32.mrb[0].mxu0
    %v481 = vadd.f32 0.0, %v480
    %v482 = vpop.f32.mrb[0].mxu0
    %v483 = vpop.f32.mrb[0].mxu0
    %v484 = vadd.f32 0.0, %v483
    %v485 = vpop.f32.mrb[0].mxu0
    %486 = vdwg.mxu0
    %v487 = vrcp.pop %v438
    %v488 = vrcp.pop %v441
    %v489 = vld [vmem:[#allocation10 + $0x1] sm:$0x1]
    %v490 = vlaneseq
    %v491 = vshrl.u32 %v490, 7
    %v492 = vsub.s32 0, %v491
    %v493 = vrot.slane %v489, %v492
    %v494 = vmul.f32 %v487, %v493
    %v495 = vmul.f32 %v488, %v493
    %v496 = vmul.f32 %v481, %v494
    %v497 = vmul.f32 %v484, %v495
    %v498 = vadd.f32 %v395, %v496
    %v499 = vadd.f32 %v396, %v497
    %500 = vset.pattern.permute.xlu0 2
    %501 = vperm.xlu0 %500, %v242
    %v502 = vpop.permute.xlu0 %501
    %504 = vset.pattern.permute.xlu0 2
    %505 = vperm.xlu0 %504, %v245
    %v506 = vpop.permute.xlu0 %505
    %v508 = vlaneseq
    %v509 = vshrl.u32 %v508, 7
    %v510 = vsub.s32 2, %v509
    %v511 = vrot.slane %v287, %v510
    %v512 = vadd.f32 %v502, %v511
    %v513 = vadd.f32 %v506, %v511
    %s514 = scalar_lea.vmem %s2, 32
    %v515 = vld [vmem:[%s514] sm:$0xff]
    %v516 = vld [vmem:[%s514 + $0x8] sm:$0xff]
    %v517 = vadd.f32 %v512, %v515
    %v518 = vadd.f32 %v513, %v516
    %vm519 = vcmp.gt.f32.partialorder %v517, 0.0
    %vm520 = vcmp.gt.f32.partialorder %v518, 0.0
    %v521 = vmul.f32 %v517, 0.2
    %v522 = vmul.f32 %v518, 0.2
    %v523 = vsel %vm519, %v517, %v521
    %v524 = vsel %vm520, %v518, %v522
    %v525 = vsel %vm115, %v523, -1e+30
    %v526 = vsel %vm116, %v524, -1e+30
    %v527 = vsel %vm320, %v525, -inf
    %528 = vmax.xlane.f32.xlu0 %v527
    %v529 = vpop.xlane.xlu0 %528
    %v530 = vsel %vm320, %v526, -inf
    %531 = vmax.xlane.f32.xlu0 %v530
    %v532 = vpop.xlane.xlu0 %531
    %v533 = vsub.f32 %v525, %v529
    %v534 = vsub.f32 %v526, %v532
    %v535 = vmul.f32 %v533, 1.442695
    %v536 = vpow.pop %v535
    %v537 = vmul.f32 %v534, 1.442695
    %v538 = vpow.pop %v537
    %v539 = vsel %vm320, %v536, 0.0
    %540 = vadd.xlane.f32.xlu0 %v539
    %v541 = vpop.xlane.xlu0 %540
    %v542 = vsel %vm320, %v538, 0.0
    %543 = vadd.xlane.f32.xlu0 %v542
    %v544 = vpop.xlane.xlu0 %543
    %v545 = vpack.c.bf16 %v538, %v536
    %v547 = vsel %vm320, %v545, 0
    %549 = vmatprep.subr.bf16.mxu0 0
    %550 = vmatpush1.bf16.msra.mxu0 %v170
    %551 = vmatprep.subr.bf16.mxu0 0
    %552 = vmatpush1.bf16.msra.mxu0 0
    %553 = vmatprep.subr.bf16.mxu0 0
    %554 = vmatpush1.bf16.msra.mxu0 0
    %555 = vmatprep.subr.bf16.mxu0 0
    %556 = vmatpush1.bf16.msra.mxu0 0
    %557 = vmatprep.subr.bf16.mxu0 0
    %558 = vmatpush1.bf16.msra.mxu0 0
    %559 = vmatprep.subr.bf16.mxu0 0
    %560 = vmatpush1.bf16.msra.mxu0 0
    %561 = vmatprep.subr.bf16.mxu0 0
    %562 = vmatpush1.bf16.msra.mxu0 0
    %563 = vmatprep.subr.bf16.mxu0 0
    %564 = vmatpush1.bf16.msra.mxu0 0
    %565 = vmatprep.subr.bf16.mxu0 0
    %566 = vmatpush1.bf16.msra.mxu0 0
    %567 = vmatprep.subr.bf16.mxu0 0
    %568 = vmatpush1.bf16.msra.mxu0 0
    %569 = vmatprep.subr.bf16.mxu0 0
    %570 = vmatpush1.bf16.msra.mxu0 0
    %571 = vmatprep.subr.bf16.mxu0 0
    %572 = vmatpush1.bf16.msra.mxu0 0
    %573 = vmatprep.subr.bf16.mxu0 0
    %574 = vmatpush1.bf16.msra.mxu0 0
    %575 = vmatprep.subr.bf16.mxu0 0
    %576 = vmatpush1.bf16.msra.mxu0 0
    %577 = vmatprep.subr.bf16.mxu0 0
    %578 = vmatpush1.bf16.msra.mxu0 0
    %579 = vmatprep.subr.bf16.mxu0 0
    %580 = vmatpush1.bf16.msra.mxu0 0
    %581 = vmatprep.mubr.bf16.mxu0 0
    %582 = vmatmul.mubr.bf16.gmra.mrb[0].mxu0 %v547
    %v583 = vpop.f32.mrb[0].mxu0
    %v584 = vadd.f32 0.0, %v583
    %v585 = vpop.f32.mrb[0].mxu0
    %v586 = vpop.f32.mrb[0].mxu0
    %v587 = vadd.f32 0.0, %v586
    %v588 = vpop.f32.mrb[0].mxu0
    %589 = vdwg.mxu0
    %v590 = vrcp.pop %v541
    %v591 = vrcp.pop %v544
    %v592 = vld [vmem:[#allocation10 + $0x2] sm:$0x1]
    %v593 = vlaneseq
    %v594 = vshrl.u32 %v593, 7
    %v595 = vsub.s32 0, %v594
    %v596 = vrot.slane %v592, %v595
    %v597 = vmul.f32 %v590, %v596
    %v598 = vmul.f32 %v591, %v596
    %v599 = vmul.f32 %v584, %v597
    %v600 = vmul.f32 %v587, %v598
    %v601 = vadd.f32 %v498, %v599
    %v602 = vadd.f32 %v499, %v600
    %603 = vset.pattern.permute.xlu0 3
    %604 = vperm.xlu0 %603, %v242
    %v605 = vpop.permute.xlu0 %604
    %607 = vset.pattern.permute.xlu0 3
    %608 = vperm.xlu0 %607, %v245
    %v609 = vpop.permute.xlu0 %608
    %v611 = vlaneseq
    %v612 = vshrl.u32 %v611, 7
    %v613 = vsub.s32 3, %v612
    %v614 = vrot.slane %v287, %v613
    %v615 = vadd.f32 %v605, %v614
    %v616 = vadd.f32 %v609, %v614
    %s617 = scalar_lea.vmem %s2, 48
    %v618 = vld [vmem:[%s617] sm:$0xff]
    %v619 = vld [vmem:[%s617 + $0x8] sm:$0xff]
    %v620 = vadd.f32 %v615, %v618
    %v621 = vadd.f32 %v616, %v619
    %vm622 = vcmp.gt.f32.partialorder %v620, 0.0
    %vm623 = vcmp.gt.f32.partialorder %v621, 0.0
    %v624 = vmul.f32 %v620, 0.2
    %v625 = vmul.f32 %v621, 0.2
    %v626 = vsel %vm622, %v620, %v624
    %v627 = vsel %vm623, %v621, %v625
    %v628 = vsel %vm115, %v626, -1e+30
    %v629 = vsel %vm116, %v627, -1e+30
    %v630 = vsel %vm320, %v628, -inf
    %631 = vmax.xlane.f32.xlu0 %v630
    %v632 = vpop.xlane.xlu0 %631
    %v633 = vsel %vm320, %v629, -inf
    %634 = vmax.xlane.f32.xlu0 %v633
    %v635 = vpop.xlane.xlu0 %634
    %v636 = vsub.f32 %v628, %v632
    %v637 = vsub.f32 %v629, %v635
    %v638 = vmul.f32 %v636, 1.442695
    %v639 = vpow.pop %v638
    %v640 = vmul.f32 %v637, 1.442695
    %v641 = vpow.pop %v640
    %v642 = vsel %vm320, %v639, 0.0
    %643 = vadd.xlane.f32.xlu0 %v642
    %v644 = vpop.xlane.xlu0 %643
    %v645 = vsel %vm320, %v641, 0.0
    %646 = vadd.xlane.f32.xlu0 %v645
    %v647 = vpop.xlane.xlu0 %646
    %v648 = vpack.c.bf16 %v641, %v639
    %v650 = vsel %vm320, %v648, 0
    %652 = vmatprep.subr.bf16.mxu0 0
    %653 = vmatpush1.bf16.msra.mxu0 %v170
    %654 = vmatprep.subr.bf16.mxu0 0
    %655 = vmatpush1.bf16.msra.mxu0 0
    %656 = vmatprep.subr.bf16.mxu0 0
    %657 = vmatpush1.bf16.msra.mxu0 0
    %658 = vmatprep.subr.bf16.mxu0 0
    %659 = vmatpush1.bf16.msra.mxu0 0
    %660 = vmatprep.subr.bf16.mxu0 0
    %661 = vmatpush1.bf16.msra.mxu0 0
    %662 = vmatprep.subr.bf16.mxu0 0
    %663 = vmatpush1.bf16.msra.mxu0 0
    %664 = vmatprep.subr.bf16.mxu0 0
    %665 = vmatpush1.bf16.msra.mxu0 0
    %666 = vmatprep.subr.bf16.mxu0 0
    %667 = vmatpush1.bf16.msra.mxu0 0
    %668 = vmatprep.subr.bf16.mxu0 0
    %669 = vmatpush1.bf16.msra.mxu0 0
    %670 = vmatprep.subr.bf16.mxu0 0
    %671 = vmatpush1.bf16.msra.mxu0 0
    %672 = vmatprep.subr.bf16.mxu0 0
    %673 = vmatpush1.bf16.msra.mxu0 0
    %674 = vmatprep.subr.bf16.mxu0 0
    %675 = vmatpush1.bf16.msra.mxu0 0
    %676 = vmatprep.subr.bf16.mxu0 0
    %677 = vmatpush1.bf16.msra.mxu0 0
    %678 = vmatprep.subr.bf16.mxu0 0
    %679 = vmatpush1.bf16.msra.mxu0 0
    %680 = vmatprep.subr.bf16.mxu0 0
    %681 = vmatpush1.bf16.msra.mxu0 0
    %682 = vmatprep.subr.bf16.mxu0 0
    %683 = vmatpush1.bf16.msra.mxu0 0
    %684 = vmatprep.mubr.bf16.mxu0 0
    %685 = vmatmul.mubr.bf16.gmra.mrb[0].mxu0 %v650
    %v686 = vpop.f32.mrb[0].mxu0
    %v687 = vadd.f32 0.0, %v686
    %v688 = vpop.f32.mrb[0].mxu0
    %v689 = vpop.f32.mrb[0].mxu0
    %v690 = vadd.f32 0.0, %v689
    %v691 = vpop.f32.mrb[0].mxu0
    %692 = vdwg.mxu0
    %v693 = vrcp.pop %v644
    %v694 = vrcp.pop %v647
    %v695 = vld [vmem:[#allocation10 + $0x3] sm:$0x1]
    %v696 = vlaneseq
    %v697 = vshrl.u32 %v696, 7
    %v698 = vsub.s32 0, %v697
    %v699 = vrot.slane %v695, %v698
    %v700 = vmul.f32 %v693, %v699
    %v701 = vmul.f32 %v694, %v699
    %v702 = vmul.f32 %v687, %v700
    %v703 = vmul.f32 %v690, %v701
    %v704 = vadd.f32 %v601, %v702
    %v705 = vadd.f32 %v602, %v703
    %v706 = vld [vmem:[#allocation8] sm:$0x1]
    %v708 = vlaneseq
    %v709 = vshrl.u32 %v708, 7
    %v710 = vsub.s32 0, %v709
    %v711 = vrot.slane %v706, %v710
    %v713 = vadd.f32 %v704, %v711
    %v714 = vadd.f32 %v705, %v711
    %v715 = vmax.f32 %v713, 0.0
    %v716 = vmax.f32 %v714, 0.0
    %v717 = vld [vmem:[%s4] sm:$0xf]
    %v718 = vld [vmem:[%s4 + $0x4] sm:$0xf]
    %v719 = vld [vmem:[%s4 + $0x8] sm:$0xf]
    %v720 = vld [vmem:[%s4 + $0xc] sm:$0xf]
    %v721 = vld [vmem:[%s4 + $0x10] sm:$0xf]
    %v722 = vld [vmem:[%s4 + $0x14] sm:$0xf]
    %v723 = vld [vmem:[%s4 + $0x18] sm:$0xf]
    %v724 = vld [vmem:[%s4 + $0x1c] sm:$0xf]
    %v725 = vpack.c.bf16 %v716, %v715
    %v734 = vunpack.c.l.b16 %v717
    %v735 = vunpack.c.l.b16 %v718
    %v736 = vunpack.c.l.b16 %v719
    %v737 = vunpack.c.l.b16 %v720
    %v738 = vunpack.c.l.b16 %v721
    %v739 = vunpack.c.l.b16 %v722
    %v740 = vunpack.c.l.b16 %v723
    %v741 = vunpack.c.l.b16 %v724
    %v742 = vpack.c.b16 %v735, %v734
    %v743 = vpack.c.b16 %v737, %v736
    %v744 = vpack.c.b16 %v739, %v738
    %v745 = vpack.c.b16 %v741, %v740
    %v751 = vsel %vm203, %v725, 0
    %753 = vmatprep.subr.bf16.mxu0 0
    %754 = vmatpush1.bf16.msra.mxu0 %v742
    %755 = vmatprep.subr.bf16.mxu0 0
    %756 = vmatpush1.bf16.msra.mxu0 %v743
    %757 = vmatprep.subr.bf16.mxu0 0
    %758 = vmatpush1.bf16.msra.mxu0 %v744
    %759 = vmatprep.subr.bf16.mxu0 0
    %760 = vmatpush1.bf16.msra.mxu0 %v745
    %761 = vmatprep.subr.bf16.mxu0 0
    %762 = vmatpush1.bf16.msra.mxu0 0
    %763 = vmatprep.subr.bf16.mxu0 0
    %764 = vmatpush1.bf16.msra.mxu0 0
    %765 = vmatprep.subr.bf16.mxu0 0
    %766 = vmatpush1.bf16.msra.mxu0 0
    %767 = vmatprep.subr.bf16.mxu0 0
    %768 = vmatpush1.bf16.msra.mxu0 0
    %769 = vmatprep.subr.bf16.mxu0 0
    %770 = vmatpush1.bf16.msra.mxu0 0
    %771 = vmatprep.subr.bf16.mxu0 0
    %772 = vmatpush1.bf16.msra.mxu0 0
    %773 = vmatprep.subr.bf16.mxu0 0
    %774 = vmatpush1.bf16.msra.mxu0 0
    %775 = vmatprep.subr.bf16.mxu0 0
    %776 = vmatpush1.bf16.msra.mxu0 0
    %777 = vmatprep.subr.bf16.mxu0 0
    %778 = vmatpush1.bf16.msra.mxu0 0
    %779 = vmatprep.subr.bf16.mxu0 0
    %780 = vmatpush1.bf16.msra.mxu0 0
    %781 = vmatprep.subr.bf16.mxu0 0
    %782 = vmatpush1.bf16.msra.mxu0 0
    %783 = vmatprep.subr.bf16.mxu0 0
    %784 = vmatpush1.bf16.msra.mxu0 0
    %785 = vmatprep.mubr.bf16.mxu0 0
    %786 = vmatmul.mubr.bf16.gmra.mrb[0].mxu0 %v751
    %v787 = vpop.f32.mrb[0].mxu0
    %v788 = vadd.f32 0.0, %v787
    %v789 = vpop.f32.mrb[0].mxu0
    %v790 = vpop.f32.mrb[0].mxu0
    %v791 = vadd.f32 0.0, %v790
    %v792 = vpop.f32.mrb[0].mxu0
    %793 = vdwg.mxu0
    %v794 = vpack.c.bf16 %v791, %v788
    %s795 = scalar_lea.vmem %s6, 32
    %v796 = vld [vmem:[%s795] sm:$0xf]
    %v797 = vld [vmem:[%s795 + $0x4] sm:$0xf]
    %v798 = vld [vmem:[%s795 + $0x8] sm:$0xf]
    %v799 = vld [vmem:[%s795 + $0xc] sm:$0xf]
    %v800 = vld [vmem:[%s795 + $0x10] sm:$0xf]
    %v801 = vld [vmem:[%s795 + $0x14] sm:$0xf]
    %v802 = vld [vmem:[%s795 + $0x18] sm:$0xf]
    %v803 = vld [vmem:[%s795 + $0x1c] sm:$0xf]
    %v812 = vunpack.c.l.b16 %v796
    %v813 = vunpack.c.l.b16 %v797
    %v814 = vunpack.c.l.b16 %v798
    %v815 = vunpack.c.l.b16 %v799
    %v816 = vunpack.c.l.b16 %v800
    %v817 = vunpack.c.l.b16 %v801
    %v818 = vunpack.c.l.b16 %v802
    %v819 = vunpack.c.l.b16 %v803
    %v820 = vpack.c.b16 %v813, %v812
    %v821 = vpack.c.b16 %v815, %v814
    %v822 = vpack.c.b16 %v817, %v816
    %v823 = vpack.c.b16 %v819, %v818
    %v829 = vsel %vm203, %v794, 0
    %831 = vmatprep.subr.bf16.mxu0 0
    %832 = vmatpush1.bf16.msra.mxu0 %v820
    %833 = vmatprep.subr.bf16.mxu0 0
    %834 = vmatpush1.bf16.msra.mxu0 %v821
    %835 = vmatprep.subr.bf16.mxu0 0
    %836 = vmatpush1.bf16.msra.mxu0 %v822
    %837 = vmatprep.subr.bf16.mxu0 0
    %838 = vmatpush1.bf16.msra.mxu0 %v823
    %839 = vmatprep.subr.bf16.mxu0 0
    %840 = vmatpush1.bf16.msra.mxu0 0
    %841 = vmatprep.subr.bf16.mxu0 0
    %842 = vmatpush1.bf16.msra.mxu0 0
    %843 = vmatprep.subr.bf16.mxu0 0
    %844 = vmatpush1.bf16.msra.mxu0 0
    %845 = vmatprep.subr.bf16.mxu0 0
    %846 = vmatpush1.bf16.msra.mxu0 0
    %847 = vmatprep.subr.bf16.mxu0 0
    %848 = vmatpush1.bf16.msra.mxu0 0
    %849 = vmatprep.subr.bf16.mxu0 0
    %850 = vmatpush1.bf16.msra.mxu0 0
    %851 = vmatprep.subr.bf16.mxu0 0
    %852 = vmatpush1.bf16.msra.mxu0 0
    %853 = vmatprep.subr.bf16.mxu0 0
    %854 = vmatpush1.bf16.msra.mxu0 0
    %855 = vmatprep.subr.bf16.mxu0 0
    %856 = vmatpush1.bf16.msra.mxu0 0
    %857 = vmatprep.subr.bf16.mxu0 0
    %858 = vmatpush1.bf16.msra.mxu0 0
    %859 = vmatprep.subr.bf16.mxu0 0
    %860 = vmatpush1.bf16.msra.mxu0 0
    %861 = vmatprep.subr.bf16.mxu0 0
    %862 = vmatpush1.bf16.msra.mxu0 0
    %863 = vmatprep.mubr.bf16.mxu0 0
    %864 = vmatmul.mubr.bf16.gmra.mrb[0].mxu0 %v829
    %v865 = vpop.f32.mrb[0].mxu0
    %v866 = vadd.f32 0.0, %v865
    %v867 = vpop.f32.mrb[0].mxu0
    %v868 = vpop.f32.mrb[0].mxu0
    %v869 = vadd.f32 0.0, %v868
    %v870 = vpop.f32.mrb[0].mxu0
    %871 = vdwg.mxu0
    %s872 = scalar_lea.vmem [#allocation7], 2
    %v873 = vld [vmem:[%s872] sm:$0x3]
    %v875 = vsel %vm203, %v873, 0
    %877 = vmatprep.subr.bf16.mxu0 0
    %878 = vmatpush1.bf16.xpose.msra.mxu0 %v829
    %879 = vmatprep.subr.bf16.mxu0 0
    %880 = vmatpush1.bf16.xpose.msra.mxu0 0
    %881 = vmatprep.subr.bf16.mxu0 0
    %882 = vmatpush1.bf16.xpose.msra.mxu0 0
    %883 = vmatprep.subr.bf16.mxu0 0
    %884 = vmatpush1.bf16.xpose.msra.mxu0 0
    %885 = vmatprep.subr.bf16.mxu0 0
    %886 = vmatpush1.bf16.xpose.msra.mxu0 0
    %887 = vmatprep.subr.bf16.mxu0 0
    %888 = vmatpush1.bf16.xpose.msra.mxu0 0
    %889 = vmatprep.subr.bf16.mxu0 0
    %890 = vmatpush1.bf16.xpose.msra.mxu0 0
    %891 = vmatprep.subr.bf16.mxu0 0
    %892 = vmatpush1.bf16.xpose.msra.mxu0 0
    %893 = vmatprep.subr.bf16.mxu0 0
    %894 = vmatpush1.bf16.xpose.msra.mxu0 0
    %895 = vmatprep.subr.bf16.mxu0 0
    %896 = vmatpush1.bf16.xpose.msra.mxu0 0
    %897 = vmatprep.subr.bf16.mxu0 0
    %898 = vmatpush1.bf16.xpose.msra.mxu0 0
    %899 = vmatprep.subr.bf16.mxu0 0
    %900 = vmatpush1.bf16.xpose.msra.mxu0 0
    %901 = vmatprep.subr.bf16.mxu0 0
    %902 = vmatpush1.bf16.xpose.msra.mxu0 0
    %903 = vmatprep.subr.bf16.mxu0 0
    %904 = vmatpush1.bf16.xpose.msra.mxu0 0
    %905 = vmatprep.subr.bf16.mxu0 0
    %906 = vmatpush1.bf16.xpose.msra.mxu0 0
    %907 = vmatprep.subr.bf16.mxu0 0
    %908 = vmatpush1.bf16.xpose.msra.mxu0 0
    %909 = vmatprep.mubr.bf16.mxu0 0
    %910 = vmatmul.mubr.bf16.gmra.mrb[0].mxu0 %v875
    %v911 = vpop.f32.mrb[0].mxu0
    %v912 = vadd.f32 0.0, %v911
    %v913 = vpop.f32.mrb[0].mxu0
    %v914 = vpop.f32.mrb[0].mxu0
    %v915 = vpop.f32.mrb[0].mxu0
    %916 = vdwg.mxu0
    %918 = vset.pattern.permute.xlu0 0
    %919 = vperm.xlu0 %918, %v866
    %v920 = vpop.permute.xlu0 %919
    %923 = vset.pattern.permute.xlu0 0
    %924 = vperm.xlu0 %923, %v869
    %v925 = vpop.permute.xlu0 %924
    %v927 = vlaneseq
    %v928 = vshrl.u32 %v927, 7
    %v929 = vsub.s32 0, %v928
    %v930 = vrot.slane %v912, %v929
    %v931 = vadd.f32 %v920, %v930
    %v932 = vadd.f32 %v925, %v930
    %s933 = scalar_lea.vmem %s2, 64
    %v934 = vld [vmem:[%s933] sm:$0xff]
    %v935 = vld [vmem:[%s933 + $0x8] sm:$0xff]
    %v936 = vadd.f32 %v931, %v934
    %v937 = vadd.f32 %v932, %v935
    %vm938 = vcmp.gt.f32.partialorder %v936, 0.0
    %vm939 = vcmp.gt.f32.partialorder %v937, 0.0
    %v940 = vmul.f32 %v936, 0.2
    %v941 = vmul.f32 %v937, 0.2
    %v942 = vsel %vm938, %v936, %v940
    %v943 = vsel %vm939, %v937, %v941
    %v944 = vsel %vm115, %v942, -1e+30
    %v945 = vsel %vm116, %v943, -1e+30
    %v946 = vsel %vm320, %v944, -inf
    %947 = vmax.xlane.f32.xlu0 %v946
    %v948 = vpop.xlane.xlu0 %947
    %v949 = vsel %vm320, %v945, -inf
    %950 = vmax.xlane.f32.xlu0 %v949
    %v951 = vpop.xlane.xlu0 %950
    %v952 = vsub.f32 %v944, %v948
    %v953 = vsub.f32 %v945, %v951
    %v954 = vmul.f32 %v952, 1.442695
    %v955 = vpow.pop %v954
    %v956 = vmul.f32 %v953, 1.442695
    %v957 = vpow.pop %v956
    %v958 = vsel %vm320, %v955, 0.0
    %959 = vadd.xlane.f32.xlu0 %v958
    %v960 = vpop.xlane.xlu0 %959
    %v961 = vsel %vm320, %v957, 0.0
    %962 = vadd.xlane.f32.xlu0 %v961
    %v963 = vpop.xlane.xlu0 %962
    %v964 = vpack.c.bf16 %v957, %v955
    %v966 = vsel %vm320, %v964, 0
    %968 = vmatprep.subr.bf16.mxu0 0
    %969 = vmatpush1.bf16.msra.mxu0 %v794
    %970 = vmatprep.subr.bf16.mxu0 0
    %971 = vmatpush1.bf16.msra.mxu0 0
    %972 = vmatprep.subr.bf16.mxu0 0
    %973 = vmatpush1.bf16.msra.mxu0 0
    %974 = vmatprep.subr.bf16.mxu0 0
    %975 = vmatpush1.bf16.msra.mxu0 0
    %976 = vmatprep.subr.bf16.mxu0 0
    %977 = vmatpush1.bf16.msra.mxu0 0
    %978 = vmatprep.subr.bf16.mxu0 0
    %979 = vmatpush1.bf16.msra.mxu0 0
    %980 = vmatprep.subr.bf16.mxu0 0
    %981 = vmatpush1.bf16.msra.mxu0 0
    %982 = vmatprep.subr.bf16.mxu0 0
    %983 = vmatpush1.bf16.msra.mxu0 0
    %984 = vmatprep.subr.bf16.mxu0 0
    %985 = vmatpush1.bf16.msra.mxu0 0
    %986 = vmatprep.subr.bf16.mxu0 0
    %987 = vmatpush1.bf16.msra.mxu0 0
    %988 = vmatprep.subr.bf16.mxu0 0
    %989 = vmatpush1.bf16.msra.mxu0 0
    %990 = vmatprep.subr.bf16.mxu0 0
    %991 = vmatpush1.bf16.msra.mxu0 0
    %992 = vmatprep.subr.bf16.mxu0 0
    %993 = vmatpush1.bf16.msra.mxu0 0
    %994 = vmatprep.subr.bf16.mxu0 0
    %995 = vmatpush1.bf16.msra.mxu0 0
    %996 = vmatprep.subr.bf16.mxu0 0
    %997 = vmatpush1.bf16.msra.mxu0 0
    %998 = vmatprep.subr.bf16.mxu0 0
    %999 = vmatpush1.bf16.msra.mxu0 0
    %1000 = vmatprep.mubr.bf16.mxu0 0
    %1001 = vmatmul.mubr.bf16.gmra.mrb[0].mxu0 %v966
    %v1002 = vpop.f32.mrb[0].mxu0
    %v1003 = vadd.f32 0.0, %v1002
    %v1004 = vpop.f32.mrb[0].mxu0
    %v1005 = vpop.f32.mrb[0].mxu0
    %v1006 = vadd.f32 0.0, %v1005
    %v1007 = vpop.f32.mrb[0].mxu0
    %1008 = vdwg.mxu0
    %v1009 = vrcp.pop %v960
    %v1010 = vrcp.pop %v963
    %v1011 = vmul.f32 %v1009, %v390
    %v1012 = vmul.f32 %v1010, %v390
    %v1013 = vmul.f32 %v1003, %v1011
    %v1014 = vmul.f32 %v1006, %v1012
    %v1015 = vadd.f32 %v1013, 0.0
    %v1016 = vadd.f32 %v1014, 0.0
    %1017 = vset.pattern.permute.xlu0 1
    %1018 = vperm.xlu0 %1017, %v866
    %v1019 = vpop.permute.xlu0 %1018
    %1021 = vset.pattern.permute.xlu0 1
    %1022 = vperm.xlu0 %1021, %v869
    %v1023 = vpop.permute.xlu0 %1022
    %v1025 = vlaneseq
    %v1026 = vshrl.u32 %v1025, 7
    %v1027 = vsub.s32 1, %v1026
    %v1028 = vrot.slane %v912, %v1027
    %v1029 = vadd.f32 %v1019, %v1028
    %v1030 = vadd.f32 %v1023, %v1028
    %s1031 = scalar_lea.vmem %s2, 80
    %v1032 = vld [vmem:[%s1031] sm:$0xff]
    %v1033 = vld [vmem:[%s1031 + $0x8] sm:$0xff]
    %v1034 = vadd.f32 %v1029, %v1032
    %v1035 = vadd.f32 %v1030, %v1033
    %vm1036 = vcmp.gt.f32.partialorder %v1034, 0.0
    %vm1037 = vcmp.gt.f32.partialorder %v1035, 0.0
    %v1038 = vmul.f32 %v1034, 0.2
    %v1039 = vmul.f32 %v1035, 0.2
    %v1040 = vsel %vm1036, %v1034, %v1038
    %v1041 = vsel %vm1037, %v1035, %v1039
    %v1042 = vsel %vm115, %v1040, -1e+30
    %v1043 = vsel %vm116, %v1041, -1e+30
    %v1044 = vsel %vm320, %v1042, -inf
    %1045 = vmax.xlane.f32.xlu0 %v1044
    %v1046 = vpop.xlane.xlu0 %1045
    %v1047 = vsel %vm320, %v1043, -inf
    %1048 = vmax.xlane.f32.xlu0 %v1047
    %v1049 = vpop.xlane.xlu0 %1048
    %v1050 = vsub.f32 %v1042, %v1046
    %v1051 = vsub.f32 %v1043, %v1049
    %v1052 = vmul.f32 %v1050, 1.442695
    %v1053 = vpow.pop %v1052
    %v1054 = vmul.f32 %v1051, 1.442695
    %v1055 = vpow.pop %v1054
    %v1056 = vsel %vm320, %v1053, 0.0
    %1057 = vadd.xlane.f32.xlu0 %v1056
    %v1058 = vpop.xlane.xlu0 %1057
    %v1059 = vsel %vm320, %v1055, 0.0
    %1060 = vadd.xlane.f32.xlu0 %v1059
    %v1061 = vpop.xlane.xlu0 %1060
    %v1062 = vpack.c.bf16 %v1055, %v1053
    %v1064 = vsel %vm320, %v1062, 0
    %1066 = vmatprep.subr.bf16.mxu0 0
    %1067 = vmatpush1.bf16.msra.mxu0 %v794
    %1068 = vmatprep.subr.bf16.mxu0 0
    %1069 = vmatpush1.bf16.msra.mxu0 0
    %1070 = vmatprep.subr.bf16.mxu0 0
    %1071 = vmatpush1.bf16.msra.mxu0 0
    %1072 = vmatprep.subr.bf16.mxu0 0
    %1073 = vmatpush1.bf16.msra.mxu0 0
    %1074 = vmatprep.subr.bf16.mxu0 0
    %1075 = vmatpush1.bf16.msra.mxu0 0
    %1076 = vmatprep.subr.bf16.mxu0 0
    %1077 = vmatpush1.bf16.msra.mxu0 0
    %1078 = vmatprep.subr.bf16.mxu0 0
    %1079 = vmatpush1.bf16.msra.mxu0 0
    %1080 = vmatprep.subr.bf16.mxu0 0
    %1081 = vmatpush1.bf16.msra.mxu0 0
    %1082 = vmatprep.subr.bf16.mxu0 0
    %1083 = vmatpush1.bf16.msra.mxu0 0
    %1084 = vmatprep.subr.bf16.mxu0 0
    %1085 = vmatpush1.bf16.msra.mxu0 0
    %1086 = vmatprep.subr.bf16.mxu0 0
    %1087 = vmatpush1.bf16.msra.mxu0 0
    %1088 = vmatprep.subr.bf16.mxu0 0
    %1089 = vmatpush1.bf16.msra.mxu0 0
    %1090 = vmatprep.subr.bf16.mxu0 0
    %1091 = vmatpush1.bf16.msra.mxu0 0
    %1092 = vmatprep.subr.bf16.mxu0 0
    %1093 = vmatpush1.bf16.msra.mxu0 0
    %1094 = vmatprep.subr.bf16.mxu0 0
    %1095 = vmatpush1.bf16.msra.mxu0 0
    %1096 = vmatprep.subr.bf16.mxu0 0
    %1097 = vmatpush1.bf16.msra.mxu0 0
    %1098 = vmatprep.mubr.bf16.mxu0 0
    %1099 = vmatmul.mubr.bf16.gmra.mrb[0].mxu0 %v1064
    %v1100 = vpop.f32.mrb[0].mxu0
    %v1101 = vadd.f32 0.0, %v1100
    %v1102 = vpop.f32.mrb[0].mxu0
    %v1103 = vpop.f32.mrb[0].mxu0
    %v1104 = vadd.f32 0.0, %v1103
    %v1105 = vpop.f32.mrb[0].mxu0
    %1106 = vdwg.mxu0
    %v1107 = vrcp.pop %v1058
    %v1108 = vrcp.pop %v1061
    %v1109 = vmul.f32 %v1107, %v493
    %v1110 = vmul.f32 %v1108, %v493
    %v1111 = vmul.f32 %v1101, %v1109
    %v1112 = vmul.f32 %v1104, %v1110
    %v1113 = vadd.f32 %v1015, %v1111
    %v1114 = vadd.f32 %v1016, %v1112
    %1115 = vset.pattern.permute.xlu0 2
    %1116 = vperm.xlu0 %1115, %v866
    %v1117 = vpop.permute.xlu0 %1116
    %1119 = vset.pattern.permute.xlu0 2
    %1120 = vperm.xlu0 %1119, %v869
    %v1121 = vpop.permute.xlu0 %1120
    %v1123 = vlaneseq
    %v1124 = vshrl.u32 %v1123, 7
    %v1125 = vsub.s32 2, %v1124
    %v1126 = vrot.slane %v912, %v1125
    %v1127 = vadd.f32 %v1117, %v1126
    %v1128 = vadd.f32 %v1121, %v1126
    %s1129 = scalar_lea.vmem %s2, 96
    %v1130 = vld [vmem:[%s1129] sm:$0xff]
    %v1131 = vld [vmem:[%s1129 + $0x8] sm:$0xff]
    %v1132 = vadd.f32 %v1127, %v1130
    %v1133 = vadd.f32 %v1128, %v1131
    %vm1134 = vcmp.gt.f32.partialorder %v1132, 0.0
    %vm1135 = vcmp.gt.f32.partialorder %v1133, 0.0
    %v1136 = vmul.f32 %v1132, 0.2
    %v1137 = vmul.f32 %v1133, 0.2
    %v1138 = vsel %vm1134, %v1132, %v1136
    %v1139 = vsel %vm1135, %v1133, %v1137
    %v1140 = vsel %vm115, %v1138, -1e+30
    %v1141 = vsel %vm116, %v1139, -1e+30
    %v1142 = vsel %vm320, %v1140, -inf
    %1143 = vmax.xlane.f32.xlu0 %v1142
    %v1144 = vpop.xlane.xlu0 %1143
    %v1145 = vsel %vm320, %v1141, -inf
    %1146 = vmax.xlane.f32.xlu0 %v1145
    %v1147 = vpop.xlane.xlu0 %1146
    %v1148 = vsub.f32 %v1140, %v1144
    %v1149 = vsub.f32 %v1141, %v1147
    %v1150 = vmul.f32 %v1148, 1.442695
    %v1151 = vpow.pop %v1150
    %v1152 = vmul.f32 %v1149, 1.442695
    %v1153 = vpow.pop %v1152
    %v1154 = vsel %vm320, %v1151, 0.0
    %1155 = vadd.xlane.f32.xlu0 %v1154
    %v1156 = vpop.xlane.xlu0 %1155
    %v1157 = vsel %vm320, %v1153, 0.0
    %1158 = vadd.xlane.f32.xlu0 %v1157
    %v1159 = vpop.xlane.xlu0 %1158
    %v1160 = vpack.c.bf16 %v1153, %v1151
    %v1162 = vsel %vm320, %v1160, 0
    %1164 = vmatprep.subr.bf16.mxu0 0
    %1165 = vmatpush1.bf16.msra.mxu0 %v794
    %1166 = vmatprep.subr.bf16.mxu0 0
    %1167 = vmatpush1.bf16.msra.mxu0 0
    %1168 = vmatprep.subr.bf16.mxu0 0
    %1169 = vmatpush1.bf16.msra.mxu0 0
    %1170 = vmatprep.subr.bf16.mxu0 0
    %1171 = vmatpush1.bf16.msra.mxu0 0
    %1172 = vmatprep.subr.bf16.mxu0 0
    %1173 = vmatpush1.bf16.msra.mxu0 0
    %1174 = vmatprep.subr.bf16.mxu0 0
    %1175 = vmatpush1.bf16.msra.mxu0 0
    %1176 = vmatprep.subr.bf16.mxu0 0
    %1177 = vmatpush1.bf16.msra.mxu0 0
    %1178 = vmatprep.subr.bf16.mxu0 0
    %1179 = vmatpush1.bf16.msra.mxu0 0
    %1180 = vmatprep.subr.bf16.mxu0 0
    %1181 = vmatpush1.bf16.msra.mxu0 0
    %1182 = vmatprep.subr.bf16.mxu0 0
    %1183 = vmatpush1.bf16.msra.mxu0 0
    %1184 = vmatprep.subr.bf16.mxu0 0
    %1185 = vmatpush1.bf16.msra.mxu0 0
    %1186 = vmatprep.subr.bf16.mxu0 0
    %1187 = vmatpush1.bf16.msra.mxu0 0
    %1188 = vmatprep.subr.bf16.mxu0 0
    %1189 = vmatpush1.bf16.msra.mxu0 0
    %1190 = vmatprep.subr.bf16.mxu0 0
    %1191 = vmatpush1.bf16.msra.mxu0 0
    %1192 = vmatprep.subr.bf16.mxu0 0
    %1193 = vmatpush1.bf16.msra.mxu0 0
    %1194 = vmatprep.subr.bf16.mxu0 0
    %1195 = vmatpush1.bf16.msra.mxu0 0
    %1196 = vmatprep.mubr.bf16.mxu0 0
    %1197 = vmatmul.mubr.bf16.gmra.mrb[0].mxu0 %v1162
    %v1198 = vpop.f32.mrb[0].mxu0
    %v1199 = vadd.f32 0.0, %v1198
    %v1200 = vpop.f32.mrb[0].mxu0
    %v1201 = vpop.f32.mrb[0].mxu0
    %v1202 = vadd.f32 0.0, %v1201
    %v1203 = vpop.f32.mrb[0].mxu0
    %1204 = vdwg.mxu0
    %v1205 = vrcp.pop %v1156
    %v1206 = vrcp.pop %v1159
    %v1207 = vmul.f32 %v1205, %v596
    %v1208 = vmul.f32 %v1206, %v596
    %v1209 = vmul.f32 %v1199, %v1207
    %v1210 = vmul.f32 %v1202, %v1208
    %v1211 = vadd.f32 %v1113, %v1209
    %v1212 = vadd.f32 %v1114, %v1210
    %1213 = vset.pattern.permute.xlu0 3
    %1214 = vperm.xlu0 %1213, %v866
    %v1215 = vpop.permute.xlu0 %1214
    %1217 = vset.pattern.permute.xlu0 3
    %1218 = vperm.xlu0 %1217, %v869
    %v1219 = vpop.permute.xlu0 %1218
    %v1221 = vlaneseq
    %v1222 = vshrl.u32 %v1221, 7
    %v1223 = vsub.s32 3, %v1222
    %v1224 = vrot.slane %v912, %v1223
    %v1225 = vadd.f32 %v1215, %v1224
    %v1226 = vadd.f32 %v1219, %v1224
    %s1227 = scalar_lea.vmem %s2, 112
    %v1228 = vld [vmem:[%s1227] sm:$0xff]
    %v1229 = vld [vmem:[%s1227 + $0x8] sm:$0xff]
    %v1230 = vadd.f32 %v1225, %v1228
    %v1231 = vadd.f32 %v1226, %v1229
    %vm1232 = vcmp.gt.f32.partialorder %v1230, 0.0
    %vm1233 = vcmp.gt.f32.partialorder %v1231, 0.0
    %v1234 = vmul.f32 %v1230, 0.2
    %v1235 = vmul.f32 %v1231, 0.2
    %v1236 = vsel %vm1232, %v1230, %v1234
    %v1237 = vsel %vm1233, %v1231, %v1235
    %v1238 = vsel %vm115, %v1236, -1e+30
    %v1239 = vsel %vm116, %v1237, -1e+30
    %v1240 = vsel %vm320, %v1238, -inf
    %1241 = vmax.xlane.f32.xlu0 %v1240
    %v1242 = vpop.xlane.xlu0 %1241
    %v1243 = vsel %vm320, %v1239, -inf
    %1244 = vmax.xlane.f32.xlu0 %v1243
    %v1245 = vpop.xlane.xlu0 %1244
    %v1246 = vsub.f32 %v1238, %v1242
    %v1247 = vsub.f32 %v1239, %v1245
    %v1248 = vmul.f32 %v1246, 1.442695
    %v1249 = vpow.pop %v1248
    %v1250 = vmul.f32 %v1247, 1.442695
    %v1251 = vpow.pop %v1250
    %v1252 = vsel %vm320, %v1249, 0.0
    %1253 = vadd.xlane.f32.xlu0 %v1252
    %v1254 = vpop.xlane.xlu0 %1253
    %v1255 = vsel %vm320, %v1251, 0.0
    %1256 = vadd.xlane.f32.xlu0 %v1255
    %v1257 = vpop.xlane.xlu0 %1256
    %v1258 = vpack.c.bf16 %v1251, %v1249
    %v1260 = vsel %vm320, %v1258, 0
    %1262 = vmatprep.subr.bf16.mxu0 0
    %1263 = vmatpush1.bf16.msra.mxu0 %v794
    %1264 = vmatprep.subr.bf16.mxu0 0
    %1265 = vmatpush1.bf16.msra.mxu0 0
    %1266 = vmatprep.subr.bf16.mxu0 0
    %1267 = vmatpush1.bf16.msra.mxu0 0
    %1268 = vmatprep.subr.bf16.mxu0 0
    %1269 = vmatpush1.bf16.msra.mxu0 0
    %1270 = vmatprep.subr.bf16.mxu0 0
    %1271 = vmatpush1.bf16.msra.mxu0 0
    %1272 = vmatprep.subr.bf16.mxu0 0
    %1273 = vmatpush1.bf16.msra.mxu0 0
    %1274 = vmatprep.subr.bf16.mxu0 0
    %1275 = vmatpush1.bf16.msra.mxu0 0
    %1276 = vmatprep.subr.bf16.mxu0 0
    %1277 = vmatpush1.bf16.msra.mxu0 0
    %1278 = vmatprep.subr.bf16.mxu0 0
    %1279 = vmatpush1.bf16.msra.mxu0 0
    %1280 = vmatprep.subr.bf16.mxu0 0
    %1281 = vmatpush1.bf16.msra.mxu0 0
    %1282 = vmatprep.subr.bf16.mxu0 0
    %1283 = vmatpush1.bf16.msra.mxu0 0
    %1284 = vmatprep.subr.bf16.mxu0 0
    %1285 = vmatpush1.bf16.msra.mxu0 0
    %1286 = vmatprep.subr.bf16.mxu0 0
    %1287 = vmatpush1.bf16.msra.mxu0 0
    %1288 = vmatprep.subr.bf16.mxu0 0
    %1289 = vmatpush1.bf16.msra.mxu0 0
    %1290 = vmatprep.subr.bf16.mxu0 0
    %1291 = vmatpush1.bf16.msra.mxu0 0
    %1292 = vmatprep.subr.bf16.mxu0 0
    %1293 = vmatpush1.bf16.msra.mxu0 0
    %1294 = vmatprep.mubr.bf16.mxu0 0
    %1295 = vmatmul.mubr.bf16.gmra.mrb[0].mxu0 %v1260
    %v1296 = vpop.f32.mrb[0].mxu0
    %v1297 = vadd.f32 0.0, %v1296
    %v1298 = vpop.f32.mrb[0].mxu0
    %v1299 = vpop.f32.mrb[0].mxu0
    %v1300 = vadd.f32 0.0, %v1299
    %v1301 = vpop.f32.mrb[0].mxu0
    %1302 = vdwg.mxu0
    %v1303 = vrcp.pop %v1254
    %v1304 = vrcp.pop %v1257
    %v1305 = vmul.f32 %v1303, %v699
    %v1306 = vmul.f32 %v1304, %v699
    %v1307 = vmul.f32 %v1297, %v1305
    %v1308 = vmul.f32 %v1300, %v1306
    %v1309 = vadd.f32 %v1211, %v1307
    %v1310 = vadd.f32 %v1212, %v1308
    %s1311 = scalar_lea.vmem [#allocation8], 1
    %v1312 = vld [vmem:[%s1311] sm:$0x1]
    %v1314 = vlaneseq
    %v1315 = vshrl.u32 %v1314, 7
    %v1316 = vsub.s32 0, %v1315
    %v1317 = vrot.slane %v1312, %v1316
    %v1319 = vadd.f32 %v1309, %v1317
    %v1320 = vadd.f32 %v1310, %v1317
    %v1321 = vmax.f32 %v1319, 0.0
    %v1322 = vmax.f32 %v1320, 0.0
    %s1323 = scalar_lea.vmem %s4, 32
    %v1324 = vld [vmem:[%s1323] sm:$0xf]
    %v1325 = vld [vmem:[%s1323 + $0x4] sm:$0xf]
    %v1326 = vld [vmem:[%s1323 + $0x8] sm:$0xf]
    %v1327 = vld [vmem:[%s1323 + $0xc] sm:$0xf]
    %v1328 = vld [vmem:[%s1323 + $0x10] sm:$0xf]
    %v1329 = vld [vmem:[%s1323 + $0x14] sm:$0xf]
    %v1330 = vld [vmem:[%s1323 + $0x18] sm:$0xf]
    %v1331 = vld [vmem:[%s1323 + $0x1c] sm:$0xf]
    %v1332 = vpack.c.bf16 %v1322, %v1321
    %v1341 = vunpack.c.l.b16 %v1324
    %v1342 = vunpack.c.l.b16 %v1325
    %v1343 = vunpack.c.l.b16 %v1326
    %v1344 = vunpack.c.l.b16 %v1327
    %v1345 = vunpack.c.l.b16 %v1328
    %v1346 = vunpack.c.l.b16 %v1329
    %v1347 = vunpack.c.l.b16 %v1330
    %v1348 = vunpack.c.l.b16 %v1331
    %v1349 = vpack.c.b16 %v1342, %v1341
    %v1350 = vpack.c.b16 %v1344, %v1343
    %v1351 = vpack.c.b16 %v1346, %v1345
    %v1352 = vpack.c.b16 %v1348, %v1347
    %v1358 = vsel %vm203, %v1332, 0
    %1360 = vmatprep.subr.bf16.mxu0 0
    %1361 = vmatpush1.bf16.msra.mxu0 %v1349
    %1362 = vmatprep.subr.bf16.mxu0 0
    %1363 = vmatpush1.bf16.msra.mxu0 %v1350
    %1364 = vmatprep.subr.bf16.mxu0 0
    %1365 = vmatpush1.bf16.msra.mxu0 %v1351
    %1366 = vmatprep.subr.bf16.mxu0 0
    %1367 = vmatpush1.bf16.msra.mxu0 %v1352
    %1368 = vmatprep.subr.bf16.mxu0 0
    %1369 = vmatpush1.bf16.msra.mxu0 0
    %1370 = vmatprep.subr.bf16.mxu0 0
    %1371 = vmatpush1.bf16.msra.mxu0 0
    %1372 = vmatprep.subr.bf16.mxu0 0
    %1373 = vmatpush1.bf16.msra.mxu0 0
    %1374 = vmatprep.subr.bf16.mxu0 0
    %1375 = vmatpush1.bf16.msra.mxu0 0
    %1376 = vmatprep.subr.bf16.mxu0 0
    %1377 = vmatpush1.bf16.msra.mxu0 0
    %1378 = vmatprep.subr.bf16.mxu0 0
    %1379 = vmatpush1.bf16.msra.mxu0 0
    %1380 = vmatprep.subr.bf16.mxu0 0
    %1381 = vmatpush1.bf16.msra.mxu0 0
    %1382 = vmatprep.subr.bf16.mxu0 0
    %1383 = vmatpush1.bf16.msra.mxu0 0
    %1384 = vmatprep.subr.bf16.mxu0 0
    %1385 = vmatpush1.bf16.msra.mxu0 0
    %1386 = vmatprep.subr.bf16.mxu0 0
    %1387 = vmatpush1.bf16.msra.mxu0 0
    %1388 = vmatprep.subr.bf16.mxu0 0
    %1389 = vmatpush1.bf16.msra.mxu0 0
    %1390 = vmatprep.subr.bf16.mxu0 0
    %1391 = vmatpush1.bf16.msra.mxu0 0
    %1392 = vmatprep.mubr.bf16.mxu0 0
    %1393 = vmatmul.mubr.bf16.gmra.mrb[0].mxu0 %v1358
    %v1394 = vpop.f32.mrb[0].mxu0
    %v1395 = vadd.f32 0.0, %v1394
    %v1396 = vpop.f32.mrb[0].mxu0
    %v1397 = vpop.f32.mrb[0].mxu0
    %v1398 = vadd.f32 0.0, %v1397
    %v1399 = vpop.f32.mrb[0].mxu0
    %1400 = vdwg.mxu0
    %v1401 = vpack.c.bf16 %v1398, %v1395
    %s1402 = scalar_lea.vmem %s6, 64
    %v1403 = vld [vmem:[%s1402] sm:$0xf]
    %v1404 = vld [vmem:[%s1402 + $0x4] sm:$0xf]
    %v1405 = vld [vmem:[%s1402 + $0x8] sm:$0xf]
    %v1406 = vld [vmem:[%s1402 + $0xc] sm:$0xf]
    %v1407 = vld [vmem:[%s1402 + $0x10] sm:$0xf]
    %v1408 = vld [vmem:[%s1402 + $0x14] sm:$0xf]
    %v1409 = vld [vmem:[%s1402 + $0x18] sm:$0xf]
    %v1410 = vld [vmem:[%s1402 + $0x1c] sm:$0xf]
    %v1419 = vunpack.c.l.b16 %v1403
    %v1420 = vunpack.c.l.b16 %v1404
    %v1421 = vunpack.c.l.b16 %v1405
    %v1422 = vunpack.c.l.b16 %v1406
    %v1423 = vunpack.c.l.b16 %v1407
    %v1424 = vunpack.c.l.b16 %v1408
    %v1425 = vunpack.c.l.b16 %v1409
    %v1426 = vunpack.c.l.b16 %v1410
    %v1427 = vpack.c.b16 %v1420, %v1419
    %v1428 = vpack.c.b16 %v1422, %v1421
    %v1429 = vpack.c.b16 %v1424, %v1423
    %v1430 = vpack.c.b16 %v1426, %v1425
    %v1436 = vsel %vm203, %v1401, 0
    %1438 = vmatprep.subr.bf16.mxu0 0
    %1439 = vmatpush1.bf16.msra.mxu0 %v1427
    %1440 = vmatprep.subr.bf16.mxu0 0
    %1441 = vmatpush1.bf16.msra.mxu0 %v1428
    %1442 = vmatprep.subr.bf16.mxu0 0
    %1443 = vmatpush1.bf16.msra.mxu0 %v1429
    %1444 = vmatprep.subr.bf16.mxu0 0
    %1445 = vmatpush1.bf16.msra.mxu0 %v1430
    %1446 = vmatprep.subr.bf16.mxu0 0
    %1447 = vmatpush1.bf16.msra.mxu0 0
    %1448 = vmatprep.subr.bf16.mxu0 0
    %1449 = vmatpush1.bf16.msra.mxu0 0
    %1450 = vmatprep.subr.bf16.mxu0 0
    %1451 = vmatpush1.bf16.msra.mxu0 0
    %1452 = vmatprep.subr.bf16.mxu0 0
    %1453 = vmatpush1.bf16.msra.mxu0 0
    %1454 = vmatprep.subr.bf16.mxu0 0
    %1455 = vmatpush1.bf16.msra.mxu0 0
    %1456 = vmatprep.subr.bf16.mxu0 0
    %1457 = vmatpush1.bf16.msra.mxu0 0
    %1458 = vmatprep.subr.bf16.mxu0 0
    %1459 = vmatpush1.bf16.msra.mxu0 0
    %1460 = vmatprep.subr.bf16.mxu0 0
    %1461 = vmatpush1.bf16.msra.mxu0 0
    %1462 = vmatprep.subr.bf16.mxu0 0
    %1463 = vmatpush1.bf16.msra.mxu0 0
    %1464 = vmatprep.subr.bf16.mxu0 0
    %1465 = vmatpush1.bf16.msra.mxu0 0
    %1466 = vmatprep.subr.bf16.mxu0 0
    %1467 = vmatpush1.bf16.msra.mxu0 0
    %1468 = vmatprep.subr.bf16.mxu0 0
    %1469 = vmatpush1.bf16.msra.mxu0 0
    %1470 = vmatprep.mubr.bf16.mxu0 0
    %1471 = vmatmul.mubr.bf16.gmra.mrb[0].mxu0 %v1436
    %v1472 = vpop.f32.mrb[0].mxu0
    %v1473 = vadd.f32 0.0, %v1472
    %v1474 = vpop.f32.mrb[0].mxu0
    %v1475 = vpop.f32.mrb[0].mxu0
    %v1476 = vadd.f32 0.0, %v1475
    %v1477 = vpop.f32.mrb[0].mxu0
    %1478 = vdwg.mxu0
    %s1479 = scalar_lea.vmem [#allocation7], 4
    %v1480 = vld [vmem:[%s1479] sm:$0x3]
    %v1482 = vsel %vm203, %v1480, 0
    %1484 = vmatprep.subr.bf16.mxu0 0
    %1485 = vmatpush1.bf16.xpose.msra.mxu0 %v1436
    %1486 = vmatprep.subr.bf16.mxu0 0
    %1487 = vmatpush1.bf16.xpose.msra.mxu0 0
    %1488 = vmatprep.subr.bf16.mxu0 0
    %1489 = vmatpush1.bf16.xpose.msra.mxu0 0
    %1490 = vmatprep.subr.bf16.mxu0 0
    %1491 = vmatpush1.bf16.xpose.msra.mxu0 0
    %1492 = vmatprep.subr.bf16.mxu0 0
    %1493 = vmatpush1.bf16.xpose.msra.mxu0 0
    %1494 = vmatprep.subr.bf16.mxu0 0
    %1495 = vmatpush1.bf16.xpose.msra.mxu0 0
    %1496 = vmatprep.subr.bf16.mxu0 0
    %1497 = vmatpush1.bf16.xpose.msra.mxu0 0
    %1498 = vmatprep.subr.bf16.mxu0 0
    %1499 = vmatpush1.bf16.xpose.msra.mxu0 0
    %1500 = vmatprep.subr.bf16.mxu0 0
    %1501 = vmatpush1.bf16.xpose.msra.mxu0 0
    %1502 = vmatprep.subr.bf16.mxu0 0
    %1503 = vmatpush1.bf16.xpose.msra.mxu0 0
    %1504 = vmatprep.subr.bf16.mxu0 0
    %1505 = vmatpush1.bf16.xpose.msra.mxu0 0
    %1506 = vmatprep.subr.bf16.mxu0 0
    %1507 = vmatpush1.bf16.xpose.msra.mxu0 0
    %1508 = vmatprep.subr.bf16.mxu0 0
    %1509 = vmatpush1.bf16.xpose.msra.mxu0 0
    %1510 = vmatprep.subr.bf16.mxu0 0
    %1511 = vmatpush1.bf16.xpose.msra.mxu0 0
    %1512 = vmatprep.subr.bf16.mxu0 0
    %1513 = vmatpush1.bf16.xpose.msra.mxu0 0
    %1514 = vmatprep.subr.bf16.mxu0 0
    %1515 = vmatpush1.bf16.xpose.msra.mxu0 0
    %1516 = vmatprep.mubr.bf16.mxu0 0
    %1517 = vmatmul.mubr.bf16.gmra.mrb[0].mxu0 %v1482
    %v1518 = vpop.f32.mrb[0].mxu0
    %v1519 = vadd.f32 0.0, %v1518
    %v1520 = vpop.f32.mrb[0].mxu0
    %v1521 = vpop.f32.mrb[0].mxu0
    %v1522 = vpop.f32.mrb[0].mxu0
    %1523 = vdwg.mxu0
    %1525 = vset.pattern.permute.xlu0 0
    %1526 = vperm.xlu0 %1525, %v1473
    %v1527 = vpop.permute.xlu0 %1526
    %1530 = vset.pattern.permute.xlu0 0
    %1531 = vperm.xlu0 %1530, %v1476
    %v1532 = vpop.permute.xlu0 %1531
    %v1534 = vlaneseq
    %v1535 = vshrl.u32 %v1534, 7
    %v1536 = vsub.s32 0, %v1535
    %v1537 = vrot.slane %v1519, %v1536
    %v1538 = vadd.f32 %v1527, %v1537
    %v1539 = vadd.f32 %v1532, %v1537
    %s1540 = scalar_lea.vmem %s2, 128
    %v1541 = vld [vmem:[%s1540] sm:$0xff]
    %v1542 = vld [vmem:[%s1540 + $0x8] sm:$0xff]
    %v1543 = vadd.f32 %v1538, %v1541
    %v1544 = vadd.f32 %v1539, %v1542
    %vm1545 = vcmp.gt.f32.partialorder %v1543, 0.0
    %vm1546 = vcmp.gt.f32.partialorder %v1544, 0.0
    %v1547 = vmul.f32 %v1543, 0.2
    %v1548 = vmul.f32 %v1544, 0.2
    %v1549 = vsel %vm1545, %v1543, %v1547
    %v1550 = vsel %vm1546, %v1544, %v1548
    %v1551 = vsel %vm115, %v1549, -1e+30
    %v1552 = vsel %vm116, %v1550, -1e+30
    %v1553 = vsel %vm320, %v1551, -inf
    %1554 = vmax.xlane.f32.xlu0 %v1553
    %v1555 = vpop.xlane.xlu0 %1554
    %v1556 = vsel %vm320, %v1552, -inf
    %1557 = vmax.xlane.f32.xlu0 %v1556
    %v1558 = vpop.xlane.xlu0 %1557
    %v1559 = vsub.f32 %v1551, %v1555
    %v1560 = vsub.f32 %v1552, %v1558
    %v1561 = vmul.f32 %v1559, 1.442695
    %v1562 = vpow.pop %v1561
    %v1563 = vmul.f32 %v1560, 1.442695
    %v1564 = vpow.pop %v1563
    %v1565 = vsel %vm320, %v1562, 0.0
    %1566 = vadd.xlane.f32.xlu0 %v1565
    %v1567 = vpop.xlane.xlu0 %1566
    %v1568 = vsel %vm320, %v1564, 0.0
    %1569 = vadd.xlane.f32.xlu0 %v1568
    %v1570 = vpop.xlane.xlu0 %1569
    %v1571 = vpack.c.bf16 %v1564, %v1562
    %v1573 = vsel %vm320, %v1571, 0
    %1575 = vmatprep.subr.bf16.mxu0 0
    %1576 = vmatpush1.bf16.msra.mxu0 %v1401
    %1577 = vmatprep.subr.bf16.mxu0 0
    %1578 = vmatpush1.bf16.msra.mxu0 0
    %1579 = vmatprep.subr.bf16.mxu0 0
    %1580 = vmatpush1.bf16.msra.mxu0 0
    %1581 = vmatprep.subr.bf16.mxu0 0
    %1582 = vmatpush1.bf16.msra.mxu0 0
    %1583 = vmatprep.subr.bf16.mxu0 0
    %1584 = vmatpush1.bf16.msra.mxu0 0
    %1585 = vmatprep.subr.bf16.mxu0 0
    %1586 = vmatpush1.bf16.msra.mxu0 0
    %1587 = vmatprep.subr.bf16.mxu0 0
    %1588 = vmatpush1.bf16.msra.mxu0 0
    %1589 = vmatprep.subr.bf16.mxu0 0
    %1590 = vmatpush1.bf16.msra.mxu0 0
    %1591 = vmatprep.subr.bf16.mxu0 0
    %1592 = vmatpush1.bf16.msra.mxu0 0
    %1593 = vmatprep.subr.bf16.mxu0 0
    %1594 = vmatpush1.bf16.msra.mxu0 0
    %1595 = vmatprep.subr.bf16.mxu0 0
    %1596 = vmatpush1.bf16.msra.mxu0 0
    %1597 = vmatprep.subr.bf16.mxu0 0
    %1598 = vmatpush1.bf16.msra.mxu0 0
    %1599 = vmatprep.subr.bf16.mxu0 0
    %1600 = vmatpush1.bf16.msra.mxu0 0
    %1601 = vmatprep.subr.bf16.mxu0 0
    %1602 = vmatpush1.bf16.msra.mxu0 0
    %1603 = vmatprep.subr.bf16.mxu0 0
    %1604 = vmatpush1.bf16.msra.mxu0 0
    %1605 = vmatprep.subr.bf16.mxu0 0
    %1606 = vmatpush1.bf16.msra.mxu0 0
    %1607 = vmatprep.mubr.bf16.mxu0 0
    %1608 = vmatmul.mubr.bf16.gmra.mrb[0].mxu0 %v1573
    %v1609 = vpop.f32.mrb[0].mxu0
    %v1610 = vadd.f32 0.0, %v1609
    %v1611 = vpop.f32.mrb[0].mxu0
    %v1612 = vpop.f32.mrb[0].mxu0
    %v1613 = vadd.f32 0.0, %v1612
    %v1614 = vpop.f32.mrb[0].mxu0
    %1615 = vdwg.mxu0
    %v1616 = vrcp.pop %v1567
    %v1617 = vrcp.pop %v1570
    %v1618 = vmul.f32 %v1616, %v390
    %v1619 = vmul.f32 %v1617, %v390
    %v1620 = vmul.f32 %v1610, %v1618
    %v1621 = vmul.f32 %v1613, %v1619
    %v1622 = vadd.f32 %v1620, 0.0
    %v1623 = vadd.f32 %v1621, 0.0
    %1624 = vset.pattern.permute.xlu0 1
    %1625 = vperm.xlu0 %1624, %v1473
    %v1626 = vpop.permute.xlu0 %1625
    %1628 = vset.pattern.permute.xlu0 1
    %1629 = vperm.xlu0 %1628, %v1476
    %v1630 = vpop.permute.xlu0 %1629
    %v1632 = vlaneseq
    %v1633 = vshrl.u32 %v1632, 7
    %v1634 = vsub.s32 1, %v1633
    %v1635 = vrot.slane %v1519, %v1634
    %v1636 = vadd.f32 %v1626, %v1635
    %v1637 = vadd.f32 %v1630, %v1635
    %s1638 = scalar_lea.vmem %s2, 144
    %v1639 = vld [vmem:[%s1638] sm:$0xff]
    %v1640 = vld [vmem:[%s1638 + $0x8] sm:$0xff]
    %v1641 = vadd.f32 %v1636, %v1639
    %v1642 = vadd.f32 %v1637, %v1640
    %vm1643 = vcmp.gt.f32.partialorder %v1641, 0.0
    %vm1644 = vcmp.gt.f32.partialorder %v1642, 0.0
    %v1645 = vmul.f32 %v1641, 0.2
    %v1646 = vmul.f32 %v1642, 0.2
    %v1647 = vsel %vm1643, %v1641, %v1645
    %v1648 = vsel %vm1644, %v1642, %v1646
    %v1649 = vsel %vm115, %v1647, -1e+30
    %v1650 = vsel %vm116, %v1648, -1e+30
    %v1651 = vsel %vm320, %v1649, -inf
    %1652 = vmax.xlane.f32.xlu0 %v1651
    %v1653 = vpop.xlane.xlu0 %1652
    %v1654 = vsel %vm320, %v1650, -inf
    %1655 = vmax.xlane.f32.xlu0 %v1654
    %v1656 = vpop.xlane.xlu0 %1655
    %v1657 = vsub.f32 %v1649, %v1653
    %v1658 = vsub.f32 %v1650, %v1656
    %v1659 = vmul.f32 %v1657, 1.442695
    %v1660 = vpow.pop %v1659
    %v1661 = vmul.f32 %v1658, 1.442695
    %v1662 = vpow.pop %v1661
    %v1663 = vsel %vm320, %v1660, 0.0
    %1664 = vadd.xlane.f32.xlu0 %v1663
    %v1665 = vpop.xlane.xlu0 %1664
    %v1666 = vsel %vm320, %v1662, 0.0
    %1667 = vadd.xlane.f32.xlu0 %v1666
    %v1668 = vpop.xlane.xlu0 %1667
    %v1669 = vpack.c.bf16 %v1662, %v1660
    %v1671 = vsel %vm320, %v1669, 0
    %1673 = vmatprep.subr.bf16.mxu0 0
    %1674 = vmatpush1.bf16.msra.mxu0 %v1401
    %1675 = vmatprep.subr.bf16.mxu0 0
    %1676 = vmatpush1.bf16.msra.mxu0 0
    %1677 = vmatprep.subr.bf16.mxu0 0
    %1678 = vmatpush1.bf16.msra.mxu0 0
    %1679 = vmatprep.subr.bf16.mxu0 0
    %1680 = vmatpush1.bf16.msra.mxu0 0
    %1681 = vmatprep.subr.bf16.mxu0 0
    %1682 = vmatpush1.bf16.msra.mxu0 0
    %1683 = vmatprep.subr.bf16.mxu0 0
    %1684 = vmatpush1.bf16.msra.mxu0 0
    %1685 = vmatprep.subr.bf16.mxu0 0
    %1686 = vmatpush1.bf16.msra.mxu0 0
    %1687 = vmatprep.subr.bf16.mxu0 0
    %1688 = vmatpush1.bf16.msra.mxu0 0
    %1689 = vmatprep.subr.bf16.mxu0 0
    %1690 = vmatpush1.bf16.msra.mxu0 0
    %1691 = vmatprep.subr.bf16.mxu0 0
    %1692 = vmatpush1.bf16.msra.mxu0 0
    %1693 = vmatprep.subr.bf16.mxu0 0
    %1694 = vmatpush1.bf16.msra.mxu0 0
    %1695 = vmatprep.subr.bf16.mxu0 0
    %1696 = vmatpush1.bf16.msra.mxu0 0
    %1697 = vmatprep.subr.bf16.mxu0 0
    %1698 = vmatpush1.bf16.msra.mxu0 0
    %1699 = vmatprep.subr.bf16.mxu0 0
    %1700 = vmatpush1.bf16.msra.mxu0 0
    %1701 = vmatprep.subr.bf16.mxu0 0
    %1702 = vmatpush1.bf16.msra.mxu0 0
    %1703 = vmatprep.subr.bf16.mxu0 0
    %1704 = vmatpush1.bf16.msra.mxu0 0
    %1705 = vmatprep.mubr.bf16.mxu0 0
    %1706 = vmatmul.mubr.bf16.gmra.mrb[0].mxu0 %v1671
    %v1707 = vpop.f32.mrb[0].mxu0
    %v1708 = vadd.f32 0.0, %v1707
    %v1709 = vpop.f32.mrb[0].mxu0
    %v1710 = vpop.f32.mrb[0].mxu0
    %v1711 = vadd.f32 0.0, %v1710
    %v1712 = vpop.f32.mrb[0].mxu0
    %1713 = vdwg.mxu0
    %v1714 = vrcp.pop %v1665
    %v1715 = vrcp.pop %v1668
    %v1716 = vmul.f32 %v1714, %v493
    %v1717 = vmul.f32 %v1715, %v493
    %v1718 = vmul.f32 %v1708, %v1716
    %v1719 = vmul.f32 %v1711, %v1717
    %v1720 = vadd.f32 %v1622, %v1718
    %v1721 = vadd.f32 %v1623, %v1719
    %1722 = vset.pattern.permute.xlu0 2
    %1723 = vperm.xlu0 %1722, %v1473
    %v1724 = vpop.permute.xlu0 %1723
    %1726 = vset.pattern.permute.xlu0 2
    %1727 = vperm.xlu0 %1726, %v1476
    %v1728 = vpop.permute.xlu0 %1727
    %v1730 = vlaneseq
    %v1731 = vshrl.u32 %v1730, 7
    %v1732 = vsub.s32 2, %v1731
    %v1733 = vrot.slane %v1519, %v1732
    %v1734 = vadd.f32 %v1724, %v1733
    %v1735 = vadd.f32 %v1728, %v1733
    %s1736 = scalar_lea.vmem %s2, 160
    %v1737 = vld [vmem:[%s1736] sm:$0xff]
    %v1738 = vld [vmem:[%s1736 + $0x8] sm:$0xff]
    %v1739 = vadd.f32 %v1734, %v1737
    %v1740 = vadd.f32 %v1735, %v1738
    %vm1741 = vcmp.gt.f32.partialorder %v1739, 0.0
    %vm1742 = vcmp.gt.f32.partialorder %v1740, 0.0
    %v1743 = vmul.f32 %v1739, 0.2
    %v1744 = vmul.f32 %v1740, 0.2
    %v1745 = vsel %vm1741, %v1739, %v1743
    %v1746 = vsel %vm1742, %v1740, %v1744
    %v1747 = vsel %vm115, %v1745, -1e+30
    %v1748 = vsel %vm116, %v1746, -1e+30
    %v1749 = vsel %vm320, %v1747, -inf
    %1750 = vmax.xlane.f32.xlu0 %v1749
    %v1751 = vpop.xlane.xlu0 %1750
    %v1752 = vsel %vm320, %v1748, -inf
    %1753 = vmax.xlane.f32.xlu0 %v1752
    %v1754 = vpop.xlane.xlu0 %1753
    %v1755 = vsub.f32 %v1747, %v1751
    %v1756 = vsub.f32 %v1748, %v1754
    %v1757 = vmul.f32 %v1755, 1.442695
    %v1758 = vpow.pop %v1757
    %v1759 = vmul.f32 %v1756, 1.442695
    %v1760 = vpow.pop %v1759
    %v1761 = vsel %vm320, %v1758, 0.0
    %1762 = vadd.xlane.f32.xlu0 %v1761
    %v1763 = vpop.xlane.xlu0 %1762
    %v1764 = vsel %vm320, %v1760, 0.0
    %1765 = vadd.xlane.f32.xlu0 %v1764
    %v1766 = vpop.xlane.xlu0 %1765
    %v1767 = vpack.c.bf16 %v1760, %v1758
    %v1769 = vsel %vm320, %v1767, 0
    %1771 = vmatprep.subr.bf16.mxu0 0
    %1772 = vmatpush1.bf16.msra.mxu0 %v1401
    %1773 = vmatprep.subr.bf16.mxu0 0
    %1774 = vmatpush1.bf16.msra.mxu0 0
    %1775 = vmatprep.subr.bf16.mxu0 0
    %1776 = vmatpush1.bf16.msra.mxu0 0
    %1777 = vmatprep.subr.bf16.mxu0 0
    %1778 = vmatpush1.bf16.msra.mxu0 0
    %1779 = vmatprep.subr.bf16.mxu0 0
    %1780 = vmatpush1.bf16.msra.mxu0 0
    %1781 = vmatprep.subr.bf16.mxu0 0
    %1782 = vmatpush1.bf16.msra.mxu0 0
    %1783 = vmatprep.subr.bf16.mxu0 0
    %1784 = vmatpush1.bf16.msra.mxu0 0
    %1785 = vmatprep.subr.bf16.mxu0 0
    %1786 = vmatpush1.bf16.msra.mxu0 0
    %1787 = vmatprep.subr.bf16.mxu0 0
    %1788 = vmatpush1.bf16.msra.mxu0 0
    %1789 = vmatprep.subr.bf16.mxu0 0
    %1790 = vmatpush1.bf16.msra.mxu0 0
    %1791 = vmatprep.subr.bf16.mxu0 0
    %1792 = vmatpush1.bf16.msra.mxu0 0
    %1793 = vmatprep.subr.bf16.mxu0 0
    %1794 = vmatpush1.bf16.msra.mxu0 0
    %1795 = vmatprep.subr.bf16.mxu0 0
    %1796 = vmatpush1.bf16.msra.mxu0 0
    %1797 = vmatprep.subr.bf16.mxu0 0
    %1798 = vmatpush1.bf16.msra.mxu0 0
    %1799 = vmatprep.subr.bf16.mxu0 0
    %1800 = vmatpush1.bf16.msra.mxu0 0
    %1801 = vmatprep.subr.bf16.mxu0 0
    %1802 = vmatpush1.bf16.msra.mxu0 0
    %1803 = vmatprep.mubr.bf16.mxu0 0
    %1804 = vmatmul.mubr.bf16.gmra.mrb[0].mxu0 %v1769
    %v1805 = vpop.f32.mrb[0].mxu0
    %v1806 = vadd.f32 0.0, %v1805
    %v1807 = vpop.f32.mrb[0].mxu0
    %v1808 = vpop.f32.mrb[0].mxu0
    %v1809 = vadd.f32 0.0, %v1808
    %v1810 = vpop.f32.mrb[0].mxu0
    %1811 = vdwg.mxu0
    %v1812 = vrcp.pop %v1763
    %v1813 = vrcp.pop %v1766
    %v1814 = vmul.f32 %v1812, %v596
    %v1815 = vmul.f32 %v1813, %v596
    %v1816 = vmul.f32 %v1806, %v1814
    %v1817 = vmul.f32 %v1809, %v1815
    %v1818 = vadd.f32 %v1720, %v1816
    %v1819 = vadd.f32 %v1721, %v1817
    %1820 = vset.pattern.permute.xlu0 3
    %1821 = vperm.xlu0 %1820, %v1473
    %v1822 = vpop.permute.xlu0 %1821
    %1824 = vset.pattern.permute.xlu0 3
    %1825 = vperm.xlu0 %1824, %v1476
    %v1826 = vpop.permute.xlu0 %1825
    %v1828 = vlaneseq
    %v1829 = vshrl.u32 %v1828, 7
    %v1830 = vsub.s32 3, %v1829
    %v1831 = vrot.slane %v1519, %v1830
    %v1832 = vadd.f32 %v1822, %v1831
    %v1833 = vadd.f32 %v1826, %v1831
    %s1834 = scalar_lea.vmem %s2, 176
    %v1835 = vld [vmem:[%s1834] sm:$0xff]
    %v1836 = vld [vmem:[%s1834 + $0x8] sm:$0xff]
    %v1837 = vadd.f32 %v1832, %v1835
    %v1838 = vadd.f32 %v1833, %v1836
    %vm1839 = vcmp.gt.f32.partialorder %v1837, 0.0
    %vm1840 = vcmp.gt.f32.partialorder %v1838, 0.0
    %v1841 = vmul.f32 %v1837, 0.2
    %v1842 = vmul.f32 %v1838, 0.2
    %v1843 = vsel %vm1839, %v1837, %v1841
    %v1844 = vsel %vm1840, %v1838, %v1842
    %v1845 = vsel %vm115, %v1843, -1e+30
    %v1846 = vsel %vm116, %v1844, -1e+30
    %v1847 = vsel %vm320, %v1845, -inf
    %1848 = vmax.xlane.f32.xlu0 %v1847
    %v1849 = vpop.xlane.xlu0 %1848
    %v1850 = vsel %vm320, %v1846, -inf
    %1851 = vmax.xlane.f32.xlu0 %v1850
    %v1852 = vpop.xlane.xlu0 %1851
    %v1853 = vsub.f32 %v1845, %v1849
    %v1854 = vsub.f32 %v1846, %v1852
    %v1855 = vmul.f32 %v1853, 1.442695
    %v1856 = vpow.pop %v1855
    %v1857 = vmul.f32 %v1854, 1.442695
    %v1858 = vpow.pop %v1857
    %v1859 = vsel %vm320, %v1856, 0.0
    %1860 = vadd.xlane.f32.xlu0 %v1859
    %v1861 = vpop.xlane.xlu0 %1860
    %v1862 = vsel %vm320, %v1858, 0.0
    %1863 = vadd.xlane.f32.xlu0 %v1862
    %v1864 = vpop.xlane.xlu0 %1863
    %v1865 = vpack.c.bf16 %v1858, %v1856
    %v1867 = vsel %vm320, %v1865, 0
    %1869 = vmatprep.subr.bf16.mxu0 0
    %1870 = vmatpush1.bf16.msra.mxu0 %v1401
    %1871 = vmatprep.subr.bf16.mxu0 0
    %1872 = vmatpush1.bf16.msra.mxu0 0
    %1873 = vmatprep.subr.bf16.mxu0 0
    %1874 = vmatpush1.bf16.msra.mxu0 0
    %1875 = vmatprep.subr.bf16.mxu0 0
    %1876 = vmatpush1.bf16.msra.mxu0 0
    %1877 = vmatprep.subr.bf16.mxu0 0
    %1878 = vmatpush1.bf16.msra.mxu0 0
    %1879 = vmatprep.subr.bf16.mxu0 0
    %1880 = vmatpush1.bf16.msra.mxu0 0
    %1881 = vmatprep.subr.bf16.mxu0 0
    %1882 = vmatpush1.bf16.msra.mxu0 0
    %1883 = vmatprep.subr.bf16.mxu0 0
    %1884 = vmatpush1.bf16.msra.mxu0 0
    %1885 = vmatprep.subr.bf16.mxu0 0
    %1886 = vmatpush1.bf16.msra.mxu0 0
    %1887 = vmatprep.subr.bf16.mxu0 0
    %1888 = vmatpush1.bf16.msra.mxu0 0
    %1889 = vmatprep.subr.bf16.mxu0 0
    %1890 = vmatpush1.bf16.msra.mxu0 0
    %1891 = vmatprep.subr.bf16.mxu0 0
    %1892 = vmatpush1.bf16.msra.mxu0 0
    %1893 = vmatprep.subr.bf16.mxu0 0
    %1894 = vmatpush1.bf16.msra.mxu0 0
    %1895 = vmatprep.subr.bf16.mxu0 0
    %1896 = vmatpush1.bf16.msra.mxu0 0
    %1897 = vmatprep.subr.bf16.mxu0 0
    %1898 = vmatpush1.bf16.msra.mxu0 0
    %1899 = vmatprep.subr.bf16.mxu0 0
    %1900 = vmatpush1.bf16.msra.mxu0 0
    %1901 = vmatprep.mubr.bf16.mxu0 0
    %1902 = vmatmul.mubr.bf16.gmra.mrb[0].mxu0 %v1867
    %v1903 = vpop.f32.mrb[0].mxu0
    %v1904 = vadd.f32 0.0, %v1903
    %v1905 = vpop.f32.mrb[0].mxu0
    %v1906 = vpop.f32.mrb[0].mxu0
    %v1907 = vadd.f32 0.0, %v1906
    %v1908 = vpop.f32.mrb[0].mxu0
    %1909 = vdwg.mxu0
    %v1910 = vrcp.pop %v1861
    %v1911 = vrcp.pop %v1864
    %v1912 = vmul.f32 %v1910, %v699
    %v1913 = vmul.f32 %v1911, %v699
    %v1914 = vmul.f32 %v1904, %v1912
    %v1915 = vmul.f32 %v1907, %v1913
    %v1916 = vadd.f32 %v1818, %v1914
    %v1917 = vadd.f32 %v1819, %v1915
    %s1918 = scalar_lea.vmem [#allocation8], 2
    %v1919 = vld [vmem:[%s1918] sm:$0x1]
    %v1921 = vlaneseq
    %v1922 = vshrl.u32 %v1921, 7
    %v1923 = vsub.s32 0, %v1922
    %v1924 = vrot.slane %v1919, %v1923
    %v1926 = vadd.f32 %v1916, %v1924
    %v1927 = vadd.f32 %v1917, %v1924
    %v1928 = vmax.f32 %v1926, 0.0
    %v1929 = vmax.f32 %v1927, 0.0
    %v1930 = vpack.c.bf16 %v1929, %v1928
    %v1931 = vld [vmem:[%s9] sm:$0xf]
    %v1932 = vld [vmem:[%s9 + $0x4] sm:$0xf]
    %v1933 = vld [vmem:[%s9 + $0x8] sm:$0xf]
    %v1934 = vld [vmem:[%s9 + $0xc] sm:$0xf]
    %v1935 = vld [vmem:[%s9 + $0x10] sm:$0xf]
    %v1936 = vld [vmem:[%s9 + $0x14] sm:$0xf]
    %v1937 = vld [vmem:[%s9 + $0x18] sm:$0xf]
    %v1938 = vld [vmem:[%s9 + $0x1c] sm:$0xf]
    %v1939 = vld [vmem:[%s10] sm:$0x1]
    %v1941 = vlaneseq
    %v1942 = vshrl.u32 %v1941, 7
    %v1943 = vsub.s32 0, %v1942
    %v1944 = vrot.slane %v1939, %v1943
    %v1954 = vunpack.c.l.b16 %v1931
    %v1955 = vunpack.c.l.b16 %v1932
    %v1956 = vunpack.c.l.b16 %v1933
    %v1957 = vunpack.c.l.b16 %v1934
    %v1958 = vunpack.c.l.b16 %v1935
    %v1959 = vunpack.c.l.b16 %v1936
    %v1960 = vunpack.c.l.b16 %v1937
    %v1961 = vunpack.c.l.b16 %v1938
    %v1962 = vpack.c.b16 %v1955, %v1954
    %v1963 = vpack.c.b16 %v1957, %v1956
    %v1964 = vpack.c.b16 %v1959, %v1958
    %v1965 = vpack.c.b16 %v1961, %v1960
    %v1971 = vsel %vm203, %v1930, 0
    %1973 = vmatprep.subr.bf16.mxu0 0
    %1974 = vmatpush1.bf16.msra.mxu0 %v1962
    %1975 = vmatprep.subr.bf16.mxu0 0
    %1976 = vmatpush1.bf16.msra.mxu0 %v1963
    %1977 = vmatprep.subr.bf16.mxu0 0
    %1978 = vmatpush1.bf16.msra.mxu0 %v1964
    %1979 = vmatprep.subr.bf16.mxu0 0
    %1980 = vmatpush1.bf16.msra.mxu0 %v1965
    %1981 = vmatprep.subr.bf16.mxu0 0
    %1982 = vmatpush1.bf16.msra.mxu0 0
    %1983 = vmatprep.subr.bf16.mxu0 0
    %1984 = vmatpush1.bf16.msra.mxu0 0
    %1985 = vmatprep.subr.bf16.mxu0 0
    %1986 = vmatpush1.bf16.msra.mxu0 0
    %1987 = vmatprep.subr.bf16.mxu0 0
    %1988 = vmatpush1.bf16.msra.mxu0 0
    %1989 = vmatprep.subr.bf16.mxu0 0
    %1990 = vmatpush1.bf16.msra.mxu0 0
    %1991 = vmatprep.subr.bf16.mxu0 0
    %1992 = vmatpush1.bf16.msra.mxu0 0
    %1993 = vmatprep.subr.bf16.mxu0 0
    %1994 = vmatpush1.bf16.msra.mxu0 0
    %1995 = vmatprep.subr.bf16.mxu0 0
    %1996 = vmatpush1.bf16.msra.mxu0 0
    %1997 = vmatprep.subr.bf16.mxu0 0
    %1998 = vmatpush1.bf16.msra.mxu0 0
    %1999 = vmatprep.subr.bf16.mxu0 0
    %2000 = vmatpush1.bf16.msra.mxu0 0
    %2001 = vmatprep.subr.bf16.mxu0 0
    %2002 = vmatpush1.bf16.msra.mxu0 0
    %2003 = vmatprep.subr.bf16.mxu0 0
    %2004 = vmatpush1.bf16.msra.mxu0 0
    %2005 = vmatprep.mubr.bf16.mxu0 0
    %2006 = vmatmul.mubr.bf16.gmra.mrb[0].mxu0 %v1971
    %v2007 = vpop.f32.mrb[0].mxu0
    %v2008 = vadd.f32 %v1944, %v2007
    %v2009 = vpop.f32.mrb[0].mxu0
    %v2010 = vpop.f32.mrb[0].mxu0
    %v2011 = vadd.f32 %v1944, %v2010
    %v2012 = vpop.f32.mrb[0].mxu0
    %2013 = vdwg.mxu0
    %v2014 = vmax.f32 %v2008, 0.0
    %v2015 = vmax.f32 %v2011, 0.0
    %v2016 = vld [vmem:[%s11] sm:$0xff]
    %v2017 = vld [vmem:[%s11 + $0x8] sm:$0xff]
    %2019 = vset.pattern.permute.xlu0 0
    %2020 = vperm.xlu0 %2019, %v2014
    %v2021 = vpop.permute.xlu0 %2020
    %2024 = vset.pattern.permute.xlu0 0
    %2025 = vperm.xlu0 %2024, %v2015
    %v2026 = vpop.permute.xlu0 %2025
    %v2028 = vmul.f32 %v2021, %v2016
    %v2029 = vmul.f32 %v2026, %v2017
    %s2030 = scalar_lea.vmem %s11, 16
    %v2031 = vld [vmem:[%s2030] sm:$0xff]
    %v2032 = vld [vmem:[%s2030 + $0x8] sm:$0xff]
    %2033 = vset.pattern.permute.xlu0 1
    %2034 = vperm.xlu0 %2033, %v2014
    %v2035 = vpop.permute.xlu0 %2034
    %2037 = vset.pattern.permute.xlu0 1
    %2038 = vperm.xlu0 %2037, %v2015
    %v2039 = vpop.permute.xlu0 %2038
    %v2041 = vmul.f32 %v2035, %v2031
    %v2042 = vmul.f32 %v2039, %v2032
    %v2043 = vadd.f32 %v2028, %v2041
    %v2044 = vadd.f32 %v2029, %v2042
    %s2045 = scalar_lea.vmem %s11, 32
    %v2046 = vld [vmem:[%s2045] sm:$0xff]
    %v2047 = vld [vmem:[%s2045 + $0x8] sm:$0xff]
    %2048 = vset.pattern.permute.xlu0 2
    %2049 = vperm.xlu0 %2048, %v2014
    %v2050 = vpop.permute.xlu0 %2049
    %2052 = vset.pattern.permute.xlu0 2
    %2053 = vperm.xlu0 %2052, %v2015
    %v2054 = vpop.permute.xlu0 %2053
    %v2056 = vmul.f32 %v2050, %v2046
    %v2057 = vmul.f32 %v2054, %v2047
    %v2058 = vadd.f32 %v2043, %v2056
    %v2059 = vadd.f32 %v2044, %v2057
    %s2060 = scalar_lea.vmem %s11, 48
    %v2061 = vld [vmem:[%s2060] sm:$0xff]
    %v2062 = vld [vmem:[%s2060 + $0x8] sm:$0xff]
    %2063 = vset.pattern.permute.xlu0 3
    %2064 = vperm.xlu0 %2063, %v2014
    %v2065 = vpop.permute.xlu0 %2064
    %2067 = vset.pattern.permute.xlu0 3
    %2068 = vperm.xlu0 %2067, %v2015
    %v2069 = vpop.permute.xlu0 %2068
    %v2071 = vmul.f32 %v2065, %v2061
    %v2072 = vmul.f32 %v2069, %v2062
    %v2073 = vadd.f32 %v2058, %v2071
    %v2074 = vadd.f32 %v2059, %v2072
    %v2075 = vld [vmem:[%s13] sm:$0x3]
    %v2076 = vld [vmem:[%s12] sm:$0x1]
    %v2078 = vlaneseq
    %v2079 = vshrl.u32 %v2078, 7
    %v2080 = vsub.s32 0, %v2079
    %v2081 = vrot.slane %v2076, %v2080
    %v2084 = vsel %vm320, %v2075, 0
    %2086 = vmatprep.subr.mxu0 0.0
    %2087 = vmatpush1.msra.mxu0 %v2073
    %2088 = vmatprep.subr.mxu0 0.0
    %2089 = vmatpush1.msra.mxu0 %v2074
    %2090 = vmatprep.subr.mxu0 0.0
    %2091 = vmatpush1.msra.mxu0 0.0
    %2092 = vmatprep.subr.mxu0 0.0
    %2093 = vmatpush1.msra.mxu0 0.0
    %2094 = vmatprep.subr.mxu0 0.0
    %2095 = vmatpush1.msra.mxu0 0.0
    %2096 = vmatprep.subr.mxu0 0.0
    %2097 = vmatpush1.msra.mxu0 0.0
    %2098 = vmatprep.subr.mxu0 0.0
    %2099 = vmatpush1.msra.mxu0 0.0
    %2100 = vmatprep.subr.mxu0 0.0
    %2101 = vmatpush1.msra.mxu0 0.0
    %2102 = vmatprep.subr.mxu0 0.0
    %2103 = vmatpush1.msra.mxu0 0.0
    %2104 = vmatprep.subr.mxu0 0.0
    %2105 = vmatpush1.msra.mxu0 0.0
    %2106 = vmatprep.subr.mxu0 0.0
    %2107 = vmatpush1.msra.mxu0 0.0
    %2108 = vmatprep.subr.mxu0 0.0
    %2109 = vmatpush1.msra.mxu0 0.0
    %2110 = vmatprep.subr.mxu0 0.0
    %2111 = vmatpush1.msra.mxu0 0.0
    %2112 = vmatprep.subr.mxu0 0.0
    %2113 = vmatpush1.msra.mxu0 0.0
    %2114 = vmatprep.subr.mxu0 0.0
    %2115 = vmatpush1.msra.mxu0 0.0
    %2116 = vmatprep.subr.mxu0 0.0
    %2117 = vmatpush1.msra.mxu0 0.0
    %2118 = vmatprep.subr.mxu0 0.0
    %2119 = vmatpush1.msra.mxu0 0.0
    %2120 = vmatprep.subr.mxu0 0.0
    %2121 = vmatpush1.msra.mxu0 0.0
    %2122 = vmatprep.subr.mxu0 0.0
    %2123 = vmatpush1.msra.mxu0 0.0
    %2124 = vmatprep.subr.mxu0 0.0
    %2125 = vmatpush1.msra.mxu0 0.0
    %2126 = vmatprep.subr.mxu0 0.0
    %2127 = vmatpush1.msra.mxu0 0.0
    %2128 = vmatprep.subr.mxu0 0.0
    %2129 = vmatpush1.msra.mxu0 0.0
    %2130 = vmatprep.subr.mxu0 0.0
    %2131 = vmatpush1.msra.mxu0 0.0
    %2132 = vmatprep.subr.mxu0 0.0
    %2133 = vmatpush1.msra.mxu0 0.0
    %2134 = vmatprep.subr.mxu0 0.0
    %2135 = vmatpush1.msra.mxu0 0.0
    %2136 = vmatprep.subr.mxu0 0.0
    %2137 = vmatpush1.msra.mxu0 0.0
    %2138 = vmatprep.subr.mxu0 0.0
    %2139 = vmatpush1.msra.mxu0 0.0
    %2140 = vmatprep.subr.mxu0 0.0
    %2141 = vmatpush1.msra.mxu0 0.0
    %2142 = vmatprep.subr.mxu0 0.0
    %2143 = vmatpush1.msra.mxu0 0.0
    %2144 = vmatprep.subr.mxu0 0.0
    %2145 = vmatpush1.msra.mxu0 0.0
    %2146 = vmatprep.subr.mxu0 0.0
    %2147 = vmatpush1.msra.mxu0 0.0
    %2148 = vmatprep.subr.mxu0 0.0
    %2149 = vmatpush1.msra.mxu0 0.0
    %2150 = vmatprep.mubr.f32.mxu0 0.0
    %2151 = vmatmul.mubr.f32.gmra.mrb[0].mxu0 %v2084
    %v2152 = vpop.f32.mrb[0].mxu0
    %v2153 = vadd.f32 %v2081, %v2152
    %v2154 = vpop.f32.mrb[0].mxu0
    %2155 = vdwg.mxu0
    %vm2156 = vcmask 58368
    %2157 = vst.msk [vmem:[#allocation11] sm:$0x3] %vm2156, %v2153
    // Predicated region
    $region78: #{tpu_custom_call.1} parent=1 // pred_check
      _
    $region79: #{tpu_custom_call.1} parent=1 // pred_check_branch
      %2159 = sbr.rel (0) target = $region81
    $region80: #{tpu_custom_call.1} parent=1 // pred_region
      %s2161 = ssub.s32 32, 32
      %2162 = vsyncadd [#allocation4], %s2161
      %s2164 = sshll.u32 [#allocation11], 4
      %s2165 = int_to_ptr.vmem [resolvable:$true] %s2164
      %2167 = dma.vmem_to_hbm [thread:$0]  %s2165, 32, %s14, [#allocation4]
    $region81: #{tpu_custom_call.1} parent=1 // pred_fallthru
      _
    // Predicated region
    $region82: #{tpu_custom_call.1} parent=1 // pred_check
      _
    $region83: #{tpu_custom_call.1} parent=1 // pred_check_branch
      %2169 = sbr.rel (0) target = $region85
    $region84: #{tpu_custom_call.1} parent=1 // pred_region
      %2170 = dma.done [#allocation4], 32
    $region85: #{tpu_custom_call.1} parent=1 // pred_fallthru
      _
    %2171 = vsyncpa [#allocation3], 1
    %2172 = vsyncpa [#allocation6], 1
    %2173 = vsyncpa [#allocation9], 1
    %2174 = vsyncpa [#allocation4], 1

</llo_original>
